<compile_context>
chip_gen: v5e
topology: v5e:2x2
jax: 0.10.0
libtpu: 0.0.40
codegen_flags: <defaults>
</compile_context>

<pallas_src>
import functools

import jax
import jax.numpy as jnp
from jax import lax
from jax.experimental import pallas as pl
from jax.experimental.pallas import tpu as pltpu

# ---------------- small synthetic config (deterministic) ----------------
CFG = dict(
    batch=2, chans=3, img=32, patch=16,
    dim=128,            # in_planes      (768 in ViT-B-16)  -> lane-dense 128
    dim_proj=128,       # in_planes_proj (512 in ViT-B-16)  -> lane-dense 128
    heads=4, layers=3, mlp_ratio=4,
    num_classes=16, num_classes_pad=128,   # classifier columns zero-padded to 128 lanes
    camera_num=3, view_num=1, sie_coe=1.0,
)


# ---------------- in-kernel helpers (all f32 elementwise) ----------------
def _ln(x, g, b, eps=1e-5):
    mu = jnp.mean(x, axis=-1, keepdims=True)
    var = jnp.mean((x - mu) ** 2, axis=-1, keepdims=True)
    return (x - mu) * lax.rsqrt(var + eps) * g + b


def _softmax(s):
    m = jnp.max(s, axis=-1, keepdims=True)
    e = jnp.exp(s - m)
    # exp + approximate reciprocal both run on the EUP slot -> the divide is ~free
    return e * pl.reciprocal(jnp.sum(e, axis=-1, keepdims=True), approx=True)


# ---------------- the single fused kernel (grid over layers) ----------------
def _vit_reid_kernel(
    # resident inputs (constant block index -> fetched once, stay in VMEM)
    patches_ref, patch_w_ref, embed_ref, lnpre_g_ref, lnpre_b_ref,
    attn_bias_ref, cls_sel_ref,
    # per-layer stacked params (streamed, double-buffered by the pipeline)
    ln1g_ref, ln1b_ref, wqkv_ref, bqkv_ref, wo_ref, bo_ref,
    ln2g_ref, ln2b_ref, w1_ref, b1_ref, w2_ref, b2_ref,
    # resident tail params
    lnpost_g_ref, lnpost_b_ref, proj_ref, bn_ref, bnp_ref, cw_ref, cwp_ref,
    # outputs
    last_ref, imgf_ref, imgfp_ref, feat_ref, featp_ref, score_ref, scorep_ref,
    # scratch (resident activation, tokens flattened to (B*S, D))
    h_sc,
    *, heads):
    layer = pl.program_id(0)
    n_layers = pl.num_programs(0)
    N, D = h_sc.shape
    dh = D // heads
    f32, bf16 = jnp.float32, jnp.bfloat16

    def cls_tokens(h):
        # select the class-token rows (row b*S per image) via a one-hot masked reduce
        sel = cls_sel_ref[...]                                   # (B, N)
        return jnp.sum(sel[:, :, None] * h[None, :, :], axis=1)  # (B, D)

    # ---- step 0: stride-16 patch conv (as 2-D matmul, bias-free) + cls/pos/SIE + ln_pre ----
    @pl.when(layer == 0)
    def _embed():
        tok = jnp.dot(patches_ref[...], patch_w_ref[...],
                      preferred_element_type=f32)                # (N, D); cls rows are zero
        x0 = tok + embed_ref[...]                                # + pos (+ cls_emb + SIE on cls rows)
        h_sc[...] = _ln(x0, lnpre_g_ref[...], lnpre_b_ref[...])

    # ---- every step: one pre-LN transformer block; activation stays in VMEM ----
    x = h_sc[...]                                                # (N, D) f32
    h1 = _ln(x, ln1g_ref[...], ln1b_ref[...])
    qkv = jnp.dot(h1.astype(bf16), wqkv_ref[...],
                  preferred_element_type=f32) + bqkv_ref[...]    # (N, 3D)
    scale = dh ** -0.5
    bias = attn_bias_ref[...]                                    # (N, N) block-diag 0 / -1e30
    head_outs = []
    # heads are a static unroll of 2-D matmuls; the output projection is fused
    # into one full-K matmul on the concatenated head outputs below.
    for hh in range(heads):
        qh = qkv[:, hh * dh:(hh + 1) * dh].astype(bf16)
        kh = qkv[:, D + hh * dh:D + (hh + 1) * dh].astype(bf16)
        vh = qkv[:, 2 * D + hh * dh:2 * D + (hh + 1) * dh].astype(bf16)
        s = lax.dot_general(qh, kh, (((1,), (1,)), ((), ())),    # q @ k^T (trans_b matmul)
                            preferred_element_type=f32) * scale + bias
        p = _softmax(s)
        head_outs.append(jnp.dot(p.astype(bf16), vh, preferred_element_type=f32))
    attn = jnp.concatenate(head_outs, axis=-1)                   # (N, D)
    o = jnp.dot(attn.astype(bf16), wo_ref[...],
                preferred_element_type=f32) + bo_ref[...]
    x = x + o

    h2 = _ln(x, ln2g_ref[...], ln2b_ref[...])
    m1 = jnp.dot(h2.astype(bf16), w1_ref[...],
                 preferred_element_type=f32) + b1_ref[...]
    m1 = m1 * jax.nn.sigmoid(1.702 * m1)                         # QuickGELU (CLIP)
    m2 = jnp.dot(m1.astype(bf16), w2_ref[...],
                 preferred_element_type=f32) + b2_ref[...]
    h_sc[...] = x + m2

    # ---- cls tokens of the second-to-last block output == image_features_last[:, 0] ----
    @pl.when(layer == n_layers - 2)
    def _capture_last():
        last_ref[...] = cls_tokens(h_sc[...])

    # ---- last step: ln_post + visual proj + bottleneck BN (eval stats) + classifiers ----
    @pl.when(layer == n_layers - 1)
    def _head():
        x_cls = cls_tokens(h_sc[...])                            # (B, D)
        imgf_ref[...] = x_cls
        xp = jnp.dot(_ln(x_cls, lnpost_g_ref[...], lnpost_b_ref[...]).astype(bf16),
                     proj_ref[...], preferred_element_type=f32)  # (B, Dp)
        imgfp_ref[...] = xp

        def bn(v, p):   # p rows: (gamma, beta, running_mean, running_var)
            return (v - p[2:3]) * lax.rsqrt(p[3:4] + 1e-5) * p[0:1] + p[1:2]

        feat = bn(x_cls, bn_ref[...])
        featp = bn(xp, bnp_ref[...])
        feat_ref[...] = feat
        featp_ref[...] = featp
        score_ref[...] = jnp.dot(feat.astype(bf16), cw_ref[...],
                                 preferred_element_type=f32)
        scorep_ref[...] = jnp.dot(featp.astype(bf16), cwp_ref[...],
                                  preferred_element_type=f32)


# ---------------- deterministic parameter init ----------------
def init_params(key, cfg):
    D, Dp = cfg['dim'], cfg['dim_proj']
    C, P = cfg['chans'], cfg['patch']
    PD = C * P * P
    hres = (cfg['img'] - 16) // P + 1          # same formula as the PyTorch h_resolution
    S = hres * hres + 1
    NC, NCp = cfg['num_classes'], cfg['num_classes_pad']
    M = cfg['mlp_ratio'] * D
    L = cfg['layers']
    bf16 = jnp.bfloat16

    k = jax.random.split(key, 11)
    nrm = lambda kk, shape, std: std * jax.random.normal(kk, shape, jnp.float32)

    # classifiers: Linear(..., bias=False), weight ~ N(0, 0.001), stored transposed and
    # zero-padded to 128 output lanes (lane-dense scores; wrapper slices the first NC).
    cls_w = jnp.zeros((D, NCp), jnp.float32).at[:, :NC].set(nrm(k[9], (D, NC), 0.001))
    cls_wp = jnp.zeros((Dp, NCp), jnp.float32).at[:, :NC].set(nrm(k[10], (Dp, NC), 0.001))

    return dict(
        patch_w=nrm(k[0], (PD, D), 0.02).astype(bf16),
        class_emb=nrm(k[1], (1, D), 0.02),
        pos_emb=nrm(k[2], (S, D), 0.01),
        cv_embed=nrm(k[3], (cfg['camera_num'] * cfg['view_num'], D), 0.02),  # SIE (trunc_normal std=0.02)
        ln_pre_g=jnp.ones((1, D), jnp.float32), ln_pre_b=jnp.zeros((1, D), jnp.float32),
        ln_post_g=jnp.ones((1, D), jnp.float32), ln_post_b=jnp.zeros((1, D), jnp.float32),
        proj=nrm(k[4], (D, Dp), D ** -0.5).astype(bf16),
        # per-layer params stacked along a leading [layers] axis (streamed by the grid)
        ln1_g=jnp.ones((L, 1, D), jnp.float32), ln1_b=jnp.zeros((L, 1, D), jnp.float32),
        wqkv=nrm(k[5], (L, D, 3 * D), D ** -0.5).astype(bf16),
        bqkv=jnp.zeros((L, 1, 3 * D), jnp.float32),
        wo=nrm(k[6], (L, D, D), D ** -0.5).astype(bf16),
        bo=jnp.zeros((L, 1, D), jnp.float32),
        ln2_g=jnp.ones((L, 1, D), jnp.float32), ln2_b=jnp.zeros((L, 1, D), jnp.float32),
        w1=nrm(k[7], (L, D, M), D ** -0.5).astype(bf16),
        b1=jnp.zeros((L, 1, M), jnp.float32),
        w2=nrm(k[8], (L, M, D), M ** -0.5).astype(bf16),
        b2=jnp.zeros((L, 1, D), jnp.float32),
        # bottleneck BN (kaiming: weight=1, bias=0) + fresh running stats (0 mean, 1 var)
        bn=jnp.stack([jnp.ones(D), jnp.zeros(D), jnp.zeros(D), jnp.ones(D)]).astype(jnp.float32),
        bn_proj=jnp.stack([jnp.ones(Dp), jnp.zeros(Dp), jnp.zeros(Dp), jnp.ones(Dp)]).astype(jnp.float32),
        cls_w=cls_w.astype(bf16),
        cls_w_proj=cls_wp.astype(bf16),
    )


# ---------------- forward (ViT-B-16 image path) ----------------
def build_transformer_forward(params, x, cam_label=None, view_label=None,
                              training=False, neck_feat='after'):
    cfg = CFG
    B, C, H, W = x.shape
    P, D, Dp = cfg['patch'], cfg['dim'], cfg['dim_proj']
    NC, NCp = cfg['num_classes'], cfg['num_classes_pad']
    L, heads = cfg['layers'], cfg['heads']
    assert L >= 2, "image_features_last needs >= 2 transformer blocks"
    assert D % heads == 0 and H % P == 0 and W % P == 0
    hres = (H - 16) // P + 1            # unified with the PyTorch h_resolution formula
    wres = (W - 16) // P + 1
    NP = hres * wres
    S = NP + 1                          # +1 class token per image
    N = B * S                           # flat token count
    PD = C * P * P
    M = cfg['mlp_ratio'] * D

    # --- glue: stride-16 patch conv realized as flat-patch matmul (conv1 has no bias).
    #     One zero row per image reserves the class-token slot (row b*S of the flat layout).
    patches = x.reshape(B, C, hres, P, wres, P).transpose(0, 2, 4, 1, 3, 5).reshape(B, NP, PD)
    patches = jnp.concatenate([jnp.zeros((B, 1, PD), patches.dtype), patches], axis=1)
    patches = patches.reshape(N, PD).astype(jnp.bfloat16)

    # --- glue: SIE embedding gather + class/positional embedding, combined into one
    #     additive (N, D) tensor applied inside the kernel right after the patch matmul.
    if cam_label is not None and view_label is not None:
        cv = cfg['sie_coe'] * params['cv_embed'][cam_label * cfg['view_num'] + view_label]
    elif cam_label is not None:
        cv = cfg['sie_coe'] * params['cv_embed'][cam_label]
    elif view_label is not None:
        cv = cfg['sie_coe'] * params['cv_embed'][view_label]
    else:
        cv = jnp.zeros((B, D), jnp.float32)
    cls_row = params['class_emb'] + cv.astype(jnp.float32)                 # (B, D)
    embed_add = jnp.tile(params['pos_emb'], (B, 1)).reshape(B, S, D)
    embed_add = embed_add.at[:, 0, :].add(cls_row).reshape(N, D)

    # --- static structural masks: block-diagonal attention bias (tokens attend only
    #     within their own image) and class-token row selectors.
    bid = jnp.arange(N, dtype=jnp.int32) // S
    attn_bias = jnp.where(bid[:, None] == bid[None, :], 0.0, -1e30).astype(jnp.float32)
    cls_sel = jnp.zeros((B, N), jnp.float32).at[jnp.arange(B), jnp.arange(B) * S].set(1.0)

    def resident(shape):                # whole array, fetched once (constant block index)
        n = len(shape)
        return pl.BlockSpec(shape, lambda l, n=n: (0,) * n)

    def streamed(shape):                # stacked [layers, ...] params, one layer per step
        n = len(shape)
        return pl.BlockSpec((None,) + shape, lambda l, n=n: (l,) + (0,) * n)

    in_specs = [
        resident((N, PD)), resident((PD, D)), resident((N, D)),
        resident((1, D)), resident((1, D)), resident((N, N)), resident((B, N)),
        streamed((1, D)), streamed((1, D)),
        streamed((D, 3 * D)), streamed((1, 3 * D)),
        streamed((D, D)), streamed((1, D)),
        streamed((1, D)), streamed((1, D)),
        streamed((D, M)), streamed((1, M)),
        streamed((M, D)), streamed((1, D)),
        resident((1, D)), resident((1, D)), resident((D, Dp)),
        resident((4, D)), resident((4, Dp)), resident((D, NCp)), resident((Dp, NCp)),
    ]
    out_specs = (resident((B, D)), resident((B, D)), resident((B, Dp)),
                 resident((B, D)), resident((B, Dp)),
                 resident((B, NCp)), resident((B, NCp)))
    out_shape = (jax.ShapeDtypeStruct((B, D), jnp.float32),     # img_feature_last
                 jax.ShapeDtypeStruct((B, D), jnp.float32),     # img_feature
                 jax.ShapeDtypeStruct((B, Dp), jnp.float32),    # img_feature_proj
                 jax.ShapeDtypeStruct((B, D), jnp.float32),     # feat (after BN)
                 jax.ShapeDtypeStruct((B, Dp), jnp.float32),    # feat_proj (after BN)
                 jax.ShapeDtypeStruct((B, NCp), jnp.float32),   # cls_score (padded)
                 jax.ShapeDtypeStruct((B, NCp), jnp.float32))   # cls_score_proj (padded)

    (img_feature_last, img_feature, img_feature_proj,
     feat, feat_proj, score_pad, score_proj_pad) = pl.pallas_call(
        functools.partial(_vit_reid_kernel, heads=heads),
        grid=(L,),
        in_specs=in_specs,
        out_specs=out_specs,
        out_shape=out_shape,
        scratch_shapes=[pltpu.VMEM((N, D), jnp.float32)],       # resident activation
        compiler_params=pltpu.CompilerParams(dimension_semantics=("arbitrary",)),
    )(patches, params['patch_w'], embed_add,
      params['ln_pre_g'], params['ln_pre_b'], attn_bias, cls_sel,
      params['ln1_g'], params['ln1_b'], params['wqkv'], params['bqkv'],
      params['wo'], params['bo'], params['ln2_g'], params['ln2_b'],
      params['w1'], params['b1'], params['w2'], params['b2'],
      params['ln_post_g'], params['ln_post_b'], params['proj'],
      params['bn'], params['bn_proj'], params['cls_w'], params['cls_w_proj'])

    cls_score = score_pad[:, :NC]
    cls_score_proj = score_proj_pad[:, :NC]

    if training:
        # TODO(synk): training-mode batch-statistic BatchNorm and the USE_SSL aug branch
        # are not reproduced; BN here uses running statistics (eval semantics).
        return ([cls_score, cls_score_proj],
                [img_feature_last, img_feature, img_feature_proj],
                img_feature_proj)
    if neck_feat == 'after':
        return jnp.concatenate([feat, feat_proj], axis=1)
    return jnp.concatenate([img_feature, img_feature_proj], axis=1)


# ---------------- main ----------------
if __name__ == "__main__":
    key = jax.random.PRNGKey(0)
    pkey, xkey, ckey = jax.random.split(key, 3)
    params = init_params(pkey, CFG)
    x = jax.random.normal(xkey, (CFG['batch'], CFG['chans'], CFG['img'], CFG['img']),
                          jnp.float32)
    cam_label = jax.random.randint(ckey, (CFG['batch'],), 0, CFG['camera_num'])

    out = build_transformer_forward(params, x, cam_label=cam_label,
                                    training=False, neck_feat='after')
    jax.block_until_ready(out)
    assert out.shape == (CFG['batch'], CFG['dim'] + CFG['dim_proj'])
    print("KERNEL_OK")
</pallas_src>

<mosaic_0001>
module attributes {stable_mosaic.version = 11 : i64} {
  func.func @_vit_reid_kernel(%arg0: i32, %arg1: memref<10x768xbf16, #tpu.memory_space<vmem>>, %arg2: memref<768x128xbf16, #tpu.memory_space<vmem>>, %arg3: memref<10x128xf32, #tpu.memory_space<vmem>>, %arg4: memref<1x128xf32, #tpu.memory_space<vmem>>, %arg5: memref<1x128xf32, #tpu.memory_space<vmem>>, %arg6: memref<10x10xf32, #tpu.memory_space<vmem>>, %arg7: memref<2x10xf32, #tpu.memory_space<vmem>>, %arg8: memref<1x1x128xf32, #tpu.memory_space<vmem>>, %arg9: memref<1x1x128xf32, #tpu.memory_space<vmem>>, %arg10: memref<1x128x384xbf16, #tpu.memory_space<vmem>>, %arg11: memref<1x1x384xf32, #tpu.memory_space<vmem>>, %arg12: memref<1x128x128xbf16, #tpu.memory_space<vmem>>, %arg13: memref<1x1x128xf32, #tpu.memory_space<vmem>>, %arg14: memref<1x1x128xf32, #tpu.memory_space<vmem>>, %arg15: memref<1x1x128xf32, #tpu.memory_space<vmem>>, %arg16: memref<1x128x512xbf16, #tpu.memory_space<vmem>>, %arg17: memref<1x1x512xf32, #tpu.memory_space<vmem>>, %arg18: memref<1x512x128xbf16, #tpu.memory_space<vmem>>, %arg19: memref<1x1x128xf32, #tpu.memory_space<vmem>>, %arg20: memref<1x128xf32, #tpu.memory_space<vmem>>, %arg21: memref<1x128xf32, #tpu.memory_space<vmem>>, %arg22: memref<128x128xbf16, #tpu.memory_space<vmem>>, %arg23: memref<4x128xf32, #tpu.memory_space<vmem>>, %arg24: memref<4x128xf32, #tpu.memory_space<vmem>>, %arg25: memref<128x128xbf16, #tpu.memory_space<vmem>>, %arg26: memref<128x128xbf16, #tpu.memory_space<vmem>>, %arg27: memref<2x128xf32, #tpu.memory_space<vmem>>, %arg28: memref<2x128xf32, #tpu.memory_space<vmem>>, %arg29: memref<2x128xf32, #tpu.memory_space<vmem>>, %arg30: memref<2x128xf32, #tpu.memory_space<vmem>>, %arg31: memref<2x128xf32, #tpu.memory_space<vmem>>, %arg32: memref<2x128xf32, #tpu.memory_space<vmem>>, %arg33: memref<2x128xf32, #tpu.memory_space<vmem>>, %arg34: memref<10x128xf32, #tpu.memory_space<vmem>>) attributes {dimension_semantics = [#tpu.dimension_semantics<arbitrary>], iteration_bounds = array<i64: 3>, scalar_prefetch = 0 : i64, scratch_operands = 1 : i64, tpu.core_type = #tpu.core_type<tc>, window_params = [{pipeline_mode = #tpu.pipeline_mode<synchronous>, transform_indices = @transform_0, window_bounds = array<i64: 10, 768>}, {pipeline_mode = #tpu.pipeline_mode<synchronous>, transform_indices = @transform_1, window_bounds = array<i64: 768, 128>}, {pipeline_mode = #tpu.pipeline_mode<synchronous>, transform_indices = @transform_2, window_bounds = array<i64: 10, 128>}, {pipeline_mode = #tpu.pipeline_mode<synchronous>, transform_indices = @transform_3, window_bounds = array<i64: 1, 128>}, {pipeline_mode = #tpu.pipeline_mode<synchronous>, transform_indices = @transform_4, window_bounds = array<i64: 1, 128>}, {pipeline_mode = #tpu.pipeline_mode<synchronous>, transform_indices = @transform_5, window_bounds = array<i64: 10, 10>}, {pipeline_mode = #tpu.pipeline_mode<synchronous>, transform_indices = @transform_6, window_bounds = array<i64: 2, 10>}, {transform_indices = @transform_7, window_bounds = array<i64: 1, 1, 128>}, {transform_indices = @transform_8, window_bounds = array<i64: 1, 1, 128>}, {transform_indices = @transform_9, window_bounds = array<i64: 1, 128, 384>}, {transform_indices = @transform_10, window_bounds = array<i64: 1, 1, 384>}, {transform_indices = @transform_11, window_bounds = array<i64: 1, 128, 128>}, {transform_indices = @transform_12, window_bounds = array<i64: 1, 1, 128>}, {transform_indices = @transform_13, window_bounds = array<i64: 1, 1, 128>}, {transform_indices = @transform_14, window_bounds = array<i64: 1, 1, 128>}, {transform_indices = @transform_15, window_bounds = array<i64: 1, 128, 512>}, {transform_indices = @transform_16, window_bounds = array<i64: 1, 1, 512>}, {transform_indices = @transform_17, window_bounds = array<i64: 1, 512, 128>}, {transform_indices = @transform_18, window_bounds = array<i64: 1, 1, 128>}, {pipeline_mode = #tpu.pipeline_mode<synchronous>, transform_indices = @transform_19, window_bounds = array<i64: 1, 128>}, {pipeline_mode = #tpu.pipeline_mode<synchronous>, transform_indices = @transform_20, window_bounds = array<i64: 1, 128>}, {pipeline_mode = #tpu.pipeline_mode<synchronous>, transform_indices = @transform_21, window_bounds = array<i64: 128, 128>}, {pipeline_mode = #tpu.pipeline_mode<synchronous>, transform_indices = @transform_22, window_bounds = array<i64: 4, 128>}, {pipeline_mode = #tpu.pipeline_mode<synchronous>, transform_indices = @transform_23, window_bounds = array<i64: 4, 128>}, {pipeline_mode = #tpu.pipeline_mode<synchronous>, transform_indices = @transform_24, window_bounds = array<i64: 128, 128>}, {pipeline_mode = #tpu.pipeline_mode<synchronous>, transform_indices = @transform_25, window_bounds = array<i64: 128, 128>}, {pipeline_mode = #tpu.pipeline_mode<synchronous>, transform_indices = @transform_26, window_bounds = array<i64: 2, 128>}, {pipeline_mode = #tpu.pipeline_mode<synchronous>, transform_indices = @transform_27, window_bounds = array<i64: 2, 128>}, {pipeline_mode = #tpu.pipeline_mode<synchronous>, transform_indices = @transform_28, window_bounds = array<i64: 2, 128>}, {pipeline_mode = #tpu.pipeline_mode<synchronous>, transform_indices = @transform_29, window_bounds = array<i64: 2, 128>}, {pipeline_mode = #tpu.pipeline_mode<synchronous>, transform_indices = @transform_30, window_bounds = array<i64: 2, 128>}, {pipeline_mode = #tpu.pipeline_mode<synchronous>, transform_indices = @transform_31, window_bounds = array<i64: 2, 128>}, {pipeline_mode = #tpu.pipeline_mode<synchronous>, transform_indices = @transform_32, window_bounds = array<i64: 2, 128>}]} {
    %c0_i32 = arith.constant 0 : i32
    %0 = arith.cmpi eq, %arg0, %c0_i32 : i32
    %1 = arith.extui %0 : i1 to i32
    %c0_i32_0 = arith.constant 0 : i32
    %2 = arith.cmpi ne, %1, %c0_i32_0 : i32
    scf.if %2 {
      %c0_79 = arith.constant 0 : index
      %c0_80 = arith.constant 0 : index
      %195 = vector.load %arg1[%c0_79, %c0_80] : memref<10x768xbf16, #tpu.memory_space<vmem>>, vector<10x768xbf16>
      %c0_81 = arith.constant 0 : index
      %c0_82 = arith.constant 0 : index
      %196 = vector.load %arg2[%c0_81, %c0_82] : memref<768x128xbf16, #tpu.memory_space<vmem>>, vector<768x128xbf16>
      %cst_83 = arith.constant dense<0.000000e+00> : vector<10x128xf32>
      %197 = tpu.matmul %195, %196, %cst_83 {dimension_numbers = #tpu.dot_dimension_numbers<[1], [0], [0], [1], [0, 0, 1, 1], [], []>} : vector<10x768xbf16>, vector<768x128xbf16>, vector<10x128xf32> -> vector<10x128xf32>
      %c0_84 = arith.constant 0 : index
      %c0_85 = arith.constant 0 : index
      %198 = vector.load %arg3[%c0_84, %c0_85] : memref<10x128xf32, #tpu.memory_space<vmem>>, vector<10x128xf32>
      %199 = arith.addf %197, %198 : vector<10x128xf32>
      %c0_86 = arith.constant 0 : index
      %c0_87 = arith.constant 0 : index
      %200 = vector.load %arg4[%c0_86, %c0_87] : memref<1x128xf32, #tpu.memory_space<vmem>>, vector<1x128xf32>
      %c0_88 = arith.constant 0 : index
      %c0_89 = arith.constant 0 : index
      %201 = vector.load %arg5[%c0_88, %c0_89] : memref<1x128xf32, #tpu.memory_space<vmem>>, vector<1x128xf32>
      %cst_90 = arith.constant dense<0.000000e+00> : vector<10xf32>
      %202 = vector.multi_reduction <add>, %199, %cst_90 [1] : vector<10x128xf32> to vector<10xf32>
      %203 = vector.shape_cast %202 : vector<10xf32> to vector<10x1xf32>
      %cst_91 = arith.constant 1.280000e+02 : f32
      %204 = vector.broadcast %cst_91 : f32 to vector<10x1xf32>
      %205 = arith.divf %203, %204 : vector<10x1xf32>
      %206 = vector.broadcast %205 : vector<10x1xf32> to vector<10x128xf32>
      %207 = arith.subf %199, %206 : vector<10x128xf32>
      %208 = arith.mulf %207, %207 : vector<10x128xf32>
      %cst_92 = arith.constant dense<0.000000e+00> : vector<10xf32>
      %209 = vector.multi_reduction <add>, %208, %cst_92 [1] : vector<10x128xf32> to vector<10xf32>
      %210 = vector.shape_cast %209 : vector<10xf32> to vector<10x1xf32>
      %cst_93 = arith.constant 1.280000e+02 : f32
      %211 = vector.broadcast %cst_93 : f32 to vector<10x1xf32>
      %212 = arith.divf %210, %211 : vector<10x1xf32>
      %213 = vector.broadcast %205 : vector<10x1xf32> to vector<10x128xf32>
      %214 = arith.subf %199, %213 : vector<10x128xf32>
      %cst_94 = arith.constant 9.99999974E-6 : f32
      %215 = vector.broadcast %cst_94 : f32 to vector<10x1xf32>
      %216 = arith.addf %212, %215 : vector<10x1xf32>
      %217 = math.rsqrt %216 : vector<10x1xf32>
      %218 = vector.broadcast %217 : vector<10x1xf32> to vector<10x128xf32>
      %219 = arith.mulf %214, %218 : vector<10x128xf32>
      %220 = vector.broadcast %200 : vector<1x128xf32> to vector<10x128xf32>
      %221 = arith.mulf %219, %220 : vector<10x128xf32>
      %222 = vector.broadcast %201 : vector<1x128xf32> to vector<10x128xf32>
      %223 = arith.addf %221, %222 : vector<10x128xf32>
      %c0_95 = arith.constant 0 : index
      %c0_96 = arith.constant 0 : index
      %224 = vector.load %arg34[%c0_95, %c0_96] : memref<10x128xf32, #tpu.memory_space<vmem>>, vector<10x128xf32>
      tpu.vector_store %arg34[%c0_95, %c0_96], %223 {strides = array<i32>} : memref<10x128xf32, #tpu.memory_space<vmem>>, vector<10x128xf32>,
    } else {
    }
    %c0 = arith.constant 0 : index
    %c0_1 = arith.constant 0 : index
    %3 = vector.load %arg34[%c0, %c0_1] : memref<10x128xf32, #tpu.memory_space<vmem>>, vector<10x128xf32>
    %c0_2 = arith.constant 0 : index
    %c0_3 = arith.constant 0 : index
    %c0_4 = arith.constant 0 : index
    %4 = vector.load %arg8[%c0_2, %c0_3, %c0_4] : memref<1x1x128xf32, #tpu.memory_space<vmem>>, vector<1x1x128xf32>
    %5 = vector.shape_cast %4 : vector<1x1x128xf32> to vector<1x128xf32>
    %c0_5 = arith.constant 0 : index
    %c0_6 = arith.constant 0 : index
    %c0_7 = arith.constant 0 : index
    %6 = vector.load %arg9[%c0_5, %c0_6, %c0_7] : memref<1x1x128xf32, #tpu.memory_space<vmem>>, vector<1x1x128xf32>
    %7 = vector.shape_cast %6 : vector<1x1x128xf32> to vector<1x128xf32>
    %cst = arith.constant dense<0.000000e+00> : vector<10xf32>
    %8 = vector.multi_reduction <add>, %3, %cst [1] : vector<10x128xf32> to vector<10xf32>
    %9 = vector.shape_cast %8 : vector<10xf32> to vector<10x1xf32>
    %cst_8 = arith.constant 1.280000e+02 : f32
    %10 = vector.broadcast %cst_8 : f32 to vector<10x1xf32>
    %11 = arith.divf %9, %10 : vector<10x1xf32>
    %12 = vector.broadcast %11 : vector<10x1xf32> to vector<10x128xf32>
    %13 = arith.subf %3, %12 : vector<10x128xf32>
    %14 = arith.mulf %13, %13 : vector<10x128xf32>
    %cst_9 = arith.constant dense<0.000000e+00> : vector<10xf32>
    %15 = vector.multi_reduction <add>, %14, %cst_9 [1] : vector<10x128xf32> to vector<10xf32>
    %16 = vector.shape_cast %15 : vector<10xf32> to vector<10x1xf32>
    %cst_10 = arith.constant 1.280000e+02 : f32
    %17 = vector.broadcast %cst_10 : f32 to vector<10x1xf32>
    %18 = arith.divf %16, %17 : vector<10x1xf32>
    %19 = vector.broadcast %11 : vector<10x1xf32> to vector<10x128xf32>
    %20 = arith.subf %3, %19 : vector<10x128xf32>
    %cst_11 = arith.constant 9.99999974E-6 : f32
    %21 = vector.broadcast %cst_11 : f32 to vector<10x1xf32>
    %22 = arith.addf %18, %21 : vector<10x1xf32>
    %23 = math.rsqrt %22 : vector<10x1xf32>
    %24 = vector.broadcast %23 : vector<10x1xf32> to vector<10x128xf32>
    %25 = arith.mulf %20, %24 : vector<10x128xf32>
    %26 = vector.broadcast %5 : vector<1x128xf32> to vector<10x128xf32>
    %27 = arith.mulf %25, %26 : vector<10x128xf32>
    %28 = vector.broadcast %7 : vector<1x128xf32> to vector<10x128xf32>
    %29 = arith.addf %27, %28 : vector<10x128xf32>
    %30 = arith.truncf %29 : vector<10x128xf32> to vector<10x128xbf16>
    %c0_12 = arith.constant 0 : index
    %c0_13 = arith.constant 0 : index
    %c0_14 = arith.constant 0 : index
    %31 = vector.load %arg10[%c0_12, %c0_13, %c0_14] : memref<1x128x384xbf16, #tpu.memory_space<vmem>>, vector<1x128x384xbf16>
    %32 = vector.shape_cast %31 : vector<1x128x384xbf16> to vector<128x384xbf16>
    %cst_15 = arith.constant dense<0.000000e+00> : vector<10x384xf32>
    %33 = tpu.matmul %30, %32, %cst_15 {dimension_numbers = #tpu.dot_dimension_numbers<[1], [0], [0], [1], [0, 0, 1, 1], [], []>} : vector<10x128xbf16>, vector<128x384xbf16>, vector<10x384xf32> -> vector<10x384xf32>
    %c0_16 = arith.constant 0 : index
    %c0_17 = arith.constant 0 : index
    %c0_18 = arith.constant 0 : index
    %34 = vector.load %arg11[%c0_16, %c0_17, %c0_18] : memref<1x1x384xf32, #tpu.memory_space<vmem>>, vector<1x1x384xf32>
    %35 = vector.shape_cast %34 : vector<1x1x384xf32> to vector<1x384xf32>
    %36 = vector.broadcast %35 : vector<1x384xf32> to vector<10x384xf32>
    %37 = arith.addf %33, %36 : vector<10x384xf32>
    %c0_19 = arith.constant 0 : index
    %c0_20 = arith.constant 0 : index
    %38 = vector.load %arg6[%c0_19, %c0_20] : memref<10x10xf32, #tpu.memory_space<vmem>>, vector<10x10xf32>
    %39 = vector.extract_strided_slice %37 {offsets = [0, 0], sizes = [10, 32], strides = [1, 1]} : vector<10x384xf32> to vector<10x32xf32>
    %40 = arith.truncf %39 : vector<10x32xf32> to vector<10x32xbf16>
    %41 = vector.extract_strided_slice %37 {offsets = [0, 128], sizes = [10, 32], strides = [1, 1]} : vector<10x384xf32> to vector<10x32xf32>
    %42 = arith.truncf %41 : vector<10x32xf32> to vector<10x32xbf16>
    %43 = vector.extract_strided_slice %37 {offsets = [0, 256], sizes = [10, 32], strides = [1, 1]} : vector<10x384xf32> to vector<10x32xf32>
    %44 = arith.truncf %43 : vector<10x32xf32> to vector<10x32xbf16>
    %cst_21 = arith.constant dense<0.000000e+00> : vector<10x10xf32>
    %45 = tpu.matmul %40, %42, %cst_21 {dimension_numbers = #tpu.dot_dimension_numbers<[1], [1], [0], [0], [0, 0, 1, 0], [], []>} : vector<10x32xbf16>, vector<10x32xbf16>, vector<10x10xf32> -> vector<10x10xf32>
    %cst_22 = arith.constant 0.176776692 : f32
    %46 = vector.broadcast %cst_22 : f32 to vector<10x10xf32>
    %47 = arith.mulf %45, %46 : vector<10x10xf32>
    %48 = arith.addf %47, %38 : vector<10x10xf32>
    %cst_23 = arith.constant dense<0xFF800000> : vector<10xf32>
    %49 = vector.multi_reduction <maximumf>, %48, %cst_23 [1] : vector<10x10xf32> to vector<10xf32>
    %50 = vector.shape_cast %49 : vector<10xf32> to vector<10x1xf32>
    %51 = vector.broadcast %50 : vector<10x1xf32> to vector<10x10xf32>
    %52 = arith.subf %48, %51 : vector<10x10xf32>
    %53 = math.exp %52 : vector<10x10xf32>
    %cst_24 = arith.constant dense<0.000000e+00> : vector<10xf32>
    %54 = vector.multi_reduction <add>, %53, %cst_24 [1] : vector<10x10xf32> to vector<10xf32>
    %55 = vector.shape_cast %54 : vector<10xf32> to vector<10x1xf32>
    %56 = tpu.reciprocal %55 {approx = true} : vector<10x1xf32> -> vector<10x1xf32>
    %57 = vector.broadcast %56 : vector<10x1xf32> to vector<10x10xf32>
    %58 = arith.mulf %53, %57 : vector<10x10xf32>
    %59 = arith.truncf %58 : vector<10x10xf32> to vector<10x10xbf16>
    %cst_25 = arith.constant dense<0.000000e+00> : vector<10x32xf32>
    %60 = tpu.matmul %59, %44, %cst_25 {dimension_numbers = #tpu.dot_dimension_numbers<[1], [0], [0], [1], [0, 0, 1, 1], [], []>} : vector<10x10xbf16>, vector<10x32xbf16>, vector<10x32xf32> -> vector<10x32xf32>
    %61 = vector.extract_strided_slice %37 {offsets = [0, 32], sizes = [10, 32], strides = [1, 1]} : vector<10x384xf32> to vector<10x32xf32>
    %62 = arith.truncf %61 : vector<10x32xf32> to vector<10x32xbf16>
    %63 = vector.extract_strided_slice %37 {offsets = [0, 160], sizes = [10, 32], strides = [1, 1]} : vector<10x384xf32> to vector<10x32xf32>
    %64 = arith.truncf %63 : vector<10x32xf32> to vector<10x32xbf16>
    %65 = vector.extract_strided_slice %37 {offsets = [0, 288], sizes = [10, 32], strides = [1, 1]} : vector<10x384xf32> to vector<10x32xf32>
    %66 = arith.truncf %65 : vector<10x32xf32> to vector<10x32xbf16>
    %cst_26 = arith.constant dense<0.000000e+00> : vector<10x10xf32>
    %67 = tpu.matmul %62, %64, %cst_26 {dimension_numbers = #tpu.dot_dimension_numbers<[1], [1], [0], [0], [0, 0, 1, 0], [], []>} : vector<10x32xbf16>, vector<10x32xbf16>, vector<10x10xf32> -> vector<10x10xf32>
    %cst_27 = arith.constant 0.176776692 : f32
    %68 = vector.broadcast %cst_27 : f32 to vector<10x10xf32>
    %69 = arith.mulf %67, %68 : vector<10x10xf32>
    %70 = arith.addf %69, %38 : vector<10x10xf32>
    %cst_28 = arith.constant dense<0xFF800000> : vector<10xf32>
    %71 = vector.multi_reduction <maximumf>, %70, %cst_28 [1] : vector<10x10xf32> to vector<10xf32>
    %72 = vector.shape_cast %71 : vector<10xf32> to vector<10x1xf32>
    %73 = vector.broadcast %72 : vector<10x1xf32> to vector<10x10xf32>
    %74 = arith.subf %70, %73 : vector<10x10xf32>
    %75 = math.exp %74 : vector<10x10xf32>
    %cst_29 = arith.constant dense<0.000000e+00> : vector<10xf32>
    %76 = vector.multi_reduction <add>, %75, %cst_29 [1] : vector<10x10xf32> to vector<10xf32>
    %77 = vector.shape_cast %76 : vector<10xf32> to vector<10x1xf32>
    %78 = tpu.reciprocal %77 {approx = true} : vector<10x1xf32> -> vector<10x1xf32>
    %79 = vector.broadcast %78 : vector<10x1xf32> to vector<10x10xf32>
    %80 = arith.mulf %75, %79 : vector<10x10xf32>
    %81 = arith.truncf %80 : vector<10x10xf32> to vector<10x10xbf16>
    %cst_30 = arith.constant dense<0.000000e+00> : vector<10x32xf32>
    %82 = tpu.matmul %81, %66, %cst_30 {dimension_numbers = #tpu.dot_dimension_numbers<[1], [0], [0], [1], [0, 0, 1, 1], [], []>} : vector<10x10xbf16>, vector<10x32xbf16>, vector<10x32xf32> -> vector<10x32xf32>
    %83 = vector.extract_strided_slice %37 {offsets = [0, 64], sizes = [10, 32], strides = [1, 1]} : vector<10x384xf32> to vector<10x32xf32>
    %84 = arith.truncf %83 : vector<10x32xf32> to vector<10x32xbf16>
    %85 = vector.extract_strided_slice %37 {offsets = [0, 192], sizes = [10, 32], strides = [1, 1]} : vector<10x384xf32> to vector<10x32xf32>
    %86 = arith.truncf %85 : vector<10x32xf32> to vector<10x32xbf16>
    %87 = vector.extract_strided_slice %37 {offsets = [0, 320], sizes = [10, 32], strides = [1, 1]} : vector<10x384xf32> to vector<10x32xf32>
    %88 = arith.truncf %87 : vector<10x32xf32> to vector<10x32xbf16>
    %cst_31 = arith.constant dense<0.000000e+00> : vector<10x10xf32>
    %89 = tpu.matmul %84, %86, %cst_31 {dimension_numbers = #tpu.dot_dimension_numbers<[1], [1], [0], [0], [0, 0, 1, 0], [], []>} : vector<10x32xbf16>, vector<10x32xbf16>, vector<10x10xf32> -> vector<10x10xf32>
    %cst_32 = arith.constant 0.176776692 : f32
    %90 = vector.broadcast %cst_32 : f32 to vector<10x10xf32>
    %91 = arith.mulf %89, %90 : vector<10x10xf32>
    %92 = arith.addf %91, %38 : vector<10x10xf32>
    %cst_33 = arith.constant dense<0xFF800000> : vector<10xf32>
    %93 = vector.multi_reduction <maximumf>, %92, %cst_33 [1] : vector<10x10xf32> to vector<10xf32>
    %94 = vector.shape_cast %93 : vector<10xf32> to vector<10x1xf32>
    %95 = vector.broadcast %94 : vector<10x1xf32> to vector<10x10xf32>
    %96 = arith.subf %92, %95 : vector<10x10xf32>
    %97 = math.exp %96 : vector<10x10xf32>
    %cst_34 = arith.constant dense<0.000000e+00> : vector<10xf32>
    %98 = vector.multi_reduction <add>, %97, %cst_34 [1] : vector<10x10xf32> to vector<10xf32>
    %99 = vector.shape_cast %98 : vector<10xf32> to vector<10x1xf32>
    %100 = tpu.reciprocal %99 {approx = true} : vector<10x1xf32> -> vector<10x1xf32>
    %101 = vector.broadcast %100 : vector<10x1xf32> to vector<10x10xf32>
    %102 = arith.mulf %97, %101 : vector<10x10xf32>
    %103 = arith.truncf %102 : vector<10x10xf32> to vector<10x10xbf16>
    %cst_35 = arith.constant dense<0.000000e+00> : vector<10x32xf32>
    %104 = tpu.matmul %103, %88, %cst_35 {dimension_numbers = #tpu.dot_dimension_numbers<[1], [0], [0], [1], [0, 0, 1, 1], [], []>} : vector<10x10xbf16>, vector<10x32xbf16>, vector<10x32xf32> -> vector<10x32xf32>
    %105 = vector.extract_strided_slice %37 {offsets = [0, 96], sizes = [10, 32], strides = [1, 1]} : vector<10x384xf32> to vector<10x32xf32>
    %106 = arith.truncf %105 : vector<10x32xf32> to vector<10x32xbf16>
    %107 = vector.extract_strided_slice %37 {offsets = [0, 224], sizes = [10, 32], strides = [1, 1]} : vector<10x384xf32> to vector<10x32xf32>
    %108 = arith.truncf %107 : vector<10x32xf32> to vector<10x32xbf16>
    %109 = vector.extract_strided_slice %37 {offsets = [0, 352], sizes = [10, 32], strides = [1, 1]} : vector<10x384xf32> to vector<10x32xf32>
    %110 = arith.truncf %109 : vector<10x32xf32> to vector<10x32xbf16>
    %cst_36 = arith.constant dense<0.000000e+00> : vector<10x10xf32>
    %111 = tpu.matmul %106, %108, %cst_36 {dimension_numbers = #tpu.dot_dimension_numbers<[1], [1], [0], [0], [0, 0, 1, 0], [], []>} : vector<10x32xbf16>, vector<10x32xbf16>, vector<10x10xf32> -> vector<10x10xf32>
    %cst_37 = arith.constant 0.176776692 : f32
    %112 = vector.broadcast %cst_37 : f32 to vector<10x10xf32>
    %113 = arith.mulf %111, %112 : vector<10x10xf32>
    %114 = arith.addf %113, %38 : vector<10x10xf32>
    %cst_38 = arith.constant dense<0xFF800000> : vector<10xf32>
    %115 = vector.multi_reduction <maximumf>, %114, %cst_38 [1] : vector<10x10xf32> to vector<10xf32>
    %116 = vector.shape_cast %115 : vector<10xf32> to vector<10x1xf32>
    %117 = vector.broadcast %116 : vector<10x1xf32> to vector<10x10xf32>
    %118 = arith.subf %114, %117 : vector<10x10xf32>
    %119 = math.exp %118 : vector<10x10xf32>
    %cst_39 = arith.constant dense<0.000000e+00> : vector<10xf32>
    %120 = vector.multi_reduction <add>, %119, %cst_39 [1] : vector<10x10xf32> to vector<10xf32>
    %121 = vector.shape_cast %120 : vector<10xf32> to vector<10x1xf32>
    %122 = tpu.reciprocal %121 {approx = true} : vector<10x1xf32> -> vector<10x1xf32>
    %123 = vector.broadcast %122 : vector<10x1xf32> to vector<10x10xf32>
    %124 = arith.mulf %119, %123 : vector<10x10xf32>
    %125 = arith.truncf %124 : vector<10x10xf32> to vector<10x10xbf16>
    %cst_40 = arith.constant dense<0.000000e+00> : vector<10x32xf32>
    %126 = tpu.matmul %125, %110, %cst_40 {dimension_numbers = #tpu.dot_dimension_numbers<[1], [0], [0], [1], [0, 0, 1, 1], [], []>} : vector<10x10xbf16>, vector<10x32xbf16>, vector<10x32xf32> -> vector<10x32xf32>
    %127 = tpu.concatenate %60, %82, %104, %126 in 1 : vector<10x32xf32>, vector<10x32xf32>, vector<10x32xf32>, vector<10x32xf32> -> vector<10x128xf32>
    %128 = arith.truncf %127 : vector<10x128xf32> to vector<10x128xbf16>
    %c0_41 = arith.constant 0 : index
    %c0_42 = arith.constant 0 : index
    %c0_43 = arith.constant 0 : index
    %129 = vector.load %arg12[%c0_41, %c0_42, %c0_43] : memref<1x128x128xbf16, #tpu.memory_space<vmem>>, vector<1x128x128xbf16>
    %130 = vector.shape_cast %129 : vector<1x128x128xbf16> to vector<128x128xbf16>
    %cst_44 = arith.constant dense<0.000000e+00> : vector<10x128xf32>
    %131 = tpu.matmul %128, %130, %cst_44 {dimension_numbers = #tpu.dot_dimension_numbers<[1], [0], [0], [1], [0, 0, 1, 1], [], []>} : vector<10x128xbf16>, vector<128x128xbf16>, vector<10x128xf32> -> vector<10x128xf32>
    %c0_45 = arith.constant 0 : index
    %c0_46 = arith.constant 0 : index
    %c0_47 = arith.constant 0 : index
    %132 = vector.load %arg13[%c0_45, %c0_46, %c0_47] : memref<1x1x128xf32, #tpu.memory_space<vmem>>, vector<1x1x128xf32>
    %133 = vector.shape_cast %132 : vector<1x1x128xf32> to vector<1x128xf32>
    %134 = vector.broadcast %133 : vector<1x128xf32> to vector<10x128xf32>
    %135 = arith.addf %131, %134 : vector<10x128xf32>
    %136 = arith.addf %3, %135 : vector<10x128xf32>
    %c0_48 = arith.constant 0 : index
    %c0_49 = arith.constant 0 : index
    %c0_50 = arith.constant 0 : index
    %137 = vector.load %arg14[%c0_48, %c0_49, %c0_50] : memref<1x1x128xf32, #tpu.memory_space<vmem>>, vector<1x1x128xf32>
    %138 = vector.shape_cast %137 : vector<1x1x128xf32> to vector<1x128xf32>
    %c0_51 = arith.constant 0 : index
    %c0_52 = arith.constant 0 : index
    %c0_53 = arith.constant 0 : index
    %139 = vector.load %arg15[%c0_51, %c0_52, %c0_53] : memref<1x1x128xf32, #tpu.memory_space<vmem>>, vector<1x1x128xf32>
    %140 = vector.shape_cast %139 : vector<1x1x128xf32> to vector<1x128xf32>
    %cst_54 = arith.constant dense<0.000000e+00> : vector<10xf32>
    %141 = vector.multi_reduction <add>, %136, %cst_54 [1] : vector<10x128xf32> to vector<10xf32>
    %142 = vector.shape_cast %141 : vector<10xf32> to vector<10x1xf32>
    %cst_55 = arith.constant 1.280000e+02 : f32
    %143 = vector.broadcast %cst_55 : f32 to vector<10x1xf32>
    %144 = arith.divf %142, %143 : vector<10x1xf32>
    %145 = vector.broadcast %144 : vector<10x1xf32> to vector<10x128xf32>
    %146 = arith.subf %136, %145 : vector<10x128xf32>
    %147 = arith.mulf %146, %146 : vector<10x128xf32>
    %cst_56 = arith.constant dense<0.000000e+00> : vector<10xf32>
    %148 = vector.multi_reduction <add>, %147, %cst_56 [1] : vector<10x128xf32> to vector<10xf32>
    %149 = vector.shape_cast %148 : vector<10xf32> to vector<10x1xf32>
    %cst_57 = arith.constant 1.280000e+02 : f32
    %150 = vector.broadcast %cst_57 : f32 to vector<10x1xf32>
    %151 = arith.divf %149, %150 : vector<10x1xf32>
    %152 = vector.broadcast %144 : vector<10x1xf32> to vector<10x128xf32>
    %153 = arith.subf %136, %152 : vector<10x128xf32>
    %cst_58 = arith.constant 9.99999974E-6 : f32
    %154 = vector.broadcast %cst_58 : f32 to vector<10x1xf32>
    %155 = arith.addf %151, %154 : vector<10x1xf32>
    %156 = math.rsqrt %155 : vector<10x1xf32>
    %157 = vector.broadcast %156 : vector<10x1xf32> to vector<10x128xf32>
    %158 = arith.mulf %153, %157 : vector<10x128xf32>
    %159 = vector.broadcast %138 : vector<1x128xf32> to vector<10x128xf32>
    %160 = arith.mulf %158, %159 : vector<10x128xf32>
    %161 = vector.broadcast %140 : vector<1x128xf32> to vector<10x128xf32>
    %162 = arith.addf %160, %161 : vector<10x128xf32>
    %163 = arith.truncf %162 : vector<10x128xf32> to vector<10x128xbf16>
    %c0_59 = arith.constant 0 : index
    %c0_60 = arith.constant 0 : index
    %c0_61 = arith.constant 0 : index
    %164 = vector.load %arg16[%c0_59, %c0_60, %c0_61] : memref<1x128x512xbf16, #tpu.memory_space<vmem>>, vector<1x128x512xbf16>
    %165 = vector.shape_cast %164 : vector<1x128x512xbf16> to vector<128x512xbf16>
    %cst_62 = arith.constant dense<0.000000e+00> : vector<10x512xf32>
    %166 = tpu.matmul %163, %165, %cst_62 {dimension_numbers = #tpu.dot_dimension_numbers<[1], [0], [0], [1], [0, 0, 1, 1], [], []>} : vector<10x128xbf16>, vector<128x512xbf16>, vector<10x512xf32> -> vector<10x512xf32>
    %c0_63 = arith.constant 0 : index
    %c0_64 = arith.constant 0 : index
    %c0_65 = arith.constant 0 : index
    %167 = vector.load %arg17[%c0_63, %c0_64, %c0_65] : memref<1x1x512xf32, #tpu.memory_space<vmem>>, vector<1x1x512xf32>
    %168 = vector.shape_cast %167 : vector<1x1x512xf32> to vector<1x512xf32>
    %169 = vector.broadcast %168 : vector<1x512xf32> to vector<10x512xf32>
    %170 = arith.addf %166, %169 : vector<10x512xf32>
    %cst_66 = arith.constant 1.702000e+00 : f32
    %171 = vector.broadcast %cst_66 : f32 to vector<10x512xf32>
    %172 = arith.mulf %171, %170 : vector<10x512xf32>
    %173 = arith.negf %172 : vector<10x512xf32>
    %174 = math.exp %173 : vector<10x512xf32>
    %cst_67 = arith.constant 1.000000e+00 : f32
    %175 = vector.broadcast %cst_67 : f32 to vector<10x512xf32>
    %176 = arith.addf %175, %174 : vector<10x512xf32>
    %177 = arith.divf %175, %176 : vector<10x512xf32>
    %178 = arith.mulf %170, %177 : vector<10x512xf32>
    %179 = arith.truncf %178 : vector<10x512xf32> to vector<10x512xbf16>
    %c0_68 = arith.constant 0 : index
    %c0_69 = arith.constant 0 : index
    %c0_70 = arith.constant 0 : index
    %180 = vector.load %arg18[%c0_68, %c0_69, %c0_70] : memref<1x512x128xbf16, #tpu.memory_space<vmem>>, vector<1x512x128xbf16>
    %181 = vector.shape_cast %180 : vector<1x512x128xbf16> to vector<512x128xbf16>
    %cst_71 = arith.constant dense<0.000000e+00> : vector<10x128xf32>
    %182 = tpu.matmul %179, %181, %cst_71 {dimension_numbers = #tpu.dot_dimension_numbers<[1], [0], [0], [1], [0, 0, 1, 1], [], []>} : vector<10x512xbf16>, vector<512x128xbf16>, vector<10x128xf32> -> vector<10x128xf32>
    %c0_72 = arith.constant 0 : index
    %c0_73 = arith.constant 0 : index
    %c0_74 = arith.constant 0 : index
    %183 = vector.load %arg19[%c0_72, %c0_73, %c0_74] : memref<1x1x128xf32, #tpu.memory_space<vmem>>, vector<1x1x128xf32>
    %184 = vector.shape_cast %183 : vector<1x1x128xf32> to vector<1x128xf32>
    %185 = vector.broadcast %184 : vector<1x128xf32> to vector<10x128xf32>
    %186 = arith.addf %182, %185 : vector<10x128xf32>
    %187 = arith.addf %136, %186 : vector<10x128xf32>
    %c0_75 = arith.constant 0 : index
    %c0_76 = arith.constant 0 : index
    %188 = vector.load %arg34[%c0_75, %c0_76] : memref<10x128xf32, #tpu.memory_space<vmem>>, vector<10x128xf32>
    tpu.vector_store %arg34[%c0_75, %c0_76], %187 {strides = array<i32>} : memref<10x128xf32, #tpu.memory_space<vmem>>, vector<10x128xf32>,
    %c1_i32 = arith.constant 1 : i32
    %189 = arith.cmpi eq, %arg0, %c1_i32 : i32
    %190 = arith.extui %189 : i1 to i32
    %c0_i32_77 = arith.constant 0 : i32
    %191 = arith.cmpi ne, %190, %c0_i32_77 : i32
    scf.if %191 {
      %c0_79 = arith.constant 0 : index
      %c0_80 = arith.constant 0 : index
      %195 = vector.load %arg34[%c0_79, %c0_80] : memref<10x128xf32, #tpu.memory_space<vmem>>, vector<10x128xf32>
      %c0_81 = arith.constant 0 : index
      %c0_82 = arith.constant 0 : index
      %196 = vector.load %arg7[%c0_81, %c0_82] : memref<2x10xf32, #tpu.memory_space<vmem>>, vector<2x10xf32>
      %197 = vector.shape_cast %196 : vector<2x10xf32> to vector<2x10x1xf32>
      %198 = vector.shape_cast %195 : vector<10x128xf32> to vector<1x10x128xf32>
      %199 = vector.broadcast %197 : vector<2x10x1xf32> to vector<2x10x128xf32>
      %200 = vector.broadcast %198 : vector<1x10x128xf32> to vector<2x10x128xf32>
      %201 = arith.mulf %199, %200 : vector<2x10x128xf32>
      %cst_83 = arith.constant dense<0.000000e+00> : vector<2x128xf32>
      %202 = vector.multi_reduction <add>, %201, %cst_83 [1] : vector<2x10x128xf32> to vector<2x128xf32>
      %c0_84 = arith.constant 0 : index
      %c0_85 = arith.constant 0 : index
      %203 = vector.load %arg27[%c0_84, %c0_85] : memref<2x128xf32, #tpu.memory_space<vmem>>, vector<2x128xf32>
      tpu.vector_store %arg27[%c0_84, %c0_85], %202 {strides = array<i32>} : memref<2x128xf32, #tpu.memory_space<vmem>>, vector<2x128xf32>,
    } else {
    }
    %c2_i32 = arith.constant 2 : i32
    %192 = arith.cmpi eq, %arg0, %c2_i32 : i32
    %193 = arith.extui %192 : i1 to i32
    %c0_i32_78 = arith.constant 0 : i32
    %194 = arith.cmpi ne, %193, %c0_i32_78 : i32
    scf.if %194 {
      %c0_79 = arith.constant 0 : index
      %c0_80 = arith.constant 0 : index
      %195 = vector.load %arg34[%c0_79, %c0_80] : memref<10x128xf32, #tpu.memory_space<vmem>>, vector<10x128xf32>
      %c0_81 = arith.constant 0 : index
      %c0_82 = arith.constant 0 : index
      %196 = vector.load %arg7[%c0_81, %c0_82] : memref<2x10xf32, #tpu.memory_space<vmem>>, vector<2x10xf32>
      %197 = vector.shape_cast %196 : vector<2x10xf32> to vector<2x10x1xf32>
      %198 = vector.shape_cast %195 : vector<10x128xf32> to vector<1x10x128xf32>
      %199 = vector.broadcast %197 : vector<2x10x1xf32> to vector<2x10x128xf32>
      %200 = vector.broadcast %198 : vector<1x10x128xf32> to vector<2x10x128xf32>
      %201 = arith.mulf %199, %200 : vector<2x10x128xf32>
      %cst_83 = arith.constant dense<0.000000e+00> : vector<2x128xf32>
      %202 = vector.multi_reduction <add>, %201, %cst_83 [1] : vector<2x10x128xf32> to vector<2x128xf32>
      %c0_84 = arith.constant 0 : index
      %c0_85 = arith.constant 0 : index
      %203 = vector.load %arg28[%c0_84, %c0_85] : memref<2x128xf32, #tpu.memory_space<vmem>>, vector<2x128xf32>
      tpu.vector_store %arg28[%c0_84, %c0_85], %202 {strides = array<i32>} : memref<2x128xf32, #tpu.memory_space<vmem>>, vector<2x128xf32>,
      %c0_86 = arith.constant 0 : index
      %c0_87 = arith.constant 0 : index
      %204 = vector.load %arg20[%c0_86, %c0_87] : memref<1x128xf32, #tpu.memory_space<vmem>>, vector<1x128xf32>
      %c0_88 = arith.constant 0 : index
      %c0_89 = arith.constant 0 : index
      %205 = vector.load %arg21[%c0_88, %c0_89] : memref<1x128xf32, #tpu.memory_space<vmem>>, vector<1x128xf32>
      %cst_90 = arith.constant dense<0.000000e+00> : vector<2xf32>
      %206 = vector.multi_reduction <add>, %202, %cst_90 [1] : vector<2x128xf32> to vector<2xf32>
      %207 = vector.shape_cast %206 : vector<2xf32> to vector<2x1xf32>
      %cst_91 = arith.constant 1.280000e+02 : f32
      %208 = vector.broadcast %cst_91 : f32 to vector<2x1xf32>
      %209 = arith.divf %207, %208 : vector<2x1xf32>
      %210 = vector.broadcast %209 : vector<2x1xf32> to vector<2x128xf32>
      %211 = arith.subf %202, %210 : vector<2x128xf32>
      %212 = arith.mulf %211, %211 : vector<2x128xf32>
      %cst_92 = arith.constant dense<0.000000e+00> : vector<2xf32>
      %213 = vector.multi_reduction <add>, %212, %cst_92 [1] : vector<2x128xf32> to vector<2xf32>
      %214 = vector.shape_cast %213 : vector<2xf32> to vector<2x1xf32>
      %cst_93 = arith.constant 1.280000e+02 : f32
      %215 = vector.broadcast %cst_93 : f32 to vector<2x1xf32>
      %216 = arith.divf %214, %215 : vector<2x1xf32>
      %217 = vector.broadcast %209 : vector<2x1xf32> to vector<2x128xf32>
      %218 = arith.subf %202, %217 : vector<2x128xf32>
      %cst_94 = arith.constant 9.99999974E-6 : f32
      %219 = vector.broadcast %cst_94 : f32 to vector<2x1xf32>
      %220 = arith.addf %216, %219 : vector<2x1xf32>
      %221 = math.rsqrt %220 : vector<2x1xf32>
      %222 = vector.broadcast %221 : vector<2x1xf32> to vector<2x128xf32>
      %223 = arith.mulf %218, %222 : vector<2x128xf32>
      %224 = vector.broadcast %204 : vector<1x128xf32> to vector<2x128xf32>
      %225 = arith.mulf %223, %224 : vector<2x128xf32>
      %226 = vector.broadcast %205 : vector<1x128xf32> to vector<2x128xf32>
      %227 = arith.addf %225, %226 : vector<2x128xf32>
      %228 = arith.truncf %227 : vector<2x128xf32> to vector<2x128xbf16>
      %c0_95 = arith.constant 0 : index
      %c0_96 = arith.constant 0 : index
      %229 = vector.load %arg22[%c0_95, %c0_96] : memref<128x128xbf16, #tpu.memory_space<vmem>>, vector<128x128xbf16>
      %cst_97 = arith.constant dense<0.000000e+00> : vector<2x128xf32>
      %230 = tpu.matmul %228, %229, %cst_97 {dimension_numbers = #tpu.dot_dimension_numbers<[1], [0], [0], [1], [0, 0, 1, 1], [], []>} : vector<2x128xbf16>, vector<128x128xbf16>, vector<2x128xf32> -> vector<2x128xf32>
      %c0_98 = arith.constant 0 : index
      %c0_99 = arith.constant 0 : index
      %231 = vector.load %arg29[%c0_98, %c0_99] : memref<2x128xf32, #tpu.memory_space<vmem>>, vector<2x128xf32>
      tpu.vector_store %arg29[%c0_98, %c0_99], %230 {strides = array<i32>} : memref<2x128xf32, #tpu.memory_space<vmem>>, vector<2x128xf32>,
      %c0_100 = arith.constant 0 : index
      %c0_101 = arith.constant 0 : index
      %232 = vector.load %arg23[%c0_100, %c0_101] : memref<4x128xf32, #tpu.memory_space<vmem>>, vector<4x128xf32>
      %233 = vector.extract_strided_slice %232 {offsets = [2, 0], sizes = [1, 128], strides = [1, 1]} : vector<4x128xf32> to vector<1x128xf32>
      %234 = vector.broadcast %233 : vector<1x128xf32> to vector<2x128xf32>
      %235 = arith.subf %202, %234 : vector<2x128xf32>
      %236 = vector.extract_strided_slice %232 {offsets = [3, 0], sizes = [1, 128], strides = [1, 1]} : vector<4x128xf32> to vector<1x128xf32>
      %cst_102 = arith.constant 9.99999974E-6 : f32
      %237 = vector.broadcast %cst_102 : f32 to vector<1x128xf32>
      %238 = arith.addf %236, %237 : vector<1x128xf32>
      %239 = math.rsqrt %238 : vector<1x128xf32>
      %240 = vector.broadcast %239 : vector<1x128xf32> to vector<2x128xf32>
      %241 = arith.mulf %235, %240 : vector<2x128xf32>
      %242 = vector.extract_strided_slice %232 {offsets = [0, 0], sizes = [1, 128], strides = [1, 1]} : vector<4x128xf32> to vector<1x128xf32>
      %243 = vector.broadcast %242 : vector<1x128xf32> to vector<2x128xf32>
      %244 = arith.mulf %241, %243 : vector<2x128xf32>
      %245 = vector.extract_strided_slice %232 {offsets = [1, 0], sizes = [1, 128], strides = [1, 1]} : vector<4x128xf32> to vector<1x128xf32>
      %246 = vector.broadcast %245 : vector<1x128xf32> to vector<2x128xf32>
      %247 = arith.addf %244, %246 : vector<2x128xf32>
      %c0_103 = arith.constant 0 : index
      %c0_104 = arith.constant 0 : index
      %248 = vector.load %arg24[%c0_103, %c0_104] : memref<4x128xf32, #tpu.memory_space<vmem>>, vector<4x128xf32>
      %249 = vector.extract_strided_slice %248 {offsets = [2, 0], sizes = [1, 128], strides = [1, 1]} : vector<4x128xf32> to vector<1x128xf32>
      %250 = vector.broadcast %249 : vector<1x128xf32> to vector<2x128xf32>
      %251 = arith.subf %230, %250 : vector<2x128xf32>
      %252 = vector.extract_strided_slice %248 {offsets = [3, 0], sizes = [1, 128], strides = [1, 1]} : vector<4x128xf32> to vector<1x128xf32>
      %cst_105 = arith.constant 9.99999974E-6 : f32
      %253 = vector.broadcast %cst_105 : f32 to vector<1x128xf32>
      %254 = arith.addf %252, %253 : vector<1x128xf32>
      %255 = math.rsqrt %254 : vector<1x128xf32>
      %256 = vector.broadcast %255 : vector<1x128xf32> to vector<2x128xf32>
      %257 = arith.mulf %251, %256 : vector<2x128xf32>
      %258 = vector.extract_strided_slice %248 {offsets = [0, 0], sizes = [1, 128], strides = [1, 1]} : vector<4x128xf32> to vector<1x128xf32>
      %259 = vector.broadcast %258 : vector<1x128xf32> to vector<2x128xf32>
      %260 = arith.mulf %257, %259 : vector<2x128xf32>
      %261 = vector.extract_strided_slice %248 {offsets = [1, 0], sizes = [1, 128], strides = [1, 1]} : vector<4x128xf32> to vector<1x128xf32>
      %262 = vector.broadcast %261 : vector<1x128xf32> to vector<2x128xf32>
      %263 = arith.addf %260, %262 : vector<2x128xf32>
      %c0_106 = arith.constant 0 : index
      %c0_107 = arith.constant 0 : index
      %264 = vector.load %arg30[%c0_106, %c0_107] : memref<2x128xf32, #tpu.memory_space<vmem>>, vector<2x128xf32>
      tpu.vector_store %arg30[%c0_106, %c0_107], %247 {strides = array<i32>} : memref<2x128xf32, #tpu.memory_space<vmem>>, vector<2x128xf32>,
      %c0_108 = arith.constant 0 : index
      %c0_109 = arith.constant 0 : index
      %265 = vector.load %arg31[%c0_108, %c0_109] : memref<2x128xf32, #tpu.memory_space<vmem>>, vector<2x128xf32>
      tpu.vector_store %arg31[%c0_108, %c0_109], %263 {strides = array<i32>} : memref<2x128xf32, #tpu.memory_space<vmem>>, vector<2x128xf32>,
      %266 = arith.truncf %247 : vector<2x128xf32> to vector<2x128xbf16>
      %c0_110 = arith.constant 0 : index
      %c0_111 = arith.constant 0 : index
      %267 = vector.load %arg25[%c0_110, %c0_111] : memref<128x128xbf16, #tpu.memory_space<vmem>>, vector<128x128xbf16>
      %cst_112 = arith.constant dense<0.000000e+00> : vector<2x128xf32>
      %268 = tpu.matmul %266, %267, %cst_112 {dimension_numbers = #tpu.dot_dimension_numbers<[1], [0], [0], [1], [0, 0, 1, 1], [], []>} : vector<2x128xbf16>, vector<128x128xbf16>, vector<2x128xf32> -> vector<2x128xf32>
      %c0_113 = arith.constant 0 : index
      %c0_114 = arith.constant 0 : index
      %269 = vector.load %arg32[%c0_113, %c0_114] : memref<2x128xf32, #tpu.memory_space<vmem>>, vector<2x128xf32>
      tpu.vector_store %arg32[%c0_113, %c0_114], %268 {strides = array<i32>} : memref<2x128xf32, #tpu.memory_space<vmem>>, vector<2x128xf32>,
      %270 = arith.truncf %263 : vector<2x128xf32> to vector<2x128xbf16>
      %c0_115 = arith.constant 0 : index
      %c0_116 = arith.constant 0 : index
      %271 = vector.load %arg26[%c0_115, %c0_116] : memref<128x128xbf16, #tpu.memory_space<vmem>>, vector<128x128xbf16>
      %cst_117 = arith.constant dense<0.000000e+00> : vector<2x128xf32>
      %272 = tpu.matmul %270, %271, %cst_117 {dimension_numbers = #tpu.dot_dimension_numbers<[1], [0], [0], [1], [0, 0, 1, 1], [], []>} : vector<2x128xbf16>, vector<128x128xbf16>, vector<2x128xf32> -> vector<2x128xf32>
      %c0_118 = arith.constant 0 : index
      %c0_119 = arith.constant 0 : index
      %273 = vector.load %arg33[%c0_118, %c0_119] : memref<2x128xf32, #tpu.memory_space<vmem>>, vector<2x128xf32>
      tpu.vector_store %arg33[%c0_118, %c0_119], %272 {strides = array<i32>} : memref<2x128xf32, #tpu.memory_space<vmem>>, vector<2x128xf32>,
    } else {
    }
    return
  }
  func.func @transform_0(%arg0: i32) -> (i32, i32) {
    %c0_i32 = arith.constant 0 : i32
    %c0_i32_0 = arith.constant 0 : i32
    %c0_i32_1 = arith.constant 0 : i32
    return %c0_i32, %c0_i32_0 : i32, i32
  }
  func.func @transform_1(%arg0: i32) -> (i32, i32) {
    %c0_i32 = arith.constant 0 : i32
    %c0_i32_0 = arith.constant 0 : i32
    %c0_i32_1 = arith.constant 0 : i32
    return %c0_i32, %c0_i32_0 : i32, i32
  }
  func.func @transform_2(%arg0: i32) -> (i32, i32) {
    %c0_i32 = arith.constant 0 : i32
    %c0_i32_0 = arith.constant 0 : i32
    %c0_i32_1 = arith.constant 0 : i32
    return %c0_i32, %c0_i32_0 : i32, i32
  }
  func.func @transform_3(%arg0: i32) -> (i32, i32) {
    %c0_i32 = arith.constant 0 : i32
    %c0_i32_0 = arith.constant 0 : i32
    %c0_i32_1 = arith.constant 0 : i32
    return %c0_i32, %c0_i32_0 : i32, i32
  }
  func.func @transform_4(%arg0: i32) -> (i32, i32) {
    %c0_i32 = arith.constant 0 : i32
    %c0_i32_0 = arith.constant 0 : i32
    %c0_i32_1 = arith.constant 0 : i32
    return %c0_i32, %c0_i32_0 : i32, i32
  }
  func.func @transform_5(%arg0: i32) -> (i32, i32) {
    %c0_i32 = arith.constant 0 : i32
    %c0_i32_0 = arith.constant 0 : i32
    %c0_i32_1 = arith.constant 0 : i32
    return %c0_i32, %c0_i32_0 : i32, i32
  }
  func.func @transform_6(%arg0: i32) -> (i32, i32) {
    %c0_i32 = arith.constant 0 : i32
    %c0_i32_0 = arith.constant 0 : i32
    %c0_i32_1 = arith.constant 0 : i32
    return %c0_i32, %c0_i32_0 : i32, i32
  }
  func.func @transform_7(%arg0: i32) -> (i32, i32, i32) {
    %c0_i32 = arith.constant 0 : i32
    %c0_i32_0 = arith.constant 0 : i32
    %c0_i32_1 = arith.constant 0 : i32
    return %arg0, %c0_i32, %c0_i32_0 : i32, i32, i32
  }
  func.func @transform_8(%arg0: i32) -> (i32, i32, i32) {
    %c0_i32 = arith.constant 0 : i32
    %c0_i32_0 = arith.constant 0 : i32
    %c0_i32_1 = arith.constant 0 : i32
    return %arg0, %c0_i32, %c0_i32_0 : i32, i32, i32
  }
  func.func @transform_9(%arg0: i32) -> (i32, i32, i32) {
    %c0_i32 = arith.constant 0 : i32
    %c0_i32_0 = arith.constant 0 : i32
    %c0_i32_1 = arith.constant 0 : i32
    return %arg0, %c0_i32, %c0_i32_0 : i32, i32, i32
  }
  func.func @transform_10(%arg0: i32) -> (i32, i32, i32) {
    %c0_i32 = arith.constant 0 : i32
    %c0_i32_0 = arith.constant 0 : i32
    %c0_i32_1 = arith.constant 0 : i32
    return %arg0, %c0_i32, %c0_i32_0 : i32, i32, i32
  }
  func.func @transform_11(%arg0: i32) -> (i32, i32, i32) {
    %c0_i32 = arith.constant 0 : i32
    %c0_i32_0 = arith.constant 0 : i32
    %c0_i32_1 = arith.constant 0 : i32
    return %arg0, %c0_i32, %c0_i32_0 : i32, i32, i32
  }
  func.func @transform_12(%arg0: i32) -> (i32, i32, i32) {
    %c0_i32 = arith.constant 0 : i32
    %c0_i32_0 = arith.constant 0 : i32
    %c0_i32_1 = arith.constant 0 : i32
    return %arg0, %c0_i32, %c0_i32_0 : i32, i32, i32
  }
  func.func @transform_13(%arg0: i32) -> (i32, i32, i32) {
    %c0_i32 = arith.constant 0 : i32
    %c0_i32_0 = arith.constant 0 : i32
    %c0_i32_1 = arith.constant 0 : i32
    return %arg0, %c0_i32, %c0_i32_0 : i32, i32, i32
  }
  func.func @transform_14(%arg0: i32) -> (i32, i32, i32) {
    %c0_i32 = arith.constant 0 : i32
    %c0_i32_0 = arith.constant 0 : i32
    %c0_i32_1 = arith.constant 0 : i32
    return %arg0, %c0_i32, %c0_i32_0 : i32, i32, i32
  }
  func.func @transform_15(%arg0: i32) -> (i32, i32, i32) {
    %c0_i32 = arith.constant 0 : i32
    %c0_i32_0 = arith.constant 0 : i32
    %c0_i32_1 = arith.constant 0 : i32
    return %arg0, %c0_i32, %c0_i32_0 : i32, i32, i32
  }
  func.func @transform_16(%arg0: i32) -> (i32, i32, i32) {
    %c0_i32 = arith.constant 0 : i32
    %c0_i32_0 = arith.constant 0 : i32
    %c0_i32_1 = arith.constant 0 : i32
    return %arg0, %c0_i32, %c0_i32_0 : i32, i32, i32
  }
  func.func @transform_17(%arg0: i32) -> (i32, i32, i32) {
    %c0_i32 = arith.constant 0 : i32
    %c0_i32_0 = arith.constant 0 : i32
    %c0_i32_1 = arith.constant 0 : i32
    return %arg0, %c0_i32, %c0_i32_0 : i32, i32, i32
  }
  func.func @transform_18(%arg0: i32) -> (i32, i32, i32) {
    %c0_i32 = arith.constant 0 : i32
    %c0_i32_0 = arith.constant 0 : i32
    %c0_i32_1 = arith.constant 0 : i32
    return %arg0, %c0_i32, %c0_i32_0 : i32, i32, i32
  }
  func.func @transform_19(%arg0: i32) -> (i32, i32) {
    %c0_i32 = arith.constant 0 : i32
    %c0_i32_0 = arith.constant 0 : i32
    %c0_i32_1 = arith.constant 0 : i32
    return %c0_i32, %c0_i32_0 : i32, i32
  }
  func.func @transform_20(%arg0: i32) -> (i32, i32) {
    %c0_i32 = arith.constant 0 : i32
    %c0_i32_0 = arith.constant 0 : i32
    %c0_i32_1 = arith.constant 0 : i32
    return %c0_i32, %c0_i32_0 : i32, i32
  }
  func.func @transform_21(%arg0: i32) -> (i32, i32) {
    %c0_i32 = arith.constant 0 : i32
    %c0_i32_0 = arith.constant 0 : i32
    %c0_i32_1 = arith.constant 0 : i32
    return %c0_i32, %c0_i32_0 : i32, i32
  }
  func.func @transform_22(%arg0: i32) -> (i32, i32) {
    %c0_i32 = arith.constant 0 : i32
    %c0_i32_0 = arith.constant 0 : i32
    %c0_i32_1 = arith.constant 0 : i32
    return %c0_i32, %c0_i32_0 : i32, i32
  }
  func.func @transform_23(%arg0: i32) -> (i32, i32) {
    %c0_i32 = arith.constant 0 : i32
    %c0_i32_0 = arith.constant 0 : i32
    %c0_i32_1 = arith.constant 0 : i32
    return %c0_i32, %c0_i32_0 : i32, i32
  }
  func.func @transform_24(%arg0: i32) -> (i32, i32) {
    %c0_i32 = arith.constant 0 : i32
    %c0_i32_0 = arith.constant 0 : i32
    %c0_i32_1 = arith.constant 0 : i32
    return %c0_i32, %c0_i32_0 : i32, i32
  }
  func.func @transform_25(%arg0: i32) -> (i32, i32) {
    %c0_i32 = arith.constant 0 : i32
    %c0_i32_0 = arith.constant 0 : i32
    %c0_i32_1 = arith.constant 0 : i32
    return %c0_i32, %c0_i32_0 : i32, i32
  }
  func.func @transform_26(%arg0: i32) -> (i32, i32) {
    %c0_i32 = arith.constant 0 : i32
    %c0_i32_0 = arith.constant 0 : i32
    %c0_i32_1 = arith.constant 0 : i32
    return %c0_i32, %c0_i32_0 : i32, i32
  }
  func.func @transform_27(%arg0: i32) -> (i32, i32) {
    %c0_i32 = arith.constant 0 : i32
    %c0_i32_0 = arith.constant 0 : i32
    %c0_i32_1 = arith.constant 0 : i32
    return %c0_i32, %c0_i32_0 : i32, i32
  }
  func.func @transform_28(%arg0: i32) -> (i32, i32) {
    %c0_i32 = arith.constant 0 : i32
    %c0_i32_0 = arith.constant 0 : i32
    %c0_i32_1 = arith.constant 0 : i32
    return %c0_i32, %c0_i32_0 : i32, i32
  }
  func.func @transform_29(%arg0: i32) -> (i32, i32) {
    %c0_i32 = arith.constant 0 : i32
    %c0_i32_0 = arith.constant 0 : i32
    %c0_i32_1 = arith.constant 0 : i32
    return %c0_i32, %c0_i32_0 : i32, i32
  }
  func.func @transform_30(%arg0: i32) -> (i32, i32) {
    %c0_i32 = arith.constant 0 : i32
    %c0_i32_0 = arith.constant 0 : i32
    %c0_i32_1 = arith.constant 0 : i32
    return %c0_i32, %c0_i32_0 : i32, i32
  }
  func.func @transform_31(%arg0: i32) -> (i32, i32) {
    %c0_i32 = arith.constant 0 : i32
    %c0_i32_0 = arith.constant 0 : i32
    %c0_i32_1 = arith.constant 0 : i32
    return %c0_i32, %c0_i32_0 : i32, i32
  }
  func.func @transform_32(%arg0: i32) -> (i32, i32) {
    %c0_i32 = arith.constant 0 : i32
    %c0_i32_0 = arith.constant 0 : i32
    %c0_i32_1 = arith.constant 0 : i32
    return %c0_i32, %c0_i32_0 : i32, i32
  }
}

</mosaic_0001>

<llo_original>
// kernel: tpu_custom_call.1
$region0: #{tpu_custom_call.1}
  #allocation0 [shape = 'u32[]', space=smem, size = 0x4, offset = 0x4, fixed_abs, tag = 'smem constant byte address 0x4 - core index']
  #allocation1 [shape = 'u32[72,128]{1,0:T(1,128)}', space=vmem, size = 0x9000, scoped, tag = 'internal scratch']
  #allocation2 [shape = 'f32[10,128]{1,0:T(8,128)}', space=vmem, size = 0x2000, scoped, tag = 'scratch operand']
  %s0 = inlined_call_operand.smem [shape: u32[33], index: -1, kind: input, shape index: {}]
  %s1 = sld [smem:[%s0]]
  %s2 = scalar_lea.smem %s0, 1
  %s3 = sld [smem:[%s2]]
  %s4 = scalar_lea.smem %s0, 2
  %s5 = sld [smem:[%s4]]
  %s6 = scalar_lea.smem %s0, 3
  %s7 = sld [smem:[%s6]]
  %s8 = scalar_lea.smem %s0, 4
  %s9 = sld [smem:[%s8]]
  %s10 = scalar_lea.smem %s0, 5
  %s11 = sld [smem:[%s10]]
  %s12 = scalar_lea.smem %s0, 6
  %s13 = sld [smem:[%s12]]
  %s14 = scalar_lea.smem %s0, 7
  %s15 = sld [smem:[%s14]]
  %s16 = scalar_lea.smem %s0, 8
  %s17 = sld [smem:[%s16]]
  %s18 = scalar_lea.smem %s0, 9
  %s19 = sld [smem:[%s18]]
  %s20 = scalar_lea.smem %s0, 10
  %s21 = sld [smem:[%s20]]
  %s22 = scalar_lea.smem %s0, 11
  %s23 = sld [smem:[%s22]]
  %s24 = scalar_lea.smem %s0, 12
  %s25 = sld [smem:[%s24]]
  %s26 = scalar_lea.smem %s0, 13
  %s27 = sld [smem:[%s26]]
  %s28 = scalar_lea.smem %s0, 14
  %s29 = sld [smem:[%s28]]
  %s30 = scalar_lea.smem %s0, 15
  %s31 = sld [smem:[%s30]]
  %s32 = scalar_lea.smem %s0, 16
  %s33 = sld [smem:[%s32]]
  %s34 = scalar_lea.smem %s0, 17
  %s35 = sld [smem:[%s34]]
  %s36 = scalar_lea.smem %s0, 18
  %s37 = sld [smem:[%s36]]
  %s38 = scalar_lea.smem %s0, 19
  %s39 = sld [smem:[%s38]]
  %s40 = scalar_lea.smem %s0, 20
  %s41 = sld [smem:[%s40]]
  %s42 = scalar_lea.smem %s0, 21
  %s43 = sld [smem:[%s42]]
  %s44 = scalar_lea.smem %s0, 22
  %s45 = sld [smem:[%s44]]
  %s46 = scalar_lea.smem %s0, 23
  %s47 = sld [smem:[%s46]]
  %s48 = scalar_lea.smem %s0, 24
  %s49 = sld [smem:[%s48]]
  %s50 = scalar_lea.smem %s0, 25
  %s51 = sld [smem:[%s50]]
  %s52 = scalar_lea.smem %s0, 26
  %s53 = sld [smem:[%s52]]
  %s54 = scalar_lea.smem %s0, 27
  %s55 = sld [smem:[%s54]]
  %s56 = scalar_lea.smem %s0, 28
  %s57 = sld [smem:[%s56]]
  %s58 = scalar_lea.smem %s0, 29
  %s59 = sld [smem:[%s58]]
  %s60 = scalar_lea.smem %s0, 30
  %s61 = sld [smem:[%s60]]
  %s62 = scalar_lea.smem %s0, 31
  %s63 = sld [smem:[%s62]]
  %s64 = scalar_lea.smem %s0, 32
  %s65 = sld [smem:[%s64]]
  %66 = xla_tuple %s53, %s55, %s57, %s59, %s61, %s63, %s65
  %s67 = sld [smem:[#allocation0]]
  $region289: #{tpu_custom_call.1} parent=0
    _
  %s69 = ssub.s32 1, %s67
  %s70 = scalar_select 0, %s69, %s67
  $region1: #{tpu_custom_call.1} parent=0
    #allocation3 [shape = 'u8[24576]{0}', space=vmem, size = 0x6000, scoped, tag = 'input window, operand 0, single buffered']
    #allocation4 [shape = 's32[2]{0}', space=sflag, size = 0x8, scoped, tag = 'scoped memory for tpu_custom_call.1']
    #allocation5 [shape = 's32[2]{0}', space=sflag, size = 0x8, scoped, tag = 'scoped memory for tpu_custom_call.1']
    #allocation6 [shape = 'u8[196608]{0}', space=vmem, size = 0x30000, scoped, tag = 'input window, operand 1, single buffered']
    #allocation7 [shape = 's32[1]{0}', space=sflag, size = 0x4, scoped, tag = 'scoped memory for tpu_custom_call.1']
    #allocation8 [shape = 'u8[8192]{0}', space=vmem, size = 0x2000, scoped, tag = 'input window, operand 2, single buffered']
    #allocation9 [shape = 'u8[512]{0}', space=vmem, size = 0x400, scoped, tag = 'input window, operand 3, single buffered']
    #allocation10 [shape = 's32[1]{0}', space=sflag, size = 0x4, scoped, tag = 'scoped memory for tpu_custom_call.1']
    #allocation11 [shape = 'u8[512]{0}', space=vmem, size = 0x400, scoped, tag = 'input window, operand 4, single buffered']
    #allocation12 [shape = 'u8[8192]{0}', space=vmem, size = 0x2000, scoped, tag = 'input window, operand 5, single buffered']
    #allocation13 [shape = 's32[1]{0}', space=sflag, size = 0x4, scoped, tag = 'scoped memory for tpu_custom_call.1']
    #allocation14 [shape = 'u8[1024]{0}', space=vmem, size = 0x400, scoped, tag = 'input window, operand 6, single buffered']
    #allocation15 [shape = 'u8[1024]{0}', space=vmem, size = 0x400, scoped, tag = 'input window, operand 7']
    #allocation16 [shape = 's32[2]{0}', space=sflag, size = 0x8, scoped, tag = 'scoped memory for tpu_custom_call.1']
    #allocation17 [shape = 'u8[1024]{0}', space=vmem, size = 0x400, scoped, tag = 'input window, operand 8']
    #allocation18 [shape = 'u8[196608]{0}', space=vmem, size = 0x30000, scoped, tag = 'input window, operand 9']
    #allocation19 [shape = 's32[2]{0}', space=sflag, size = 0x8, scoped, tag = 'scoped memory for tpu_custom_call.1']
    #allocation20 [shape = 'u8[3072]{0}', space=vmem, size = 0xc00, scoped, tag = 'input window, operand 10']
    #allocation21 [shape = 'u8[65536]{0}', space=vmem, size = 0x10000, scoped, tag = 'input window, operand 11']
    #allocation22 [shape = 's32[2]{0}', space=sflag, size = 0x8, scoped, tag = 'scoped memory for tpu_custom_call.1']
    #allocation23 [shape = 'u8[1024]{0}', space=vmem, size = 0x400, scoped, tag = 'input window, operand 12']
    #allocation24 [shape = 'u8[1024]{0}', space=vmem, size = 0x400, scoped, tag = 'input window, operand 13']
    #allocation25 [shape = 's32[2]{0}', space=sflag, size = 0x8, scoped, tag = 'scoped memory for tpu_custom_call.1']
    #allocation26 [shape = 'u8[1024]{0}', space=vmem, size = 0x400, scoped, tag = 'input window, operand 14']
    #allocation27 [shape = 'u8[262144]{0}', space=vmem, size = 0x40000, scoped, tag = 'input window, operand 15']
    #allocation28 [shape = 's32[2]{0}', space=sflag, size = 0x8, scoped, tag = 'scoped memory for tpu_custom_call.1']
    #allocation29 [shape = 'u8[262144]{0}', space=vmem, size = 0x40000, scoped, tag = 'input window, operand 17']
    #allocation30 [shape = 'u8[1024]{0}', space=vmem, size = 0x400, scoped, tag = 'input window, operand 18']
    #allocation31 [shape = 's32[2]{0}', space=sflag, size = 0x8, scoped, tag = 'scoped memory for tpu_custom_call.1']
    #allocation32 [shape = 'u8[512]{0}', space=vmem, size = 0x400, scoped, tag = 'input window, operand 19, single buffered']
    #allocation33 [shape = 'u8[512]{0}', space=vmem, size = 0x400, scoped, tag = 'input window, operand 20, single buffered']
    #allocation34 [shape = 's32[1]{0}', space=sflag, size = 0x4, scoped, tag = 'scoped memory for tpu_custom_call.1']
    #allocation35 [shape = 'u8[32768]{0}', space=vmem, size = 0x8000, scoped, tag = 'input window, operand 21, single buffered']
    #allocation36 [shape = 'u8[32768]{0}', space=vmem, size = 0x8000, scoped, tag = 'input window, operand 24, single buffered']
    #allocation37 [shape = 's32[1]{0}', space=sflag, size = 0x4, scoped, tag = 'scoped memory for tpu_custom_call.1']
    #allocation38 [shape = 'u8[32768]{0}', space=vmem, size = 0x8000, scoped, tag = 'input window, operand 25, single buffered']
    #allocation39 [shape = 'u8[1024]{0}', space=vmem, size = 0x400, scoped, tag = 'output window, operand 0, single buffered']
    #allocation40 [shape = 'u8[1024]{0}', space=vmem, size = 0x400, scoped, tag = 'output window, operand 1, single buffered']
    #allocation41 [shape = 's32[1]{0}', space=sflag, size = 0x4, scoped, tag = 'scoped memory for tpu_custom_call.1']
    #allocation42 [shape = 'u8[1024]{0}', space=vmem, size = 0x400, scoped, tag = 'output window, operand 2, single buffered']
    #allocation43 [shape = 'u8[1024]{0}', space=vmem, size = 0x400, scoped, tag = 'output window, operand 3, single buffered']
    #allocation44 [shape = 's32[1]{0}', space=sflag, size = 0x4, scoped, tag = 'scoped memory for tpu_custom_call.1']
    #allocation45 [shape = 'u8[1024]{0}', space=vmem, size = 0x400, scoped, tag = 'output window, operand 4, single buffered']
    #allocation46 [shape = 'u8[1024]{0}', space=vmem, size = 0x400, scoped, tag = 'output window, operand 5, single buffered']
    #allocation47 [shape = 's32[1]{0}', space=sflag, size = 0x4, scoped, tag = 'scoped memory for tpu_custom_call.1']
    #allocation48 [shape = 'u8[1024]{0}', space=vmem, size = 0x400, scoped, tag = 'output window, operand 6, single buffered']
    %71 = vsyncpa [#allocation4], 0
    %72 = vsyncpa [#allocation7], 0
    %73 = vsyncpa [#allocation10], 0
    %74 = vsyncpa [#allocation13], 0
    %75 = vsyncpa [#allocation16], 0
    %s76 = scalar_lea.sflag [#allocation16], 1
    %77 = vsyncpa %s76, 0
    %78 = vsyncpa [#allocation19], 0
    %s79 = scalar_lea.sflag [#allocation19], 1
    %80 = vsyncpa %s79, 0
    %81 = vsyncpa [#allocation22], 0
    %s82 = scalar_lea.sflag [#allocation22], 1
    %83 = vsyncpa %s82, 0
    %84 = vsyncpa [#allocation25], 0
    %s85 = scalar_lea.sflag [#allocation25], 1
    %86 = vsyncpa %s85, 0
    %87 = vsyncpa [#allocation28], 0
    %s88 = scalar_lea.sflag [#allocation28], 1
    %89 = vsyncpa %s88, 0
    %90 = vsyncpa [#allocation31], 0
    %s91 = scalar_lea.sflag [#allocation31], 1
    %92 = vsyncpa %s91, 0
    %93 = vsyncpa [#allocation34], 0
    %94 = vsyncpa [#allocation37], 0
    %95 = vsyncpa [#allocation5], 0
    %96 = vsyncpa [#allocation41], 0
    %97 = vsyncpa [#allocation44], 0
    %98 = vsyncpa [#allocation47], 0
    loop: start=0, step=1, limit=5
    $region2: #{tpu_custom_call.1} parent=1 // loop_pre_header
      _
    $region3: #{tpu_custom_call.1} parent=1 // loop_header
      %s100 = sphi 0, %s104
      %p101 = scmp.ge.s32.totalorder %s100, 5
      %s108 = sphi 0, %s108
      %s110 = sphi 0, %s108
      %s111 = sphi 0, %s110
      %s125 = sphi 0, %s111
      %s129 = sphi 0, %s129
      %s131 = sphi 0, %s129
      %s132 = sphi 0, %s131
      %s146 = sphi 0, %s132
      %s150 = sphi 0, %s150
      %s152 = sphi 0, %s150
      %s153 = sphi 0, %s152
      %s167 = sphi 0, %s153
      %s171 = sphi 0, %s171
      %s173 = sphi 0, %s171
      %s174 = sphi 0, %s173
      %s188 = sphi 0, %s174
      %s192 = sphi 0, %s192
      %s194 = sphi 0, %s192
      %s195 = sphi 0, %s194
      %s209 = sphi 0, %s195
      %s213 = sphi 0, %s213
      %s215 = sphi 0, %s213
      %s216 = sphi 0, %s215
      %s230 = sphi 0, %s216
      %s234 = sphi 0, %s234
      %s236 = sphi 0, %s234
      %s237 = sphi 0, %s236
      %s251 = sphi 0, %s237
      %s257 = sphi 0, %s259
      %s260 = sphi 0, %s257
      %s261 = sphi 0, %s260
      %s277 = sphi 0, %s261
      %s283 = sphi 0, %s285
      %s286 = sphi 0, %s283
      %s287 = sphi 0, %s286
      %s303 = sphi 0, %s287
      %s309 = sphi 0, %s311
      %s312 = sphi 0, %s309
      %s313 = sphi 0, %s312
      %s329 = sphi 0, %s313
      %s335 = sphi 0, %s337
      %s338 = sphi 0, %s335
      %s339 = sphi 0, %s338
      %s355 = sphi 0, %s339
      %s361 = sphi 0, %s363
      %s364 = sphi 0, %s361
      %s365 = sphi 0, %s364
      %s381 = sphi 0, %s365
      %s387 = sphi 0, %s389
      %s390 = sphi 0, %s387
      %s391 = sphi 0, %s390
      %s407 = sphi 0, %s391
      %s413 = sphi 0, %s415
      %s416 = sphi 0, %s413
      %s417 = sphi 0, %s416
      %s433 = sphi 0, %s417
      %s439 = sphi 0, %s441
      %s442 = sphi 0, %s439
      %s443 = sphi 0, %s442
      %s459 = sphi 0, %s443
      %s465 = sphi 0, %s467
      %s468 = sphi 0, %s465
      %s469 = sphi 0, %s468
      %s485 = sphi 0, %s469
      %s491 = sphi 0, %s493
      %s494 = sphi 0, %s491
      %s495 = sphi 0, %s494
      %s511 = sphi 0, %s495
      %s517 = sphi 0, %s519
      %s520 = sphi 0, %s517
      %s521 = sphi 0, %s520
      %s537 = sphi 0, %s521
      %s543 = sphi 0, %s545
      %s546 = sphi 0, %s543
      %s547 = sphi 0, %s546
      %s563 = sphi 0, %s547
      %s567 = sphi 0, %s567
      %s569 = sphi 0, %s567
      %s570 = sphi 0, %s569
      %s584 = sphi 0, %s570
      %s588 = sphi 0, %s588
      %s590 = sphi 0, %s588
      %s591 = sphi 0, %s590
      %s605 = sphi 0, %s591
      %s609 = sphi 0, %s609
      %s611 = sphi 0, %s609
      %s612 = sphi 0, %s611
      %s626 = sphi 0, %s612
      %s630 = sphi 0, %s630
      %s632 = sphi 0, %s630
      %s633 = sphi 0, %s632
      %s647 = sphi 0, %s633
      %s651 = sphi 0, %s651
      %s653 = sphi 0, %s651
      %s654 = sphi 0, %s653
      %s668 = sphi 0, %s654
      %s672 = sphi 0, %s672
      %s674 = sphi 0, %s672
      %s675 = sphi 0, %s674
      %s689 = sphi 0, %s675
      %s693 = sphi 0, %s693
      %s695 = sphi 0, %s693
      %s696 = sphi 0, %s695
      %s710 = sphi 0, %s696
      %s714 = sphi 0, %s714
      %s716 = sphi 0, %s714
      %s717 = sphi 0, %s716
      %s731 = sphi 0, %s717
      %s735 = sphi 0, %s735
      %s737 = sphi 0, %s735
      %s738 = sphi 0, %s737
      %s752 = sphi 0, %s738
      %s756 = sphi 0, %s756
      %s758 = sphi 0, %s756
      %s759 = sphi 0, %s758
      %s773 = sphi 0, %s759
      %s777 = sphi 0, %s777
      %s779 = sphi 0, %s777
      %s780 = sphi 0, %s779
      %s794 = sphi 0, %s780
      %s798 = sphi 0, %s798
      %s800 = sphi 0, %s798
      %s801 = sphi 0, %s800
      %s815 = sphi 0, %s801
      %s819 = sphi 0, %s819
      %s821 = sphi 0, %s819
      %s822 = sphi 0, %s821
      %s836 = sphi 0, %s822
      %s840 = sphi 0, %s840
      %s842 = sphi 0, %s840
      %s843 = sphi 0, %s842
      %s857 = sphi 0, %s843
    $region4: #{tpu_custom_call.1} parent=1 // loop_header_branch
      %103 = sbr.rel (%p101) target = $region8
    $region5: #{tpu_custom_call.1} parent=1 // loop_body
      %s105 = ssub.s32 %s100, 1
      %s106 = ssub.s32 %s100, 2
      %s107 = sadd.s32 %s100, 1
      %s109 = sadd.s32 %s108, 1
      %p112 = scmp.eq.s32.totalorder %s100, 2
      %p113 = scmp.ne.s32.totalorder %s108, %s110
      %p114 = scmp.eq.s32.totalorder %s100, 0
      %p115 = por %p113, %p114
      %p116 = scmp.ne.s32.totalorder %s108, %s110
      %p117 = scmp.eq.s32.totalorder %s105, 2
      %p118 = por %p116, %p117
      %p119 = scmp.ne.s32.totalorder %s110, %s111
      %p120 = scmp.eq.s32.totalorder %s105, 0
      %p121 = por %p119, %p120
      %p122 = scmp.ne.s32.totalorder %s110, %s111
      %p123 = scmp.eq.s32.totalorder %s106, 2
      %p124 = por %p122, %p123
      %p126 = scmp.ne.s32.totalorder %s111, %s125
      %p127 = scmp.eq.s32.totalorder %s106, 0
      %p128 = por %p126, %p127
      %s130 = sadd.s32 %s129, 1
      %p133 = scmp.eq.s32.totalorder %s100, 2
      %p134 = scmp.ne.s32.totalorder %s129, %s131
      %p135 = scmp.eq.s32.totalorder %s100, 0
      %p136 = por %p134, %p135
      %p137 = scmp.ne.s32.totalorder %s129, %s131
      %p138 = scmp.eq.s32.totalorder %s105, 2
      %p139 = por %p137, %p138
      %p140 = scmp.ne.s32.totalorder %s131, %s132
      %p141 = scmp.eq.s32.totalorder %s105, 0
      %p142 = por %p140, %p141
      %p143 = scmp.ne.s32.totalorder %s131, %s132
      %p144 = scmp.eq.s32.totalorder %s106, 2
      %p145 = por %p143, %p144
      %p147 = scmp.ne.s32.totalorder %s132, %s146
      %p148 = scmp.eq.s32.totalorder %s106, 0
      %p149 = por %p147, %p148
      %s151 = sadd.s32 %s150, 1
      %p154 = scmp.eq.s32.totalorder %s100, 2
      %p155 = scmp.ne.s32.totalorder %s150, %s152
      %p156 = scmp.eq.s32.totalorder %s100, 0
      %p157 = por %p155, %p156
      %p158 = scmp.ne.s32.totalorder %s150, %s152
      %p159 = scmp.eq.s32.totalorder %s105, 2
      %p160 = por %p158, %p159
      %p161 = scmp.ne.s32.totalorder %s152, %s153
      %p162 = scmp.eq.s32.totalorder %s105, 0
      %p163 = por %p161, %p162
      %p164 = scmp.ne.s32.totalorder %s152, %s153
      %p165 = scmp.eq.s32.totalorder %s106, 2
      %p166 = por %p164, %p165
      %p168 = scmp.ne.s32.totalorder %s153, %s167
      %p169 = scmp.eq.s32.totalorder %s106, 0
      %p170 = por %p168, %p169
      %s172 = sadd.s32 %s171, 1
      %p175 = scmp.eq.s32.totalorder %s100, 2
      %p176 = scmp.ne.s32.totalorder %s171, %s173
      %p177 = scmp.eq.s32.totalorder %s100, 0
      %p178 = por %p176, %p177
      %p179 = scmp.ne.s32.totalorder %s171, %s173
      %p180 = scmp.eq.s32.totalorder %s105, 2
      %p181 = por %p179, %p180
      %p182 = scmp.ne.s32.totalorder %s173, %s174
      %p183 = scmp.eq.s32.totalorder %s105, 0
      %p184 = por %p182, %p183
      %p185 = scmp.ne.s32.totalorder %s173, %s174
      %p186 = scmp.eq.s32.totalorder %s106, 2
      %p187 = por %p185, %p186
      %p189 = scmp.ne.s32.totalorder %s174, %s188
      %p190 = scmp.eq.s32.totalorder %s106, 0
      %p191 = por %p189, %p190
      %s193 = sadd.s32 %s192, 1
      %p196 = scmp.eq.s32.totalorder %s100, 2
      %p197 = scmp.ne.s32.totalorder %s192, %s194
      %p198 = scmp.eq.s32.totalorder %s100, 0
      %p199 = por %p197, %p198
      %p200 = scmp.ne.s32.totalorder %s192, %s194
      %p201 = scmp.eq.s32.totalorder %s105, 2
      %p202 = por %p200, %p201
      %p203 = scmp.ne.s32.totalorder %s194, %s195
      %p204 = scmp.eq.s32.totalorder %s105, 0
      %p205 = por %p203, %p204
      %p206 = scmp.ne.s32.totalorder %s194, %s195
      %p207 = scmp.eq.s32.totalorder %s106, 2
      %p208 = por %p206, %p207
      %p210 = scmp.ne.s32.totalorder %s195, %s209
      %p211 = scmp.eq.s32.totalorder %s106, 0
      %p212 = por %p210, %p211
      %s214 = sadd.s32 %s213, 1
      %p217 = scmp.eq.s32.totalorder %s100, 2
      %p218 = scmp.ne.s32.totalorder %s213, %s215
      %p219 = scmp.eq.s32.totalorder %s100, 0
      %p220 = por %p218, %p219
      %p221 = scmp.ne.s32.totalorder %s213, %s215
      %p222 = scmp.eq.s32.totalorder %s105, 2
      %p223 = por %p221, %p222
      %p224 = scmp.ne.s32.totalorder %s215, %s216
      %p225 = scmp.eq.s32.totalorder %s105, 0
      %p226 = por %p224, %p225
      %p227 = scmp.ne.s32.totalorder %s215, %s216
      %p228 = scmp.eq.s32.totalorder %s106, 2
      %p229 = por %p227, %p228
      %p231 = scmp.ne.s32.totalorder %s216, %s230
      %p232 = scmp.eq.s32.totalorder %s106, 0
      %p233 = por %p231, %p232
      %s235 = sadd.s32 %s234, 1
      %p238 = scmp.eq.s32.totalorder %s100, 2
      %p239 = scmp.ne.s32.totalorder %s234, %s236
      %p240 = scmp.eq.s32.totalorder %s100, 0
      %p241 = por %p239, %p240
      %p242 = scmp.ne.s32.totalorder %s234, %s236
      %p243 = scmp.eq.s32.totalorder %s105, 2
      %p244 = por %p242, %p243
      %p245 = scmp.ne.s32.totalorder %s236, %s237
      %p246 = scmp.eq.s32.totalorder %s105, 0
      %p247 = por %p245, %p246
      %p248 = scmp.ne.s32.totalorder %s236, %s237
      %p249 = scmp.eq.s32.totalorder %s106, 2
      %p250 = por %p248, %p249
      %p252 = scmp.ne.s32.totalorder %s237, %s251
      %p253 = scmp.eq.s32.totalorder %s106, 0
      %p254 = por %p252, %p253
      %s255 = ssub.s32 %s100, %s107
      %p256 = scmp.eq.s32.totalorder %s255, 0
      %s258 = sadd.s32 %s257, 1
      %s259 = scalar_select %p256, %s257, %s258
      %p262 = pneg %p256
      %p263 = scmp.eq.s32.totalorder %s100, 2
      %p264 = por %p262, %p263
      %p265 = scmp.ne.s32.totalorder %s257, %s260
      %p266 = scmp.eq.s32.totalorder %s100, 0
      %p267 = por %p265, %p266
      %p268 = scmp.ne.s32.totalorder %s257, %s260
      %p269 = scmp.eq.s32.totalorder %s105, 2
      %p270 = por %p268, %p269
      %p271 = scmp.ne.s32.totalorder %s260, %s261
      %p272 = scmp.eq.s32.totalorder %s105, 0
      %p273 = por %p271, %p272
      %p274 = scmp.ne.s32.totalorder %s260, %s261
      %p275 = scmp.eq.s32.totalorder %s106, 2
      %p276 = por %p274, %p275
      %p278 = scmp.ne.s32.totalorder %s261, %s277
      %p279 = scmp.eq.s32.totalorder %s106, 0
      %p280 = por %p278, %p279
      %s281 = ssub.s32 %s100, %s107
      %p282 = scmp.eq.s32.totalorder %s281, 0
      %s284 = sadd.s32 %s283, 1
      %s285 = scalar_select %p282, %s283, %s284
      %p288 = pneg %p282
      %p289 = scmp.eq.s32.totalorder %s100, 2
      %p290 = por %p288, %p289
      %p291 = scmp.ne.s32.totalorder %s283, %s286
      %p292 = scmp.eq.s32.totalorder %s100, 0
      %p293 = por %p291, %p292
      %p294 = scmp.ne.s32.totalorder %s283, %s286
      %p295 = scmp.eq.s32.totalorder %s105, 2
      %p296 = por %p294, %p295
      %p297 = scmp.ne.s32.totalorder %s286, %s287
      %p298 = scmp.eq.s32.totalorder %s105, 0
      %p299 = por %p297, %p298
      %p300 = scmp.ne.s32.totalorder %s286, %s287
      %p301 = scmp.eq.s32.totalorder %s106, 2
      %p302 = por %p300, %p301
      %p304 = scmp.ne.s32.totalorder %s287, %s303
      %p305 = scmp.eq.s32.totalorder %s106, 0
      %p306 = por %p304, %p305
      %s307 = ssub.s32 %s100, %s107
      %p308 = scmp.eq.s32.totalorder %s307, 0
      %s310 = sadd.s32 %s309, 1
      %s311 = scalar_select %p308, %s309, %s310
      %p314 = pneg %p308
      %p315 = scmp.eq.s32.totalorder %s100, 2
      %p316 = por %p314, %p315
      %p317 = scmp.ne.s32.totalorder %s309, %s312
      %p318 = scmp.eq.s32.totalorder %s100, 0
      %p319 = por %p317, %p318
      %p320 = scmp.ne.s32.totalorder %s309, %s312
      %p321 = scmp.eq.s32.totalorder %s105, 2
      %p322 = por %p320, %p321
      %p323 = scmp.ne.s32.totalorder %s312, %s313
      %p324 = scmp.eq.s32.totalorder %s105, 0
      %p325 = por %p323, %p324
      %p326 = scmp.ne.s32.totalorder %s312, %s313
      %p327 = scmp.eq.s32.totalorder %s106, 2
      %p328 = por %p326, %p327
      %p330 = scmp.ne.s32.totalorder %s313, %s329
      %p331 = scmp.eq.s32.totalorder %s106, 0
      %p332 = por %p330, %p331
      %s333 = ssub.s32 %s100, %s107
      %p334 = scmp.eq.s32.totalorder %s333, 0
      %s336 = sadd.s32 %s335, 1
      %s337 = scalar_select %p334, %s335, %s336
      %p340 = pneg %p334
      %p341 = scmp.eq.s32.totalorder %s100, 2
      %p342 = por %p340, %p341
      %p343 = scmp.ne.s32.totalorder %s335, %s338
      %p344 = scmp.eq.s32.totalorder %s100, 0
      %p345 = por %p343, %p344
      %p346 = scmp.ne.s32.totalorder %s335, %s338
      %p347 = scmp.eq.s32.totalorder %s105, 2
      %p348 = por %p346, %p347
      %p349 = scmp.ne.s32.totalorder %s338, %s339
      %p350 = scmp.eq.s32.totalorder %s105, 0
      %p351 = por %p349, %p350
      %p352 = scmp.ne.s32.totalorder %s338, %s339
      %p353 = scmp.eq.s32.totalorder %s106, 2
      %p354 = por %p352, %p353
      %p356 = scmp.ne.s32.totalorder %s339, %s355
      %p357 = scmp.eq.s32.totalorder %s106, 0
      %p358 = por %p356, %p357
      %s359 = ssub.s32 %s100, %s107
      %p360 = scmp.eq.s32.totalorder %s359, 0
      %s362 = sadd.s32 %s361, 1
      %s363 = scalar_select %p360, %s361, %s362
      %p366 = pneg %p360
      %p367 = scmp.eq.s32.totalorder %s100, 2
      %p368 = por %p366, %p367
      %p369 = scmp.ne.s32.totalorder %s361, %s364
      %p370 = scmp.eq.s32.totalorder %s100, 0
      %p371 = por %p369, %p370
      %p372 = scmp.ne.s32.totalorder %s361, %s364
      %p373 = scmp.eq.s32.totalorder %s105, 2
      %p374 = por %p372, %p373
      %p375 = scmp.ne.s32.totalorder %s364, %s365
      %p376 = scmp.eq.s32.totalorder %s105, 0
      %p377 = por %p375, %p376
      %p378 = scmp.ne.s32.totalorder %s364, %s365
      %p379 = scmp.eq.s32.totalorder %s106, 2
      %p380 = por %p378, %p379
      %p382 = scmp.ne.s32.totalorder %s365, %s381
      %p383 = scmp.eq.s32.totalorder %s106, 0
      %p384 = por %p382, %p383
      %s385 = ssub.s32 %s100, %s107
      %p386 = scmp.eq.s32.totalorder %s385, 0
      %s388 = sadd.s32 %s387, 1
      %s389 = scalar_select %p386, %s387, %s388
      %p392 = pneg %p386
      %p393 = scmp.eq.s32.totalorder %s100, 2
      %p394 = por %p392, %p393
      %p395 = scmp.ne.s32.totalorder %s387, %s390
      %p396 = scmp.eq.s32.totalorder %s100, 0
      %p397 = por %p395, %p396
      %p398 = scmp.ne.s32.totalorder %s387, %s390
      %p399 = scmp.eq.s32.totalorder %s105, 2
      %p400 = por %p398, %p399
      %p401 = scmp.ne.s32.totalorder %s390, %s391
      %p402 = scmp.eq.s32.totalorder %s105, 0
      %p403 = por %p401, %p402
      %p404 = scmp.ne.s32.totalorder %s390, %s391
      %p405 = scmp.eq.s32.totalorder %s106, 2
      %p406 = por %p404, %p405
      %p408 = scmp.ne.s32.totalorder %s391, %s407
      %p409 = scmp.eq.s32.totalorder %s106, 0
      %p410 = por %p408, %p409
      %s411 = ssub.s32 %s100, %s107
      %p412 = scmp.eq.s32.totalorder %s411, 0
      %s414 = sadd.s32 %s413, 1
      %s415 = scalar_select %p412, %s413, %s414
      %p418 = pneg %p412
      %p419 = scmp.eq.s32.totalorder %s100, 2
      %p420 = por %p418, %p419
      %p421 = scmp.ne.s32.totalorder %s413, %s416
      %p422 = scmp.eq.s32.totalorder %s100, 0
      %p423 = por %p421, %p422
      %p424 = scmp.ne.s32.totalorder %s413, %s416
      %p425 = scmp.eq.s32.totalorder %s105, 2
      %p426 = por %p424, %p425
      %p427 = scmp.ne.s32.totalorder %s416, %s417
      %p428 = scmp.eq.s32.totalorder %s105, 0
      %p429 = por %p427, %p428
      %p430 = scmp.ne.s32.totalorder %s416, %s417
      %p431 = scmp.eq.s32.totalorder %s106, 2
      %p432 = por %p430, %p431
      %p434 = scmp.ne.s32.totalorder %s417, %s433
      %p435 = scmp.eq.s32.totalorder %s106, 0
      %p436 = por %p434, %p435
      %s437 = ssub.s32 %s100, %s107
      %p438 = scmp.eq.s32.totalorder %s437, 0
      %s440 = sadd.s32 %s439, 1
      %s441 = scalar_select %p438, %s439, %s440
      %p444 = pneg %p438
      %p445 = scmp.eq.s32.totalorder %s100, 2
      %p446 = por %p444, %p445
      %p447 = scmp.ne.s32.totalorder %s439, %s442
      %p448 = scmp.eq.s32.totalorder %s100, 0
      %p449 = por %p447, %p448
      %p450 = scmp.ne.s32.totalorder %s439, %s442
      %p451 = scmp.eq.s32.totalorder %s105, 2
      %p452 = por %p450, %p451
      %p453 = scmp.ne.s32.totalorder %s442, %s443
      %p454 = scmp.eq.s32.totalorder %s105, 0
      %p455 = por %p453, %p454
      %p456 = scmp.ne.s32.totalorder %s442, %s443
      %p457 = scmp.eq.s32.totalorder %s106, 2
      %p458 = por %p456, %p457
      %p460 = scmp.ne.s32.totalorder %s443, %s459
      %p461 = scmp.eq.s32.totalorder %s106, 0
      %p462 = por %p460, %p461
      %s463 = ssub.s32 %s100, %s107
      %p464 = scmp.eq.s32.totalorder %s463, 0
      %s466 = sadd.s32 %s465, 1
      %s467 = scalar_select %p464, %s465, %s466
      %p470 = pneg %p464
      %p471 = scmp.eq.s32.totalorder %s100, 2
      %p472 = por %p470, %p471
      %p473 = scmp.ne.s32.totalorder %s465, %s468
      %p474 = scmp.eq.s32.totalorder %s100, 0
      %p475 = por %p473, %p474
      %p476 = scmp.ne.s32.totalorder %s465, %s468
      %p477 = scmp.eq.s32.totalorder %s105, 2
      %p478 = por %p476, %p477
      %p479 = scmp.ne.s32.totalorder %s468, %s469
      %p480 = scmp.eq.s32.totalorder %s105, 0
      %p481 = por %p479, %p480
      %p482 = scmp.ne.s32.totalorder %s468, %s469
      %p483 = scmp.eq.s32.totalorder %s106, 2
      %p484 = por %p482, %p483
      %p486 = scmp.ne.s32.totalorder %s469, %s485
      %p487 = scmp.eq.s32.totalorder %s106, 0
      %p488 = por %p486, %p487
      %s489 = ssub.s32 %s100, %s107
      %p490 = scmp.eq.s32.totalorder %s489, 0
      %s492 = sadd.s32 %s491, 1
      %s493 = scalar_select %p490, %s491, %s492
      %p496 = pneg %p490
      %p497 = scmp.eq.s32.totalorder %s100, 2
      %p498 = por %p496, %p497
      %p499 = scmp.ne.s32.totalorder %s491, %s494
      %p500 = scmp.eq.s32.totalorder %s100, 0
      %p501 = por %p499, %p500
      %p502 = scmp.ne.s32.totalorder %s491, %s494
      %p503 = scmp.eq.s32.totalorder %s105, 2
      %p504 = por %p502, %p503
      %p505 = scmp.ne.s32.totalorder %s494, %s495
      %p506 = scmp.eq.s32.totalorder %s105, 0
      %p507 = por %p505, %p506
      %p508 = scmp.ne.s32.totalorder %s494, %s495
      %p509 = scmp.eq.s32.totalorder %s106, 2
      %p510 = por %p508, %p509
      %p512 = scmp.ne.s32.totalorder %s495, %s511
      %p513 = scmp.eq.s32.totalorder %s106, 0
      %p514 = por %p512, %p513
      %s515 = ssub.s32 %s100, %s107
      %p516 = scmp.eq.s32.totalorder %s515, 0
      %s518 = sadd.s32 %s517, 1
      %s519 = scalar_select %p516, %s517, %s518
      %p522 = pneg %p516
      %p523 = scmp.eq.s32.totalorder %s100, 2
      %p524 = por %p522, %p523
      %p525 = scmp.ne.s32.totalorder %s517, %s520
      %p526 = scmp.eq.s32.totalorder %s100, 0
      %p527 = por %p525, %p526
      %p528 = scmp.ne.s32.totalorder %s517, %s520
      %p529 = scmp.eq.s32.totalorder %s105, 2
      %p530 = por %p528, %p529
      %p531 = scmp.ne.s32.totalorder %s520, %s521
      %p532 = scmp.eq.s32.totalorder %s105, 0
      %p533 = por %p531, %p532
      %p534 = scmp.ne.s32.totalorder %s520, %s521
      %p535 = scmp.eq.s32.totalorder %s106, 2
      %p536 = por %p534, %p535
      %p538 = scmp.ne.s32.totalorder %s521, %s537
      %p539 = scmp.eq.s32.totalorder %s106, 0
      %p540 = por %p538, %p539
      %s541 = ssub.s32 %s100, %s107
      %p542 = scmp.eq.s32.totalorder %s541, 0
      %s544 = sadd.s32 %s543, 1
      %s545 = scalar_select %p542, %s543, %s544
      %p548 = pneg %p542
      %p549 = scmp.eq.s32.totalorder %s100, 2
      %p550 = por %p548, %p549
      %p551 = scmp.ne.s32.totalorder %s543, %s546
      %p552 = scmp.eq.s32.totalorder %s100, 0
      %p553 = por %p551, %p552
      %p554 = scmp.ne.s32.totalorder %s543, %s546
      %p555 = scmp.eq.s32.totalorder %s105, 2
      %p556 = por %p554, %p555
      %p557 = scmp.ne.s32.totalorder %s546, %s547
      %p558 = scmp.eq.s32.totalorder %s105, 0
      %p559 = por %p557, %p558
      %p560 = scmp.ne.s32.totalorder %s546, %s547
      %p561 = scmp.eq.s32.totalorder %s106, 2
      %p562 = por %p560, %p561
      %p564 = scmp.ne.s32.totalorder %s547, %s563
      %p565 = scmp.eq.s32.totalorder %s106, 0
      %p566 = por %p564, %p565
      %s568 = sadd.s32 %s567, 1
      %p571 = scmp.eq.s32.totalorder %s100, 2
      %p572 = scmp.ne.s32.totalorder %s567, %s569
      %p573 = scmp.eq.s32.totalorder %s100, 0
      %p574 = por %p572, %p573
      %p575 = scmp.ne.s32.totalorder %s567, %s569
      %p576 = scmp.eq.s32.totalorder %s105, 2
      %p577 = por %p575, %p576
      %p578 = scmp.ne.s32.totalorder %s569, %s570
      %p579 = scmp.eq.s32.totalorder %s105, 0
      %p580 = por %p578, %p579
      %p581 = scmp.ne.s32.totalorder %s569, %s570
      %p582 = scmp.eq.s32.totalorder %s106, 2
      %p583 = por %p581, %p582
      %p585 = scmp.ne.s32.totalorder %s570, %s584
      %p586 = scmp.eq.s32.totalorder %s106, 0
      %p587 = por %p585, %p586
      %s589 = sadd.s32 %s588, 1
      %p592 = scmp.eq.s32.totalorder %s100, 2
      %p593 = scmp.ne.s32.totalorder %s588, %s590
      %p594 = scmp.eq.s32.totalorder %s100, 0
      %p595 = por %p593, %p594
      %p596 = scmp.ne.s32.totalorder %s588, %s590
      %p597 = scmp.eq.s32.totalorder %s105, 2
      %p598 = por %p596, %p597
      %p599 = scmp.ne.s32.totalorder %s590, %s591
      %p600 = scmp.eq.s32.totalorder %s105, 0
      %p601 = por %p599, %p600
      %p602 = scmp.ne.s32.totalorder %s590, %s591
      %p603 = scmp.eq.s32.totalorder %s106, 2
      %p604 = por %p602, %p603
      %p606 = scmp.ne.s32.totalorder %s591, %s605
      %p607 = scmp.eq.s32.totalorder %s106, 0
      %p608 = por %p606, %p607
      %s610 = sadd.s32 %s609, 1
      %p613 = scmp.eq.s32.totalorder %s100, 2
      %p614 = scmp.ne.s32.totalorder %s609, %s611
      %p615 = scmp.eq.s32.totalorder %s100, 0
      %p616 = por %p614, %p615
      %p617 = scmp.ne.s32.totalorder %s609, %s611
      %p618 = scmp.eq.s32.totalorder %s105, 2
      %p619 = por %p617, %p618
      %p620 = scmp.ne.s32.totalorder %s611, %s612
      %p621 = scmp.eq.s32.totalorder %s105, 0
      %p622 = por %p620, %p621
      %p623 = scmp.ne.s32.totalorder %s611, %s612
      %p624 = scmp.eq.s32.totalorder %s106, 2
      %p625 = por %p623, %p624
      %p627 = scmp.ne.s32.totalorder %s612, %s626
      %p628 = scmp.eq.s32.totalorder %s106, 0
      %p629 = por %p627, %p628
      %s631 = sadd.s32 %s630, 1
      %p634 = scmp.eq.s32.totalorder %s100, 2
      %p635 = scmp.ne.s32.totalorder %s630, %s632
      %p636 = scmp.eq.s32.totalorder %s100, 0
      %p637 = por %p635, %p636
      %p638 = scmp.ne.s32.totalorder %s630, %s632
      %p639 = scmp.eq.s32.totalorder %s105, 2
      %p640 = por %p638, %p639
      %p641 = scmp.ne.s32.totalorder %s632, %s633
      %p642 = scmp.eq.s32.totalorder %s105, 0
      %p643 = por %p641, %p642
      %p644 = scmp.ne.s32.totalorder %s632, %s633
      %p645 = scmp.eq.s32.totalorder %s106, 2
      %p646 = por %p644, %p645
      %p648 = scmp.ne.s32.totalorder %s633, %s647
      %p649 = scmp.eq.s32.totalorder %s106, 0
      %p650 = por %p648, %p649
      %s652 = sadd.s32 %s651, 1
      %p655 = scmp.eq.s32.totalorder %s100, 2
      %p656 = scmp.ne.s32.totalorder %s651, %s653
      %p657 = scmp.eq.s32.totalorder %s100, 0
      %p658 = por %p656, %p657
      %p659 = scmp.ne.s32.totalorder %s651, %s653
      %p660 = scmp.eq.s32.totalorder %s105, 2
      %p661 = por %p659, %p660
      %p662 = scmp.ne.s32.totalorder %s653, %s654
      %p663 = scmp.eq.s32.totalorder %s105, 0
      %p664 = por %p662, %p663
      %p665 = scmp.ne.s32.totalorder %s653, %s654
      %p666 = scmp.eq.s32.totalorder %s106, 2
      %p667 = por %p665, %p666
      %p669 = scmp.ne.s32.totalorder %s654, %s668
      %p670 = scmp.eq.s32.totalorder %s106, 0
      %p671 = por %p669, %p670
      %s673 = sadd.s32 %s672, 1
      %p676 = scmp.eq.s32.totalorder %s100, 2
      %p677 = scmp.ne.s32.totalorder %s672, %s674
      %p678 = scmp.eq.s32.totalorder %s100, 0
      %p679 = por %p677, %p678
      %p680 = scmp.ne.s32.totalorder %s672, %s674
      %p681 = scmp.eq.s32.totalorder %s105, 2
      %p682 = por %p680, %p681
      %p683 = scmp.ne.s32.totalorder %s674, %s675
      %p684 = scmp.eq.s32.totalorder %s105, 0
      %p685 = por %p683, %p684
      %p686 = scmp.ne.s32.totalorder %s674, %s675
      %p687 = scmp.eq.s32.totalorder %s106, 2
      %p688 = por %p686, %p687
      %p690 = scmp.ne.s32.totalorder %s675, %s689
      %p691 = scmp.eq.s32.totalorder %s106, 0
      %p692 = por %p690, %p691
      %s694 = sadd.s32 %s693, 1
      %p697 = scmp.eq.s32.totalorder %s100, 2
      %p698 = scmp.ne.s32.totalorder %s693, %s695
      %p699 = scmp.eq.s32.totalorder %s100, 0
      %p700 = por %p698, %p699
      %p701 = scmp.ne.s32.totalorder %s693, %s695
      %p702 = scmp.eq.s32.totalorder %s105, 2
      %p703 = por %p701, %p702
      %p704 = scmp.ne.s32.totalorder %s695, %s696
      %p705 = scmp.eq.s32.totalorder %s105, 0
      %p706 = por %p704, %p705
      %p707 = scmp.ne.s32.totalorder %s695, %s696
      %p708 = scmp.eq.s32.totalorder %s106, 2
      %p709 = por %p707, %p708
      %p711 = scmp.ne.s32.totalorder %s696, %s710
      %p712 = scmp.eq.s32.totalorder %s106, 0
      %p713 = por %p711, %p712
      %s715 = sadd.s32 %s714, 1
      %p718 = scmp.eq.s32.totalorder %s100, 2
      %p719 = scmp.ne.s32.totalorder %s714, %s716
      %p720 = scmp.eq.s32.totalorder %s100, 0
      %p721 = por %p719, %p720
      %p722 = scmp.ne.s32.totalorder %s714, %s716
      %p723 = scmp.eq.s32.totalorder %s105, 2
      %p724 = por %p722, %p723
      %p725 = scmp.ne.s32.totalorder %s716, %s717
      %p726 = scmp.eq.s32.totalorder %s105, 0
      %p727 = por %p725, %p726
      %p728 = scmp.ne.s32.totalorder %s716, %s717
      %p729 = scmp.eq.s32.totalorder %s106, 2
      %p730 = por %p728, %p729
      %p732 = scmp.ne.s32.totalorder %s717, %s731
      %p733 = scmp.eq.s32.totalorder %s106, 0
      %p734 = por %p732, %p733
      %s736 = sadd.s32 %s735, 1
      %p739 = scmp.eq.s32.totalorder %s100, 2
      %p740 = scmp.ne.s32.totalorder %s735, %s737
      %p741 = scmp.eq.s32.totalorder %s100, 0
      %p742 = por %p740, %p741
      %p743 = scmp.ne.s32.totalorder %s735, %s737
      %p744 = scmp.eq.s32.totalorder %s105, 2
      %p745 = por %p743, %p744
      %p746 = scmp.ne.s32.totalorder %s737, %s738
      %p747 = scmp.eq.s32.totalorder %s105, 0
      %p748 = por %p746, %p747
      %p749 = scmp.ne.s32.totalorder %s737, %s738
      %p750 = scmp.eq.s32.totalorder %s106, 2
      %p751 = por %p749, %p750
      %p753 = scmp.ne.s32.totalorder %s738, %s752
      %p754 = scmp.eq.s32.totalorder %s106, 0
      %p755 = por %p753, %p754
      %s757 = sadd.s32 %s756, 1
      %p760 = scmp.eq.s32.totalorder %s100, 2
      %p761 = scmp.ne.s32.totalorder %s756, %s758
      %p762 = scmp.eq.s32.totalorder %s100, 0
      %p763 = por %p761, %p762
      %p764 = scmp.ne.s32.totalorder %s756, %s758
      %p765 = scmp.eq.s32.totalorder %s105, 2
      %p766 = por %p764, %p765
      %p767 = scmp.ne.s32.totalorder %s758, %s759
      %p768 = scmp.eq.s32.totalorder %s105, 0
      %p769 = por %p767, %p768
      %p770 = scmp.ne.s32.totalorder %s758, %s759
      %p771 = scmp.eq.s32.totalorder %s106, 2
      %p772 = por %p770, %p771
      %p774 = scmp.ne.s32.totalorder %s759, %s773
      %p775 = scmp.eq.s32.totalorder %s106, 0
      %p776 = por %p774, %p775
      %s778 = sadd.s32 %s777, 1
      %p781 = scmp.eq.s32.totalorder %s100, 2
      %p782 = scmp.ne.s32.totalorder %s777, %s779
      %p783 = scmp.eq.s32.totalorder %s100, 0
      %p784 = por %p782, %p783
      %p785 = scmp.ne.s32.totalorder %s777, %s779
      %p786 = scmp.eq.s32.totalorder %s105, 2
      %p787 = por %p785, %p786
      %p788 = scmp.ne.s32.totalorder %s779, %s780
      %p789 = scmp.eq.s32.totalorder %s105, 0
      %p790 = por %p788, %p789
      %p791 = scmp.ne.s32.totalorder %s779, %s780
      %p792 = scmp.eq.s32.totalorder %s106, 2
      %p793 = por %p791, %p792
      %p795 = scmp.ne.s32.totalorder %s780, %s794
      %p796 = scmp.eq.s32.totalorder %s106, 0
      %p797 = por %p795, %p796
      %s799 = sadd.s32 %s798, 1
      %p802 = scmp.eq.s32.totalorder %s100, 2
      %p803 = scmp.ne.s32.totalorder %s798, %s800
      %p804 = scmp.eq.s32.totalorder %s100, 0
      %p805 = por %p803, %p804
      %p806 = scmp.ne.s32.totalorder %s798, %s800
      %p807 = scmp.eq.s32.totalorder %s105, 2
      %p808 = por %p806, %p807
      %p809 = scmp.ne.s32.totalorder %s800, %s801
      %p810 = scmp.eq.s32.totalorder %s105, 0
      %p811 = por %p809, %p810
      %p812 = scmp.ne.s32.totalorder %s800, %s801
      %p813 = scmp.eq.s32.totalorder %s106, 2
      %p814 = por %p812, %p813
      %p816 = scmp.ne.s32.totalorder %s801, %s815
      %p817 = scmp.eq.s32.totalorder %s106, 0
      %p818 = por %p816, %p817
      %s820 = sadd.s32 %s819, 1
      %p823 = scmp.eq.s32.totalorder %s100, 2
      %p824 = scmp.ne.s32.totalorder %s819, %s821
      %p825 = scmp.eq.s32.totalorder %s100, 0
      %p826 = por %p824, %p825
      %p827 = scmp.ne.s32.totalorder %s819, %s821
      %p828 = scmp.eq.s32.totalorder %s105, 2
      %p829 = por %p827, %p828
      %p830 = scmp.ne.s32.totalorder %s821, %s822
      %p831 = scmp.eq.s32.totalorder %s105, 0
      %p832 = por %p830, %p831
      %p833 = scmp.ne.s32.totalorder %s821, %s822
      %p834 = scmp.eq.s32.totalorder %s106, 2
      %p835 = por %p833, %p834
      %p837 = scmp.ne.s32.totalorder %s822, %s836
      %p838 = scmp.eq.s32.totalorder %s106, 0
      %p839 = por %p837, %p838
      %s841 = sadd.s32 %s840, 1
      %p844 = scmp.eq.s32.totalorder %s100, 2
      %p845 = scmp.ne.s32.totalorder %s840, %s842
      %p846 = scmp.eq.s32.totalorder %s100, 0
      %p847 = por %p845, %p846
      %p848 = scmp.ne.s32.totalorder %s840, %s842
      %p849 = scmp.eq.s32.totalorder %s105, 2
      %p850 = por %p848, %p849
      %p851 = scmp.ne.s32.totalorder %s842, %s843
      %p852 = scmp.eq.s32.totalorder %s105, 0
      %p853 = por %p851, %p852
      %p854 = scmp.ne.s32.totalorder %s842, %s843
      %p855 = scmp.eq.s32.totalorder %s106, 2
      %p856 = por %p854, %p855
      %p858 = scmp.ne.s32.totalorder %s843, %s857
      %p859 = scmp.eq.s32.totalorder %s106, 0
      %p860 = por %p858, %p859
      %p861 = scmp.le.s32.totalorder 1, %s100
      %p862 = scmp.lt.s32.totalorder %s100, 4
      %p863 = pnand %p861, %p862
      %p864 = pneg %p863
      // Predicated region
      $region9: #{tpu_custom_call.1} parent=5 // pred_check
        _
      $region10: #{tpu_custom_call.1} parent=5 // pred_check_branch
        %866 = sbr.rel (%p863) target = $region12
      $region11: #{tpu_custom_call.1} parent=5 // pred_region
        %s867 = ssub.s32 %s100, 1
        // Predicated region
        $region13: #{tpu_custom_call.1} parent=11 // pred_check
          %p868 = pneg %p121
        $region14: #{tpu_custom_call.1} parent=11 // pred_check_branch
          %870 = sbr.rel (%p868) target = $region16
        $region15: #{tpu_custom_call.1} parent=11 // pred_region
          %872 = vsyncadd [#allocation4], 0
          %s873 = sshll.u32 %s1, 4
          %s874 = int_to_ptr.hbm [resolvable:$true] %s873
          %s875 = sshll.u32 [#allocation3], 4
          %s876 = int_to_ptr.vmem [resolvable:$true] %s875
          %881 = dma.hbm_to_vmem [thread:$0]  %s874, 768, %s876, [#allocation4], 384, 384, 24
        $region16: #{tpu_custom_call.1} parent=11 // pred_fallthru
          _
        // Predicated region
        $region17: #{tpu_custom_call.1} parent=11 // pred_check
          %p882 = pneg %p142
        $region18: #{tpu_custom_call.1} parent=11 // pred_check_branch
          %884 = sbr.rel (%p882) target = $region20
        $region19: #{tpu_custom_call.1} parent=11 // pred_region
          %886 = vsyncadd [#allocation7], 0
          %s887 = sshll.u32 %s3, 4
          %s888 = int_to_ptr.hbm [resolvable:$true] %s887
          %s889 = sshll.u32 [#allocation6], 4
          %s890 = int_to_ptr.vmem [resolvable:$true] %s889
          %895 = dma.hbm_to_vmem [thread:$0]  %s888, 6144, %s890, [#allocation7], 64, 64, 4
        $region20: #{tpu_custom_call.1} parent=11 // pred_fallthru
          _
        // Predicated region
        $region21: #{tpu_custom_call.1} parent=11 // pred_check
          %p896 = pneg %p163
        $region22: #{tpu_custom_call.1} parent=11 // pred_check_branch
          %898 = sbr.rel (%p896) target = $region24
        $region23: #{tpu_custom_call.1} parent=11 // pred_region
          %900 = vsyncadd [#allocation7], 0
          %s901 = sshll.u32 %s5, 4
          %s902 = int_to_ptr.hbm [resolvable:$true] %s901
          %s903 = sshll.u32 [#allocation8], 4
          %s904 = int_to_ptr.vmem [resolvable:$true] %s903
          %909 = dma.hbm_to_vmem [thread:$0]  %s902, 256, %s904, [#allocation7], 128, 128, 8
        $region24: #{tpu_custom_call.1} parent=11 // pred_fallthru
          _
        // Predicated region
        $region25: #{tpu_custom_call.1} parent=11 // pred_check
          %p910 = pneg %p184
        $region26: #{tpu_custom_call.1} parent=11 // pred_check_branch
          %912 = sbr.rel (%p910) target = $region28
        $region27: #{tpu_custom_call.1} parent=11 // pred_region
          %914 = vsyncadd [#allocation10], 0
          %s916 = sshll.u32 %s7, 4
          %s917 = int_to_ptr.hbm [resolvable:$true] %s916
          %s918 = sshll.u32 [#allocation9], 4
          %s919 = int_to_ptr.vmem [resolvable:$true] %s918
          %921 = dma.hbm_to_vmem [thread:$0]  %s917, 16, %s919, [#allocation10]
        $region28: #{tpu_custom_call.1} parent=11 // pred_fallthru
          _
        // Predicated region
        $region29: #{tpu_custom_call.1} parent=11 // pred_check
          %p922 = pneg %p205
        $region30: #{tpu_custom_call.1} parent=11 // pred_check_branch
          %924 = sbr.rel (%p922) target = $region32
        $region31: #{tpu_custom_call.1} parent=11 // pred_region
          %926 = vsyncadd [#allocation10], 0
          %s928 = sshll.u32 %s9, 4
          %s929 = int_to_ptr.hbm [resolvable:$true] %s928
          %s930 = sshll.u32 [#allocation11], 4
          %s931 = int_to_ptr.vmem [resolvable:$true] %s930
          %933 = dma.hbm_to_vmem [thread:$0]  %s929, 16, %s931, [#allocation10]
        $region32: #{tpu_custom_call.1} parent=11 // pred_fallthru
          _
        // Predicated region
        $region33: #{tpu_custom_call.1} parent=11 // pred_check
          %p934 = pneg %p226
        $region34: #{tpu_custom_call.1} parent=11 // pred_check_branch
          %936 = sbr.rel (%p934) target = $region36
        $region35: #{tpu_custom_call.1} parent=11 // pred_region
          %938 = vsyncadd [#allocation13], 0
          %s939 = sshll.u32 %s11, 4
          %s940 = int_to_ptr.hbm [resolvable:$true] %s939
          %s941 = sshll.u32 [#allocation12], 4
          %s942 = int_to_ptr.vmem [resolvable:$true] %s941
          %947 = dma.hbm_to_vmem [thread:$0]  %s940, 256, %s942, [#allocation13], 128, 128, 8
        $region36: #{tpu_custom_call.1} parent=11 // pred_fallthru
          _
        // Predicated region
        $region37: #{tpu_custom_call.1} parent=11 // pred_check
          %p948 = pneg %p247
        $region38: #{tpu_custom_call.1} parent=11 // pred_check_branch
          %950 = sbr.rel (%p948) target = $region40
        $region39: #{tpu_custom_call.1} parent=11 // pred_region
          %952 = vsyncadd [#allocation13], 0
          %s954 = sshll.u32 %s13, 4
          %s955 = int_to_ptr.hbm [resolvable:$true] %s954
          %s956 = sshll.u32 [#allocation14], 4
          %s957 = int_to_ptr.vmem [resolvable:$true] %s956
          %959 = dma.hbm_to_vmem [thread:$0]  %s955, 32, %s957, [#allocation13]
        $region40: #{tpu_custom_call.1} parent=11 // pred_fallthru
          _
        // Predicated region
        $region41: #{tpu_custom_call.1} parent=11 // pred_check
          %p960 = pneg %p580
        $region42: #{tpu_custom_call.1} parent=11 // pred_check_branch
          %962 = sbr.rel (%p960) target = $region44
        $region43: #{tpu_custom_call.1} parent=11 // pred_region
          %964 = vsyncadd [#allocation31], 0
          %s966 = sshll.u32 %s39, 4
          %s967 = int_to_ptr.hbm [resolvable:$true] %s966
          %s968 = sshll.u32 [#allocation32], 4
          %s969 = int_to_ptr.vmem [resolvable:$true] %s968
          %971 = dma.hbm_to_vmem [thread:$0]  %s967, 16, %s969, [#allocation31]
        $region44: #{tpu_custom_call.1} parent=11 // pred_fallthru
          _
        // Predicated region
        $region45: #{tpu_custom_call.1} parent=11 // pred_check
          %p972 = pneg %p601
        $region46: #{tpu_custom_call.1} parent=11 // pred_check_branch
          %974 = sbr.rel (%p972) target = $region48
        $region47: #{tpu_custom_call.1} parent=11 // pred_region
          %976 = vsyncadd [#allocation34], 0
          %s978 = sshll.u32 %s41, 4
          %s979 = int_to_ptr.hbm [resolvable:$true] %s978
          %s980 = sshll.u32 [#allocation33], 4
          %s981 = int_to_ptr.vmem [resolvable:$true] %s980
          %983 = dma.hbm_to_vmem [thread:$0]  %s979, 16, %s981, [#allocation34]
        $region48: #{tpu_custom_call.1} parent=11 // pred_fallthru
          _
        // Predicated region
        $region49: #{tpu_custom_call.1} parent=11 // pred_check
          %p984 = pneg %p622
        $region50: #{tpu_custom_call.1} parent=11 // pred_check_branch
          %986 = sbr.rel (%p984) target = $region52
        $region51: #{tpu_custom_call.1} parent=11 // pred_region
          %988 = vsyncadd [#allocation34], 0
          %s989 = sshll.u32 %s43, 4
          %s990 = int_to_ptr.hbm [resolvable:$true] %s989
          %s991 = sshll.u32 [#allocation35], 4
          %s992 = int_to_ptr.vmem [resolvable:$true] %s991
          %997 = dma.hbm_to_vmem [thread:$0]  %s990, 1024, %s992, [#allocation34], 64, 64, 4
        $region52: #{tpu_custom_call.1} parent=11 // pred_fallthru
          _
        // Predicated region
        $region53: #{tpu_custom_call.1} parent=11 // pred_check
          %p998 = pneg %p643
        $region54: #{tpu_custom_call.1} parent=11 // pred_check_branch
          %1000 = sbr.rel (%p998) target = $region56
        $region55: #{tpu_custom_call.1} parent=11 // pred_region
          _
        $region56: #{tpu_custom_call.1} parent=11 // pred_fallthru
          _
        // Predicated region
        $region57: #{tpu_custom_call.1} parent=11 // pred_check
          %p1001 = pneg %p664
        $region58: #{tpu_custom_call.1} parent=11 // pred_check_branch
          %1003 = sbr.rel (%p1001) target = $region60
        $region59: #{tpu_custom_call.1} parent=11 // pred_region
          _
        $region60: #{tpu_custom_call.1} parent=11 // pred_fallthru
          _
        // Predicated region
        $region61: #{tpu_custom_call.1} parent=11 // pred_check
          %p1004 = pneg %p685
        $region62: #{tpu_custom_call.1} parent=11 // pred_check_branch
          %1006 = sbr.rel (%p1004) target = $region64
        $region63: #{tpu_custom_call.1} parent=11 // pred_region
          %1008 = vsyncadd [#allocation37], 0
          %s1009 = sshll.u32 %s49, 4
          %s1010 = int_to_ptr.hbm [resolvable:$true] %s1009
          %s1011 = sshll.u32 [#allocation36], 4
          %s1012 = int_to_ptr.vmem [resolvable:$true] %s1011
          %1017 = dma.hbm_to_vmem [thread:$0]  %s1010, 1024, %s1012, [#allocation37], 64, 64, 4
        $region64: #{tpu_custom_call.1} parent=11 // pred_fallthru
          _
        // Predicated region
        $region65: #{tpu_custom_call.1} parent=11 // pred_check
          %p1018 = pneg %p706
        $region66: #{tpu_custom_call.1} parent=11 // pred_check_branch
          %1020 = sbr.rel (%p1018) target = $region68
        $region67: #{tpu_custom_call.1} parent=11 // pred_region
          %1022 = vsyncadd [#allocation37], 0
          %s1023 = sshll.u32 %s51, 4
          %s1024 = int_to_ptr.hbm [resolvable:$true] %s1023
          %s1025 = sshll.u32 [#allocation38], 4
          %s1026 = int_to_ptr.vmem [resolvable:$true] %s1025
          %1031 = dma.hbm_to_vmem [thread:$0]  %s1024, 1024, %s1026, [#allocation37], 64, 64, 4
        $region68: #{tpu_custom_call.1} parent=11 // pred_fallthru
          _
      $region12: #{tpu_custom_call.1} parent=5 // pred_fallthru
        _
      %p1032 = scmp.lt.s32.totalorder %s100, 3
      // Predicated region
      $region69: #{tpu_custom_call.1} parent=5 // pred_check
        %p1033 = pneg %p1032
      $region70: #{tpu_custom_call.1} parent=5 // pred_check_branch
        %1035 = sbr.rel (%p1033) target = $region72
      $region71: #{tpu_custom_call.1} parent=5 // pred_region
        // Predicated region
        $region73: #{tpu_custom_call.1} parent=71 // pred_check
          %p1036 = pneg %p267
        $region74: #{tpu_custom_call.1} parent=71 // pred_check_branch
          %1038 = sbr.rel (%p1036) target = $region76
        $region75: #{tpu_custom_call.1} parent=71 // pred_region
          %s1039 = sand.u32 %s100, 1
          %s1040 = scalar_lea.sflag [#allocation16], %s1039
          %s1041 = sand.u32 %s257, 1
          %s1042 = scalar_lea.vmem [#allocation15], %s1041
          %1044 = vsyncadd %s1040, 0
          %s1045 = scalar_lea.hbm %s15, %s100
          %s1047 = sshll.u32 %s1045, 4
          %s1048 = int_to_ptr.hbm [resolvable:$true] %s1047
          %s1049 = sshll.u32 %s1042, 4
          %s1050 = int_to_ptr.vmem [resolvable:$true] %s1049
          %1052 = dma.hbm_to_vmem [thread:$0]  %s1048, 16, %s1050, %s1040
        $region76: #{tpu_custom_call.1} parent=71 // pred_fallthru
          _
        // Predicated region
        $region77: #{tpu_custom_call.1} parent=71 // pred_check
          %p1053 = pneg %p293
        $region78: #{tpu_custom_call.1} parent=71 // pred_check_branch
          %1055 = sbr.rel (%p1053) target = $region80
        $region79: #{tpu_custom_call.1} parent=71 // pred_region
          %s1056 = sand.u32 %s100, 1
          %s1057 = scalar_lea.sflag [#allocation16], %s1056
          %s1058 = sand.u32 %s283, 1
          %s1059 = scalar_lea.vmem [#allocation17], %s1058
          %1061 = vsyncadd %s1057, 0
          %s1062 = scalar_lea.hbm %s17, %s100
          %s1064 = sshll.u32 %s1062, 4
          %s1065 = int_to_ptr.hbm [resolvable:$true] %s1064
          %s1066 = sshll.u32 %s1059, 4
          %s1067 = int_to_ptr.vmem [resolvable:$true] %s1066
          %1069 = dma.hbm_to_vmem [thread:$0]  %s1065, 16, %s1067, %s1057
        $region80: #{tpu_custom_call.1} parent=71 // pred_fallthru
          _
        // Predicated region
        $region81: #{tpu_custom_call.1} parent=71 // pred_check
          %p1070 = pneg %p319
        $region82: #{tpu_custom_call.1} parent=71 // pred_check_branch
          %1072 = sbr.rel (%p1070) target = $region84
        $region83: #{tpu_custom_call.1} parent=71 // pred_region
          %s1073 = sand.u32 %s100, 1
          %s1074 = scalar_lea.sflag [#allocation19], %s1073
          %s1075 = sand.u32 %s309, 1
          %s1076 = smul.addr %s1075, 192
          %s1077 = scalar_lea.vmem [#allocation18], %s1076
          %1079 = vsyncadd %s1074, 0
          %s1080 = smul.addr %s100, 48
          %s1081 = smul.addr %s1080, 4
          %s1082 = scalar_lea.hbm %s19, %s1081
          %s1083 = sshll.u32 %s1082, 4
          %s1084 = int_to_ptr.hbm [resolvable:$true] %s1083
          %s1085 = sshll.u32 %s1077, 4
          %s1086 = int_to_ptr.vmem [resolvable:$true] %s1085
          %1091 = dma.hbm_to_vmem [thread:$0]  %s1084, 3072, %s1086, %s1074, 192, 192, 12
        $region84: #{tpu_custom_call.1} parent=71 // pred_fallthru
          _
        // Predicated region
        $region85: #{tpu_custom_call.1} parent=71 // pred_check
          %p1092 = pneg %p345
        $region86: #{tpu_custom_call.1} parent=71 // pred_check_branch
          %1094 = sbr.rel (%p1092) target = $region88
        $region87: #{tpu_custom_call.1} parent=71 // pred_region
          %s1095 = sand.u32 %s100, 1
          %s1096 = scalar_lea.sflag [#allocation19], %s1095
          %s1097 = sand.u32 %s335, 1
          %s1098 = smul.addr %s1097, 3
          %s1099 = scalar_lea.vmem [#allocation20], %s1098
          %1101 = vsyncadd %s1096, 0
          %s1102 = smul.addr %s100, 3
          %s1103 = scalar_lea.hbm %s21, %s1102
          %s1105 = sshll.u32 %s1103, 4
          %s1106 = int_to_ptr.hbm [resolvable:$true] %s1105
          %s1107 = sshll.u32 %s1099, 4
          %s1108 = int_to_ptr.vmem [resolvable:$true] %s1107
          %1110 = dma.hbm_to_vmem [thread:$0]  %s1106, 48, %s1108, %s1096
        $region88: #{tpu_custom_call.1} parent=71 // pred_fallthru
          _
        // Predicated region
        $region89: #{tpu_custom_call.1} parent=71 // pred_check
          %p1111 = pneg %p371
        $region90: #{tpu_custom_call.1} parent=71 // pred_check_branch
          %1113 = sbr.rel (%p1111) target = $region92
        $region91: #{tpu_custom_call.1} parent=71 // pred_region
          %s1114 = sand.u32 %s100, 1
          %s1115 = scalar_lea.sflag [#allocation22], %s1114
          %s1116 = sand.u32 %s361, 1
          %s1117 = smul.addr %s1116, 64
          %s1118 = scalar_lea.vmem [#allocation21], %s1117
          %1120 = vsyncadd %s1115, 0
          %s1121 = smul.addr %s100, 16
          %s1122 = smul.addr %s1121, 4
          %s1123 = scalar_lea.hbm %s23, %s1122
          %s1124 = sshll.u32 %s1123, 4
          %s1125 = int_to_ptr.hbm [resolvable:$true] %s1124
          %s1126 = sshll.u32 %s1118, 4
          %s1127 = int_to_ptr.vmem [resolvable:$true] %s1126
          %1132 = dma.hbm_to_vmem [thread:$0]  %s1125, 1024, %s1127, %s1115, 64, 64, 4
        $region92: #{tpu_custom_call.1} parent=71 // pred_fallthru
          _
        // Predicated region
        $region93: #{tpu_custom_call.1} parent=71 // pred_check
          %p1133 = pneg %p397
        $region94: #{tpu_custom_call.1} parent=71 // pred_check_branch
          %1135 = sbr.rel (%p1133) target = $region96
        $region95: #{tpu_custom_call.1} parent=71 // pred_region
          %s1136 = sand.u32 %s100, 1
          %s1137 = scalar_lea.sflag [#allocation22], %s1136
          %s1138 = sand.u32 %s387, 1
          %s1139 = scalar_lea.vmem [#allocation23], %s1138
          %1141 = vsyncadd %s1137, 0
          %s1142 = scalar_lea.hbm %s25, %s100
          %s1144 = sshll.u32 %s1142, 4
          %s1145 = int_to_ptr.hbm [resolvable:$true] %s1144
          %s1146 = sshll.u32 %s1139, 4
          %s1147 = int_to_ptr.vmem [resolvable:$true] %s1146
          %1149 = dma.hbm_to_vmem [thread:$0]  %s1145, 16, %s1147, %s1137
        $region96: #{tpu_custom_call.1} parent=71 // pred_fallthru
          _
        // Predicated region
        $region97: #{tpu_custom_call.1} parent=71 // pred_check
          %p1150 = pneg %p423
        $region98: #{tpu_custom_call.1} parent=71 // pred_check_branch
          %1152 = sbr.rel (%p1150) target = $region100
        $region99: #{tpu_custom_call.1} parent=71 // pred_region
          %s1153 = sand.u32 %s100, 1
          %s1154 = scalar_lea.sflag [#allocation25], %s1153
          %s1155 = sand.u32 %s413, 1
          %s1156 = scalar_lea.vmem [#allocation24], %s1155
          %1158 = vsyncadd %s1154, 0
          %s1159 = scalar_lea.hbm %s27, %s100
          %s1161 = sshll.u32 %s1159, 4
          %s1162 = int_to_ptr.hbm [resolvable:$true] %s1161
          %s1163 = sshll.u32 %s1156, 4
          %s1164 = int_to_ptr.vmem [resolvable:$true] %s1163
          %1166 = dma.hbm_to_vmem [thread:$0]  %s1162, 16, %s1164, %s1154
        $region100: #{tpu_custom_call.1} parent=71 // pred_fallthru
          _
        // Predicated region
        $region101: #{tpu_custom_call.1} parent=71 // pred_check
          %p1167 = pneg %p449
        $region102: #{tpu_custom_call.1} parent=71 // pred_check_branch
          %1169 = sbr.rel (%p1167) target = $region104
        $region103: #{tpu_custom_call.1} parent=71 // pred_region
          %s1170 = sand.u32 %s100, 1
          %s1171 = scalar_lea.sflag [#allocation25], %s1170
          %s1172 = sand.u32 %s439, 1
          %s1173 = scalar_lea.vmem [#allocation26], %s1172
          %1175 = vsyncadd %s1171, 0
          %s1176 = scalar_lea.hbm %s29, %s100
          %s1178 = sshll.u32 %s1176, 4
          %s1179 = int_to_ptr.hbm [resolvable:$true] %s1178
          %s1180 = sshll.u32 %s1173, 4
          %s1181 = int_to_ptr.vmem [resolvable:$true] %s1180
          %1183 = dma.hbm_to_vmem [thread:$0]  %s1179, 16, %s1181, %s1171
        $region104: #{tpu_custom_call.1} parent=71 // pred_fallthru
          _
        // Predicated region
        $region105: #{tpu_custom_call.1} parent=71 // pred_check
          %p1184 = pneg %p475
        $region106: #{tpu_custom_call.1} parent=71 // pred_check_branch
          %1186 = sbr.rel (%p1184) target = $region108
        $region107: #{tpu_custom_call.1} parent=71 // pred_region
          %s1187 = sand.u32 %s100, 1
          %s1188 = scalar_lea.sflag [#allocation28], %s1187
          %s1189 = sand.u32 %s465, 1
          %s1190 = smul.addr %s1189, 256
          %s1191 = scalar_lea.vmem [#allocation27], %s1190
          %1193 = vsyncadd %s1188, 0
          %s1194 = smul.addr %s100, 64
          %s1195 = smul.addr %s1194, 4
          %s1196 = scalar_lea.hbm %s31, %s1195
          %s1197 = sshll.u32 %s1196, 4
          %s1198 = int_to_ptr.hbm [resolvable:$true] %s1197
          %s1199 = sshll.u32 %s1191, 4
          %s1200 = int_to_ptr.vmem [resolvable:$true] %s1199
          %1205 = dma.hbm_to_vmem [thread:$0]  %s1198, 4096, %s1200, %s1188, 256, 256, 16
        $region108: #{tpu_custom_call.1} parent=71 // pred_fallthru
          _
        // Predicated region
        $region109: #{tpu_custom_call.1} parent=71 // pred_check
          %p1206 = pneg %p501
        $region110: #{tpu_custom_call.1} parent=71 // pred_check_branch
          %1208 = sbr.rel (%p1206) target = $region112
        $region111: #{tpu_custom_call.1} parent=71 // pred_region
          %p1209 = scmp.lt.s32.totalorder %s100, 2
          %s1210 = scalar_select %p1209, %s100, 2
          %s1211 = smul.addr %s1210, 4
          %s1212 = scalar_lea.vmem %s33, %s1211
        $region112: #{tpu_custom_call.1} parent=71 // pred_fallthru
          _
        // Predicated region
        $region113: #{tpu_custom_call.1} parent=71 // pred_check
          %p1213 = pneg %p527
        $region114: #{tpu_custom_call.1} parent=71 // pred_check_branch
          %1215 = sbr.rel (%p1213) target = $region116
        $region115: #{tpu_custom_call.1} parent=71 // pred_region
          %s1216 = sand.u32 %s100, 1
          %s1217 = scalar_lea.sflag [#allocation28], %s1216
          %s1218 = sand.u32 %s517, 1
          %s1219 = smul.addr %s1218, 256
          %s1220 = scalar_lea.vmem [#allocation29], %s1219
          %1222 = vsyncadd %s1217, 0
          %s1223 = smul.addr %s100, 64
          %s1224 = smul.addr %s1223, 4
          %s1225 = scalar_lea.hbm %s35, %s1224
          %s1226 = sshll.u32 %s1225, 4
          %s1227 = int_to_ptr.hbm [resolvable:$true] %s1226
          %s1228 = sshll.u32 %s1220, 4
          %s1229 = int_to_ptr.vmem [resolvable:$true] %s1228
          %1234 = dma.hbm_to_vmem [thread:$0]  %s1227, 4096, %s1229, %s1217, 64, 64, 4
        $region116: #{tpu_custom_call.1} parent=71 // pred_fallthru
          _
        // Predicated region
        $region117: #{tpu_custom_call.1} parent=71 // pred_check
          %p1235 = pneg %p553
        $region118: #{tpu_custom_call.1} parent=71 // pred_check_branch
          %1237 = sbr.rel (%p1235) target = $region120
        $region119: #{tpu_custom_call.1} parent=71 // pred_region
          %s1238 = sand.u32 %s100, 1
          %s1239 = scalar_lea.sflag [#allocation31], %s1238
          %s1240 = sand.u32 %s543, 1
          %s1241 = scalar_lea.vmem [#allocation30], %s1240
          %1243 = vsyncadd %s1239, 0
          %s1244 = scalar_lea.hbm %s37, %s100
          %s1246 = sshll.u32 %s1244, 4
          %s1247 = int_to_ptr.hbm [resolvable:$true] %s1246
          %s1248 = sshll.u32 %s1241, 4
          %s1249 = int_to_ptr.vmem [resolvable:$true] %s1248
          %1251 = dma.hbm_to_vmem [thread:$0]  %s1247, 16, %s1249, %s1239
        $region120: #{tpu_custom_call.1} parent=71 // pred_fallthru
          _
      $region72: #{tpu_custom_call.1} parent=5 // pred_fallthru
        _
      %p1252 = scmp.le.s32.totalorder 1, %s100
      %p1253 = scmp.lt.s32.totalorder %s100, 4
      %p1254 = pnand %p1252, %p1253
      %p1255 = pneg %p1254
      // Predicated region
      $region121: #{tpu_custom_call.1} parent=5 // pred_check
        _
      $region122: #{tpu_custom_call.1} parent=5 // pred_check_branch
        %1257 = sbr.rel (%p1254) target = $region124
      $region123: #{tpu_custom_call.1} parent=5 // pred_region
        %s1258 = ssub.s32 %s100, 1
        // Predicated region
        $region125: #{tpu_custom_call.1} parent=123 // pred_check
          %p1259 = pneg %p121
        $region126: #{tpu_custom_call.1} parent=123 // pred_check_branch
          %1261 = sbr.rel (%p1259) target = $region128
        $region127: #{tpu_custom_call.1} parent=123 // pred_region
          %1263 = dma.done [#allocation4], 768
        $region128: #{tpu_custom_call.1} parent=123 // pred_fallthru
          _
        // Predicated region
        $region129: #{tpu_custom_call.1} parent=123 // pred_check
          %p1264 = pneg %p142
        $region130: #{tpu_custom_call.1} parent=123 // pred_check_branch
          %1266 = sbr.rel (%p1264) target = $region132
        $region131: #{tpu_custom_call.1} parent=123 // pred_region
          %1268 = dma.done [#allocation7], 6144
        $region132: #{tpu_custom_call.1} parent=123 // pred_fallthru
          _
        // Predicated region
        $region133: #{tpu_custom_call.1} parent=123 // pred_check
          %p1269 = pneg %p163
        $region134: #{tpu_custom_call.1} parent=123 // pred_check_branch
          %1271 = sbr.rel (%p1269) target = $region136
        $region135: #{tpu_custom_call.1} parent=123 // pred_region
          %1273 = dma.done [#allocation7], 256
        $region136: #{tpu_custom_call.1} parent=123 // pred_fallthru
          _
        // Predicated region
        $region137: #{tpu_custom_call.1} parent=123 // pred_check
          %p1274 = pneg %p184
        $region138: #{tpu_custom_call.1} parent=123 // pred_check_branch
          %1276 = sbr.rel (%p1274) target = $region140
        $region139: #{tpu_custom_call.1} parent=123 // pred_region
          %1278 = dma.done [#allocation10], 16
        $region140: #{tpu_custom_call.1} parent=123 // pred_fallthru
          _
        // Predicated region
        $region141: #{tpu_custom_call.1} parent=123 // pred_check
          %p1279 = pneg %p205
        $region142: #{tpu_custom_call.1} parent=123 // pred_check_branch
          %1281 = sbr.rel (%p1279) target = $region144
        $region143: #{tpu_custom_call.1} parent=123 // pred_region
          %1283 = dma.done [#allocation10], 16
        $region144: #{tpu_custom_call.1} parent=123 // pred_fallthru
          _
        // Predicated region
        $region145: #{tpu_custom_call.1} parent=123 // pred_check
          %p1284 = pneg %p226
        $region146: #{tpu_custom_call.1} parent=123 // pred_check_branch
          %1286 = sbr.rel (%p1284) target = $region148
        $region147: #{tpu_custom_call.1} parent=123 // pred_region
          %1288 = dma.done [#allocation13], 256
        $region148: #{tpu_custom_call.1} parent=123 // pred_fallthru
          _
        // Predicated region
        $region149: #{tpu_custom_call.1} parent=123 // pred_check
          %p1289 = pneg %p247
        $region150: #{tpu_custom_call.1} parent=123 // pred_check_branch
          %1291 = sbr.rel (%p1289) target = $region152
        $region151: #{tpu_custom_call.1} parent=123 // pred_region
          %1293 = dma.done [#allocation13], 32
        $region152: #{tpu_custom_call.1} parent=123 // pred_fallthru
          _
        %s1294 = sand.u32 %s105, 1
        %s1295 = scalar_lea.sflag [#allocation16], %s1294
        %s1296 = sand.u32 %s260, 1
        %s1297 = scalar_lea.vmem [#allocation15], %s1296
        // Predicated region
        $region153: #{tpu_custom_call.1} parent=123 // pred_check
          %p1298 = pneg %p273
        $region154: #{tpu_custom_call.1} parent=123 // pred_check_branch
          %1300 = sbr.rel (%p1298) target = $region156
        $region155: #{tpu_custom_call.1} parent=123 // pred_region
          %1302 = dma.done %s1295, 16
        $region156: #{tpu_custom_call.1} parent=123 // pred_fallthru
          _
        %s1303 = sand.u32 %s105, 1
        %s1304 = scalar_lea.sflag [#allocation16], %s1303
        %s1305 = sand.u32 %s286, 1
        %s1306 = scalar_lea.vmem [#allocation17], %s1305
        // Predicated region
        $region157: #{tpu_custom_call.1} parent=123 // pred_check
          %p1307 = pneg %p299
        $region158: #{tpu_custom_call.1} parent=123 // pred_check_branch
          %1309 = sbr.rel (%p1307) target = $region160
        $region159: #{tpu_custom_call.1} parent=123 // pred_region
          %1311 = dma.done %s1304, 16
        $region160: #{tpu_custom_call.1} parent=123 // pred_fallthru
          _
        %s1312 = sand.u32 %s105, 1
        %s1313 = scalar_lea.sflag [#allocation19], %s1312
        %s1314 = sand.u32 %s312, 1
        %s1315 = smul.addr %s1314, 192
        %s1316 = scalar_lea.vmem [#allocation18], %s1315
        // Predicated region
        $region161: #{tpu_custom_call.1} parent=123 // pred_check
          %p1317 = pneg %p325
        $region162: #{tpu_custom_call.1} parent=123 // pred_check_branch
          %1319 = sbr.rel (%p1317) target = $region164
        $region163: #{tpu_custom_call.1} parent=123 // pred_region
          %1321 = dma.done %s1313, 3072
        $region164: #{tpu_custom_call.1} parent=123 // pred_fallthru
          _
        %s1322 = sand.u32 %s105, 1
        %s1323 = scalar_lea.sflag [#allocation19], %s1322
        %s1324 = sand.u32 %s338, 1
        %s1325 = smul.addr %s1324, 3
        %s1326 = scalar_lea.vmem [#allocation20], %s1325
        // Predicated region
        $region165: #{tpu_custom_call.1} parent=123 // pred_check
          %p1327 = pneg %p351
        $region166: #{tpu_custom_call.1} parent=123 // pred_check_branch
          %1329 = sbr.rel (%p1327) target = $region168
        $region167: #{tpu_custom_call.1} parent=123 // pred_region
          %1331 = dma.done %s1323, 48
        $region168: #{tpu_custom_call.1} parent=123 // pred_fallthru
          _
        %s1332 = sand.u32 %s105, 1
        %s1333 = scalar_lea.sflag [#allocation22], %s1332
        %s1334 = sand.u32 %s364, 1
        %s1335 = smul.addr %s1334, 64
        %s1336 = scalar_lea.vmem [#allocation21], %s1335
        // Predicated region
        $region169: #{tpu_custom_call.1} parent=123 // pred_check
          %p1337 = pneg %p377
        $region170: #{tpu_custom_call.1} parent=123 // pred_check_branch
          %1339 = sbr.rel (%p1337) target = $region172
        $region171: #{tpu_custom_call.1} parent=123 // pred_region
          %1341 = dma.done %s1333, 1024
        $region172: #{tpu_custom_call.1} parent=123 // pred_fallthru
          _
        %s1342 = sand.u32 %s105, 1
        %s1343 = scalar_lea.sflag [#allocation22], %s1342
        %s1344 = sand.u32 %s390, 1
        %s1345 = scalar_lea.vmem [#allocation23], %s1344
        // Predicated region
        $region173: #{tpu_custom_call.1} parent=123 // pred_check
          %p1346 = pneg %p403
        $region174: #{tpu_custom_call.1} parent=123 // pred_check_branch
          %1348 = sbr.rel (%p1346) target = $region176
        $region175: #{tpu_custom_call.1} parent=123 // pred_region
          %1350 = dma.done %s1343, 16
        $region176: #{tpu_custom_call.1} parent=123 // pred_fallthru
          _
        %s1351 = sand.u32 %s105, 1
        %s1352 = scalar_lea.sflag [#allocation25], %s1351
        %s1353 = sand.u32 %s416, 1
        %s1354 = scalar_lea.vmem [#allocation24], %s1353
        // Predicated region
        $region177: #{tpu_custom_call.1} parent=123 // pred_check
          %p1355 = pneg %p429
        $region178: #{tpu_custom_call.1} parent=123 // pred_check_branch
          %1357 = sbr.rel (%p1355) target = $region180
        $region179: #{tpu_custom_call.1} parent=123 // pred_region
          %1359 = dma.done %s1352, 16
        $region180: #{tpu_custom_call.1} parent=123 // pred_fallthru
          _
        %s1360 = sand.u32 %s105, 1
        %s1361 = scalar_lea.sflag [#allocation25], %s1360
        %s1362 = sand.u32 %s442, 1
        %s1363 = scalar_lea.vmem [#allocation26], %s1362
        // Predicated region
        $region181: #{tpu_custom_call.1} parent=123 // pred_check
          %p1364 = pneg %p455
        $region182: #{tpu_custom_call.1} parent=123 // pred_check_branch
          %1366 = sbr.rel (%p1364) target = $region184
        $region183: #{tpu_custom_call.1} parent=123 // pred_region
          %1368 = dma.done %s1361, 16
        $region184: #{tpu_custom_call.1} parent=123 // pred_fallthru
          _
        %s1369 = sand.u32 %s105, 1
        %s1370 = scalar_lea.sflag [#allocation28], %s1369
        %s1371 = sand.u32 %s468, 1
        %s1372 = smul.addr %s1371, 256
        %s1373 = scalar_lea.vmem [#allocation27], %s1372
        // Predicated region
        $region185: #{tpu_custom_call.1} parent=123 // pred_check
          %p1374 = pneg %p481
        $region186: #{tpu_custom_call.1} parent=123 // pred_check_branch
          %1376 = sbr.rel (%p1374) target = $region188
        $region187: #{tpu_custom_call.1} parent=123 // pred_region
          %1378 = dma.done %s1370, 4096
        $region188: #{tpu_custom_call.1} parent=123 // pred_fallthru
          _
        %s1379 = sand.u32 %s105, 1
        %s1380 = scalar_lea.sflag [#allocation28], %s1379
        %s1381 = sand.u32 %s520, 1
        %s1382 = smul.addr %s1381, 256
        %s1383 = scalar_lea.vmem [#allocation29], %s1382
        // Predicated region
        $region189: #{tpu_custom_call.1} parent=123 // pred_check
          %p1384 = pneg %p533
        $region190: #{tpu_custom_call.1} parent=123 // pred_check_branch
          %1386 = sbr.rel (%p1384) target = $region192
        $region191: #{tpu_custom_call.1} parent=123 // pred_region
          %1388 = dma.done %s1380, 4096
        $region192: #{tpu_custom_call.1} parent=123 // pred_fallthru
          _
        %s1389 = sand.u32 %s105, 1
        %s1390 = scalar_lea.sflag [#allocation31], %s1389
        %s1391 = sand.u32 %s546, 1
        %s1392 = scalar_lea.vmem [#allocation30], %s1391
        // Predicated region
        $region193: #{tpu_custom_call.1} parent=123 // pred_check
          %p1393 = pneg %p559
        $region194: #{tpu_custom_call.1} parent=123 // pred_check_branch
          %1395 = sbr.rel (%p1393) target = $region196
        $region195: #{tpu_custom_call.1} parent=123 // pred_region
          %1397 = dma.done %s1390, 16
        $region196: #{tpu_custom_call.1} parent=123 // pred_fallthru
          _
        // Predicated region
        $region197: #{tpu_custom_call.1} parent=123 // pred_check
          %p1398 = pneg %p580
        $region198: #{tpu_custom_call.1} parent=123 // pred_check_branch
          %1400 = sbr.rel (%p1398) target = $region200
        $region199: #{tpu_custom_call.1} parent=123 // pred_region
          %1402 = dma.done [#allocation31], 16
        $region200: #{tpu_custom_call.1} parent=123 // pred_fallthru
          _
        // Predicated region
        $region201: #{tpu_custom_call.1} parent=123 // pred_check
          %p1403 = pneg %p601
        $region202: #{tpu_custom_call.1} parent=123 // pred_check_branch
          %1405 = sbr.rel (%p1403) target = $region204
        $region203: #{tpu_custom_call.1} parent=123 // pred_region
          %1407 = dma.done [#allocation34], 16
        $region204: #{tpu_custom_call.1} parent=123 // pred_fallthru
          _
        // Predicated region
        $region205: #{tpu_custom_call.1} parent=123 // pred_check
          %p1408 = pneg %p622
        $region206: #{tpu_custom_call.1} parent=123 // pred_check_branch
          %1410 = sbr.rel (%p1408) target = $region208
        $region207: #{tpu_custom_call.1} parent=123 // pred_region
          %1412 = dma.done [#allocation34], 1024
        $region208: #{tpu_custom_call.1} parent=123 // pred_fallthru
          _
        // Predicated region
        $region209: #{tpu_custom_call.1} parent=123 // pred_check
          %p1413 = pneg %p685
        $region210: #{tpu_custom_call.1} parent=123 // pred_check_branch
          %1415 = sbr.rel (%p1413) target = $region212
        $region211: #{tpu_custom_call.1} parent=123 // pred_region
          %1417 = dma.done [#allocation37], 1024
        $region212: #{tpu_custom_call.1} parent=123 // pred_fallthru
          _
        // Predicated region
        $region213: #{tpu_custom_call.1} parent=123 // pred_check
          %p1418 = pneg %p706
        $region214: #{tpu_custom_call.1} parent=123 // pred_check_branch
          %1420 = sbr.rel (%p1418) target = $region216
        $region215: #{tpu_custom_call.1} parent=123 // pred_region
          %1422 = dma.done [#allocation37], 1024
        $region216: #{tpu_custom_call.1} parent=123 // pred_fallthru
          _
        %p1423 = pneg %p121
        %p1424 = pneg %p118
        %p1425 = pneg %p142
        %p1426 = pneg %p139
        %p1427 = pneg %p163
        %p1428 = pneg %p160
        %p1429 = pneg %p184
        %p1430 = pneg %p181
        %p1431 = pneg %p205
        %p1432 = pneg %p202
        %p1433 = pneg %p226
        %p1434 = pneg %p223
        %p1435 = pneg %p247
        %p1436 = pneg %p244
        %s1437 = sand.u32 %s105, 1
        %s1438 = scalar_lea.sflag [#allocation16], %s1437
        %s1439 = sand.u32 %s260, 1
        %s1440 = scalar_lea.vmem [#allocation15], %s1439
        %p1441 = pneg %p273
        %p1442 = pneg %p270
        %s1443 = sand.u32 %s105, 1
        %s1444 = scalar_lea.sflag [#allocation16], %s1443
        %s1445 = sand.u32 %s286, 1
        %s1446 = scalar_lea.vmem [#allocation17], %s1445
        %p1447 = pneg %p299
        %p1448 = pneg %p296
        %s1449 = sand.u32 %s105, 1
        %s1450 = scalar_lea.sflag [#allocation19], %s1449
        %s1451 = sand.u32 %s312, 1
        %s1452 = smul.addr %s1451, 192
        %s1453 = scalar_lea.vmem [#allocation18], %s1452
        %p1454 = pneg %p325
        %p1455 = pneg %p322
        %s1456 = sand.u32 %s105, 1
        %s1457 = scalar_lea.sflag [#allocation19], %s1456
        %s1458 = sand.u32 %s338, 1
        %s1459 = smul.addr %s1458, 3
        %s1460 = scalar_lea.vmem [#allocation20], %s1459
        %p1461 = pneg %p351
        %p1462 = pneg %p348
        %s1463 = sand.u32 %s105, 1
        %s1464 = scalar_lea.sflag [#allocation22], %s1463
        %s1465 = sand.u32 %s364, 1
        %s1466 = smul.addr %s1465, 64
        %s1467 = scalar_lea.vmem [#allocation21], %s1466
        %p1468 = pneg %p377
        %p1469 = pneg %p374
        %s1470 = sand.u32 %s105, 1
        %s1471 = scalar_lea.sflag [#allocation22], %s1470
        %s1472 = sand.u32 %s390, 1
        %s1473 = scalar_lea.vmem [#allocation23], %s1472
        %p1474 = pneg %p403
        %p1475 = pneg %p400
        %s1476 = sand.u32 %s105, 1
        %s1477 = scalar_lea.sflag [#allocation25], %s1476
        %s1478 = sand.u32 %s416, 1
        %s1479 = scalar_lea.vmem [#allocation24], %s1478
        %p1480 = pneg %p429
        %p1481 = pneg %p426
        %s1482 = sand.u32 %s105, 1
        %s1483 = scalar_lea.sflag [#allocation25], %s1482
        %s1484 = sand.u32 %s442, 1
        %s1485 = scalar_lea.vmem [#allocation26], %s1484
        %p1486 = pneg %p455
        %p1487 = pneg %p452
        %s1488 = sand.u32 %s105, 1
        %s1489 = scalar_lea.sflag [#allocation28], %s1488
        %s1490 = sand.u32 %s468, 1
        %s1491 = smul.addr %s1490, 256
        %s1492 = scalar_lea.vmem [#allocation27], %s1491
        %p1493 = pneg %p481
        %p1494 = pneg %p478
        %p1495 = scmp.lt.s32.totalorder %s105, 2
        %s1496 = scalar_select %p1495, %s105, 2
        %s1497 = smul.addr %s1496, 4
        %s1498 = scalar_lea.vmem %s33, %s1497
        %p1499 = pneg %p507
        %p1500 = pneg %p504
        %s1501 = sand.u32 %s105, 1
        %s1502 = scalar_lea.sflag [#allocation28], %s1501
        %s1503 = sand.u32 %s520, 1
        %s1504 = smul.addr %s1503, 256
        %s1505 = scalar_lea.vmem [#allocation29], %s1504
        %p1506 = pneg %p533
        %p1507 = pneg %p530
        %s1508 = sand.u32 %s105, 1
        %s1509 = scalar_lea.sflag [#allocation31], %s1508
        %s1510 = sand.u32 %s546, 1
        %s1511 = scalar_lea.vmem [#allocation30], %s1510
        %p1512 = pneg %p559
        %p1513 = pneg %p556
        %p1514 = pneg %p580
        %p1515 = pneg %p577
        %p1516 = pneg %p601
        %p1517 = pneg %p598
        %p1518 = pneg %p622
        %p1519 = pneg %p619
        %p1520 = pneg %p643
        %p1521 = pneg %p640
        %p1522 = pneg %p664
        %p1523 = pneg %p661
        %p1524 = pneg %p685
        %p1525 = pneg %p682
        %p1526 = pneg %p706
        %p1527 = pneg %p703
        %p1528 = pneg %p727
        %p1529 = pneg %p724
        %p1530 = pneg %p748
        %p1531 = pneg %p745
        %p1532 = pneg %p769
        %p1533 = pneg %p766
        %p1534 = pneg %p790
        %p1535 = pneg %p787
        %p1536 = pneg %p811
        %p1537 = pneg %p808
        %p1538 = pneg %p832
        %p1539 = pneg %p829
        %p1540 = pneg %p853
        %p1541 = pneg %p850
        %p1542 = scmp.lt.s32.totalorder %s105, 2
        %s1543 = scalar_select %p1542, %s105, 2
        %s1544 = smul.addr %s1543, 4
        %s1545 = scalar_lea.vmem %s33, %s1544
        %p1547 = scmp.eq.s32.totalorder %s105, 0
        // Predicated region
        $region217: #{tpu_custom_call.1} parent=123 // pred_check
          %p1548 = pneg %p1547
        $region218: #{tpu_custom_call.1} parent=123 // pred_check_branch
          %1550 = sbr.rel (%p1548) target = $region220
        $region219: #{tpu_custom_call.1} parent=123 // pred_region
          %v1551 = vld [vmem:[#allocation3] sm:$0xff]
          %v1552 = vld [vmem:[#allocation3 + $0x8] sm:$0xff]
          %v1553 = vld [vmem:[#allocation3 + $0x10] sm:$0xff]
          %v1554 = vld [vmem:[#allocation3 + $0x18] sm:$0x11]
          %v1555 = vld [vmem:[#allocation3 + $0x20] sm:$0x11]
          %v1556 = vld [vmem:[#allocation3 + $0x28] sm:$0x11]
          %v1557 = vld [vmem:[#allocation6] sm:$0xf]
          %v1558 = vld [vmem:[#allocation6 + $0x4] sm:$0xf]
          %v1559 = vld [vmem:[#allocation6 + $0x8] sm:$0xf]
          %v1560 = vld [vmem:[#allocation6 + $0xc] sm:$0xf]
          %v1561 = vld [vmem:[#allocation6 + $0x10] sm:$0xf]
          %v1562 = vld [vmem:[#allocation6 + $0x14] sm:$0xf]
          %v1563 = vld [vmem:[#allocation6 + $0x18] sm:$0xf]
          %v1564 = vld [vmem:[#allocation6 + $0x1c] sm:$0xf]
          %v1565 = vld [vmem:[#allocation6 + $0x20] sm:$0xf]
          %v1566 = vld [vmem:[#allocation6 + $0x24] sm:$0xf]
          %v1567 = vld [vmem:[#allocation6 + $0x28] sm:$0xf]
          %v1568 = vld [vmem:[#allocation6 + $0x2c] sm:$0xf]
          %v1569 = vld [vmem:[#allocation6 + $0x30] sm:$0xf]
          %v1570 = vld [vmem:[#allocation6 + $0x34] sm:$0xf]
          %v1571 = vld [vmem:[#allocation6 + $0x38] sm:$0xf]
          %v1572 = vld [vmem:[#allocation6 + $0x3c] sm:$0xf]
          %v1573 = vld [vmem:[#allocation6 + $0x40] sm:$0xf]
          %v1574 = vld [vmem:[#allocation6 + $0x44] sm:$0xf]
          %v1575 = vld [vmem:[#allocation6 + $0x48] sm:$0xf]
          %v1576 = vld [vmem:[#allocation6 + $0x4c] sm:$0xf]
          %v1577 = vld [vmem:[#allocation6 + $0x50] sm:$0xf]
          %v1578 = vld [vmem:[#allocation6 + $0x54] sm:$0xf]
          %v1579 = vld [vmem:[#allocation6 + $0x58] sm:$0xf]
          %v1580 = vld [vmem:[#allocation6 + $0x5c] sm:$0xf]
          %v1581 = vld [vmem:[#allocation6 + $0x60] sm:$0xf]
          %v1582 = vld [vmem:[#allocation6 + $0x64] sm:$0xf]
          %v1583 = vld [vmem:[#allocation6 + $0x68] sm:$0xf]
          %v1584 = vld [vmem:[#allocation6 + $0x6c] sm:$0xf]
          %v1585 = vld [vmem:[#allocation6 + $0x70] sm:$0xf]
          %v1586 = vld [vmem:[#allocation6 + $0x74] sm:$0xf]
          %v1587 = vld [vmem:[#allocation6 + $0x78] sm:$0xf]
          %v1588 = vld [vmem:[#allocation6 + $0x7c] sm:$0xf]
          %v1589 = vld [vmem:[#allocation6 + $0x80] sm:$0xf]
          %v1590 = vld [vmem:[#allocation6 + $0x84] sm:$0xf]
          %v1591 = vld [vmem:[#allocation6 + $0x88] sm:$0xf]
          %v1592 = vld [vmem:[#allocation6 + $0x8c] sm:$0xf]
          %v1593 = vld [vmem:[#allocation6 + $0x90] sm:$0xf]
          %v1594 = vld [vmem:[#allocation6 + $0x94] sm:$0xf]
          %v1595 = vld [vmem:[#allocation6 + $0x98] sm:$0xf]
          %v1596 = vld [vmem:[#allocation6 + $0x9c] sm:$0xf]
          %v1597 = vld [vmem:[#allocation6 + $0xa0] sm:$0xf]
          %v1598 = vld [vmem:[#allocation6 + $0xa4] sm:$0xf]
          %v1599 = vld [vmem:[#allocation6 + $0xa8] sm:$0xf]
          %v1600 = vld [vmem:[#allocation6 + $0xac] sm:$0xf]
          %v1601 = vld [vmem:[#allocation6 + $0xb0] sm:$0xf]
          %v1602 = vld [vmem:[#allocation6 + $0xb4] sm:$0xf]
          %v1603 = vld [vmem:[#allocation6 + $0xb8] sm:$0xf]
          %v1604 = vld [vmem:[#allocation6 + $0xbc] sm:$0xf]
          %v1605 = vld [vmem:[#allocation6 + $0xc0] sm:$0xf]
          %v1606 = vld [vmem:[#allocation6 + $0xc4] sm:$0xf]
          %v1607 = vld [vmem:[#allocation6 + $0xc8] sm:$0xf]
          %v1608 = vld [vmem:[#allocation6 + $0xcc] sm:$0xf]
          %v1609 = vld [vmem:[#allocation6 + $0xd0] sm:$0xf]
          %v1610 = vld [vmem:[#allocation6 + $0xd4] sm:$0xf]
          %v1611 = vld [vmem:[#allocation6 + $0xd8] sm:$0xf]
          %v1612 = vld [vmem:[#allocation6 + $0xdc] sm:$0xf]
          %v1613 = vld [vmem:[#allocation6 + $0xe0] sm:$0xf]
          %v1614 = vld [vmem:[#allocation6 + $0xe4] sm:$0xf]
          %v1615 = vld [vmem:[#allocation6 + $0xe8] sm:$0xf]
          %v1616 = vld [vmem:[#allocation6 + $0xec] sm:$0xf]
          %v1617 = vld [vmem:[#allocation6 + $0xf0] sm:$0xf]
          %v1618 = vld [vmem:[#allocation6 + $0xf4] sm:$0xf]
          %v1619 = vld [vmem:[#allocation6 + $0xf8] sm:$0xf]
          %v1620 = vld [vmem:[#allocation6 + $0xfc] sm:$0xf]
          %v1621 = vld [vmem:[#allocation6 + $0x100] sm:$0xf]
          %v1622 = vld [vmem:[#allocation6 + $0x104] sm:$0xf]
          %v1623 = vld [vmem:[#allocation6 + $0x108] sm:$0xf]
          %v1624 = vld [vmem:[#allocation6 + $0x10c] sm:$0xf]
          %v1625 = vld [vmem:[#allocation6 + $0x110] sm:$0xf]
          %v1626 = vld [vmem:[#allocation6 + $0x114] sm:$0xf]
          %v1627 = vld [vmem:[#allocation6 + $0x118] sm:$0xf]
          %v1628 = vld [vmem:[#allocation6 + $0x11c] sm:$0xf]
          %v1629 = vld [vmem:[#allocation6 + $0x120] sm:$0xf]
          %v1630 = vld [vmem:[#allocation6 + $0x124] sm:$0xf]
          %v1631 = vld [vmem:[#allocation6 + $0x128] sm:$0xf]
          %v1632 = vld [vmem:[#allocation6 + $0x12c] sm:$0xf]
          %v1633 = vld [vmem:[#allocation6 + $0x130] sm:$0xf]
          %v1634 = vld [vmem:[#allocation6 + $0x134] sm:$0xf]
          %v1635 = vld [vmem:[#allocation6 + $0x138] sm:$0xf]
          %v1636 = vld [vmem:[#allocation6 + $0x13c] sm:$0xf]
          %v1637 = vld [vmem:[#allocation6 + $0x140] sm:$0xf]
          %v1638 = vld [vmem:[#allocation6 + $0x144] sm:$0xf]
          %v1639 = vld [vmem:[#allocation6 + $0x148] sm:$0xf]
          %v1640 = vld [vmem:[#allocation6 + $0x14c] sm:$0xf]
          %v1641 = vld [vmem:[#allocation6 + $0x150] sm:$0xf]
          %v1642 = vld [vmem:[#allocation6 + $0x154] sm:$0xf]
          %v1643 = vld [vmem:[#allocation6 + $0x158] sm:$0xf]
          %v1644 = vld [vmem:[#allocation6 + $0x15c] sm:$0xf]
          %v1645 = vld [vmem:[#allocation6 + $0x160] sm:$0xf]
          %v1646 = vld [vmem:[#allocation6 + $0x164] sm:$0xf]
          %v1647 = vld [vmem:[#allocation6 + $0x168] sm:$0xf]
          %v1648 = vld [vmem:[#allocation6 + $0x16c] sm:$0xf]
          %v1649 = vld [vmem:[#allocation6 + $0x170] sm:$0xf]
          %v1650 = vld [vmem:[#allocation6 + $0x174] sm:$0xf]
          %v1651 = vld [vmem:[#allocation6 + $0x178] sm:$0xf]
          %v1652 = vld [vmem:[#allocation6 + $0x17c] sm:$0xf]
          %v1653 = vld [vmem:[#allocation8] sm:$0xff]
          %v1654 = vld [vmem:[#allocation8 + $0x8] sm:$0x3]
          %v1661 = vunpack.c.l.b16 %v1551
          %v1662 = vunpack.c.h.b16 %v1551
          %v1663 = vunpack.c.l.b16 %v1552
          %v1664 = vunpack.c.h.b16 %v1552
          %v1665 = vunpack.c.l.b16 %v1553
          %v1666 = vunpack.c.h.b16 %v1553
          %v1667 = vunpack.c.l.b16 %v1554
          %v1668 = vunpack.c.h.b16 %v1554
          %v1669 = vunpack.c.l.b16 %v1555
          %v1670 = vunpack.c.h.b16 %v1555
          %v1671 = vunpack.c.l.b16 %v1556
          %v1672 = vunpack.c.h.b16 %v1556
          %v1673 = vpack.c.b16 %v1667, %v1661
          %v1674 = vpack.c.b16 %v1668, %v1662
          %v1675 = vpack.c.b16 %v1669, %v1663
          %v1676 = vpack.c.b16 %v1670, %v1664
          %v1677 = vpack.c.b16 %v1671, %v1665
          %v1678 = vpack.c.b16 %v1672, %v1666
          %v1781 = vunpack.c.l.b16 %v1557
          %v1782 = vunpack.c.l.b16 %v1558
          %v1783 = vunpack.c.l.b16 %v1559
          %v1784 = vunpack.c.l.b16 %v1560
          %v1785 = vunpack.c.l.b16 %v1561
          %v1786 = vunpack.c.l.b16 %v1562
          %v1787 = vunpack.c.l.b16 %v1563
          %v1788 = vunpack.c.l.b16 %v1564
          %v1789 = vunpack.c.l.b16 %v1565
          %v1790 = vunpack.c.l.b16 %v1566
          %v1791 = vunpack.c.l.b16 %v1567
          %v1792 = vunpack.c.l.b16 %v1568
          %v1793 = vunpack.c.l.b16 %v1569
          %v1794 = vunpack.c.l.b16 %v1570
          %v1795 = vunpack.c.l.b16 %v1571
          %v1796 = vunpack.c.l.b16 %v1572
          %v1797 = vunpack.c.l.b16 %v1573
          %v1798 = vunpack.c.l.b16 %v1574
          %v1799 = vunpack.c.l.b16 %v1575
          %v1800 = vunpack.c.l.b16 %v1576
          %v1801 = vunpack.c.l.b16 %v1577
          %v1802 = vunpack.c.l.b16 %v1578
          %v1803 = vunpack.c.l.b16 %v1579
          %v1804 = vunpack.c.l.b16 %v1580
          %v1805 = vunpack.c.l.b16 %v1581
          %v1806 = vunpack.c.l.b16 %v1582
          %v1807 = vunpack.c.l.b16 %v1583
          %v1808 = vunpack.c.l.b16 %v1584
          %v1809 = vunpack.c.l.b16 %v1585
          %v1810 = vunpack.c.l.b16 %v1586
          %v1811 = vunpack.c.l.b16 %v1587
          %v1812 = vunpack.c.l.b16 %v1588
          %v1813 = vunpack.c.l.b16 %v1589
          %v1814 = vunpack.c.l.b16 %v1590
          %v1815 = vunpack.c.l.b16 %v1591
          %v1816 = vunpack.c.l.b16 %v1592
          %v1817 = vunpack.c.l.b16 %v1593
          %v1818 = vunpack.c.l.b16 %v1594
          %v1819 = vunpack.c.l.b16 %v1595
          %v1820 = vunpack.c.l.b16 %v1596
          %v1821 = vunpack.c.l.b16 %v1597
          %v1822 = vunpack.c.l.b16 %v1598
          %v1823 = vunpack.c.l.b16 %v1599
          %v1824 = vunpack.c.l.b16 %v1600
          %v1825 = vunpack.c.l.b16 %v1601
          %v1826 = vunpack.c.l.b16 %v1602
          %v1827 = vunpack.c.l.b16 %v1603
          %v1828 = vunpack.c.l.b16 %v1604
          %v1829 = vunpack.c.l.b16 %v1605
          %v1830 = vunpack.c.l.b16 %v1606
          %v1831 = vunpack.c.l.b16 %v1607
          %v1832 = vunpack.c.l.b16 %v1608
          %v1833 = vunpack.c.l.b16 %v1609
          %v1834 = vunpack.c.l.b16 %v1610
          %v1835 = vunpack.c.l.b16 %v1611
          %v1836 = vunpack.c.l.b16 %v1612
          %v1837 = vunpack.c.l.b16 %v1613
          %v1838 = vunpack.c.l.b16 %v1614
          %v1839 = vunpack.c.l.b16 %v1615
          %v1840 = vunpack.c.l.b16 %v1616
          %v1841 = vunpack.c.l.b16 %v1617
          %v1842 = vunpack.c.l.b16 %v1618
          %v1843 = vunpack.c.l.b16 %v1619
          %v1844 = vunpack.c.l.b16 %v1620
          %v1845 = vunpack.c.l.b16 %v1621
          %v1846 = vunpack.c.l.b16 %v1622
          %v1847 = vunpack.c.l.b16 %v1623
          %v1848 = vunpack.c.l.b16 %v1624
          %v1849 = vunpack.c.l.b16 %v1625
          %v1850 = vunpack.c.l.b16 %v1626
          %v1851 = vunpack.c.l.b16 %v1627
          %v1852 = vunpack.c.l.b16 %v1628
          %v1853 = vunpack.c.l.b16 %v1629
          %v1854 = vunpack.c.l.b16 %v1630
          %v1855 = vunpack.c.l.b16 %v1631
          %v1856 = vunpack.c.l.b16 %v1632
          %v1857 = vunpack.c.l.b16 %v1633
          %v1858 = vunpack.c.l.b16 %v1634
          %v1859 = vunpack.c.l.b16 %v1635
          %v1860 = vunpack.c.l.b16 %v1636
          %v1861 = vunpack.c.l.b16 %v1637
          %v1862 = vunpack.c.l.b16 %v1638
          %v1863 = vunpack.c.l.b16 %v1639
          %v1864 = vunpack.c.l.b16 %v1640
          %v1865 = vunpack.c.l.b16 %v1641
          %v1866 = vunpack.c.l.b16 %v1642
          %v1867 = vunpack.c.l.b16 %v1643
          %v1868 = vunpack.c.l.b16 %v1644
          %v1869 = vunpack.c.l.b16 %v1645
          %v1870 = vunpack.c.l.b16 %v1646
          %v1871 = vunpack.c.l.b16 %v1647
          %v1872 = vunpack.c.l.b16 %v1648
          %v1873 = vunpack.c.l.b16 %v1649
          %v1874 = vunpack.c.l.b16 %v1650
          %v1875 = vunpack.c.l.b16 %v1651
          %v1876 = vunpack.c.l.b16 %v1652
          %v1877 = vpack.c.b16 %v1782, %v1781
          %v1878 = vpack.c.b16 %v1784, %v1783
          %v1879 = vpack.c.b16 %v1786, %v1785
          %v1880 = vpack.c.b16 %v1788, %v1787
          %v1881 = vpack.c.b16 %v1790, %v1789
          %v1882 = vpack.c.b16 %v1792, %v1791
          %v1883 = vpack.c.b16 %v1794, %v1793
          %v1884 = vpack.c.b16 %v1796, %v1795
          %v1885 = vpack.c.b16 %v1798, %v1797
          %v1886 = vpack.c.b16 %v1800, %v1799
          %v1887 = vpack.c.b16 %v1802, %v1801
          %v1888 = vpack.c.b16 %v1804, %v1803
          %v1889 = vpack.c.b16 %v1806, %v1805
          %v1890 = vpack.c.b16 %v1808, %v1807
          %v1891 = vpack.c.b16 %v1810, %v1809
          %v1892 = vpack.c.b16 %v1812, %v1811
          %v1893 = vpack.c.b16 %v1814, %v1813
          %v1894 = vpack.c.b16 %v1816, %v1815
          %v1895 = vpack.c.b16 %v1818, %v1817
          %v1896 = vpack.c.b16 %v1820, %v1819
          %v1897 = vpack.c.b16 %v1822, %v1821
          %v1898 = vpack.c.b16 %v1824, %v1823
          %v1899 = vpack.c.b16 %v1826, %v1825
          %v1900 = vpack.c.b16 %v1828, %v1827
          %v1901 = vpack.c.b16 %v1830, %v1829
          %v1902 = vpack.c.b16 %v1832, %v1831
          %v1903 = vpack.c.b16 %v1834, %v1833
          %v1904 = vpack.c.b16 %v1836, %v1835
          %v1905 = vpack.c.b16 %v1838, %v1837
          %v1906 = vpack.c.b16 %v1840, %v1839
          %v1907 = vpack.c.b16 %v1842, %v1841
          %v1908 = vpack.c.b16 %v1844, %v1843
          %v1909 = vpack.c.b16 %v1846, %v1845
          %v1910 = vpack.c.b16 %v1848, %v1847
          %v1911 = vpack.c.b16 %v1850, %v1849
          %v1912 = vpack.c.b16 %v1852, %v1851
          %v1913 = vpack.c.b16 %v1854, %v1853
          %v1914 = vpack.c.b16 %v1856, %v1855
          %v1915 = vpack.c.b16 %v1858, %v1857
          %v1916 = vpack.c.b16 %v1860, %v1859
          %v1917 = vpack.c.b16 %v1862, %v1861
          %v1918 = vpack.c.b16 %v1864, %v1863
          %v1919 = vpack.c.b16 %v1866, %v1865
          %v1920 = vpack.c.b16 %v1868, %v1867
          %v1921 = vpack.c.b16 %v1870, %v1869
          %v1922 = vpack.c.b16 %v1872, %v1871
          %v1923 = vpack.c.b16 %v1874, %v1873
          %v1924 = vpack.c.b16 %v1876, %v1875
          %1973 = vmatpush.bf16.msra.mxu0 %v1884
          %1974 = vmatpush.bf16.msra.mxu0 %v1883
          %1975 = vmatpush.bf16.msra.mxu0 %v1882
          %1976 = vmatpush.bf16.msra.mxu0 %v1881
          %1977 = vmatpush.bf16.msra.mxu0 %v1880
          %1978 = vmatpush.bf16.msra.mxu0 %v1879
          %1979 = vmatpush.bf16.msra.mxu0 %v1878
          %1980 = vmatpush.bf16.msra.mxu0 %v1877
          %1981 = vmatmul.bf16.gmra.mxu0 %v1673
          %v1982 = vpop.f32.mrf.mxu0
          %v1983 = vadd.f32 %v1653, %v1982
          %v1984 = vpop.f32.mrf.mxu0
          %v1985 = vadd.f32 %v1654, %v1984
          %1986 = vdwg.mxu0
          %1987 = vmatpush.bf16.msra.mxu0 %v1892
          %1988 = vmatpush.bf16.msra.mxu0 %v1891
          %1989 = vmatpush.bf16.msra.mxu0 %v1890
          %1990 = vmatpush.bf16.msra.mxu0 %v1889
          %1991 = vmatpush.bf16.msra.mxu0 %v1888
          %1992 = vmatpush.bf16.msra.mxu0 %v1887
          %1993 = vmatpush.bf16.msra.mxu0 %v1886
          %1994 = vmatpush.bf16.msra.mxu0 %v1885
          %1995 = vmatmul.bf16.gmra.mxu0 %v1674
          %v1996 = vpop.f32.mrf.mxu0
          %v1997 = vadd.f32 %v1983, %v1996
          %v1998 = vpop.f32.mrf.mxu0
          %v1999 = vadd.f32 %v1985, %v1998
          %2000 = vdwg.mxu0
          %2001 = vmatpush.bf16.msra.mxu0 %v1900
          %2002 = vmatpush.bf16.msra.mxu0 %v1899
          %2003 = vmatpush.bf16.msra.mxu0 %v1898
          %2004 = vmatpush.bf16.msra.mxu0 %v1897
          %2005 = vmatpush.bf16.msra.mxu0 %v1896
          %2006 = vmatpush.bf16.msra.mxu0 %v1895
          %2007 = vmatpush.bf16.msra.mxu0 %v1894
          %2008 = vmatpush.bf16.msra.mxu0 %v1893
          %2009 = vmatmul.bf16.gmra.mxu0 %v1675
          %v2010 = vpop.f32.mrf.mxu0
          %v2011 = vadd.f32 %v1997, %v2010
          %v2012 = vpop.f32.mrf.mxu0
          %v2013 = vadd.f32 %v1999, %v2012
          %2014 = vdwg.mxu0
          %2015 = vmatpush.bf16.msra.mxu0 %v1908
          %2016 = vmatpush.bf16.msra.mxu0 %v1907
          %2017 = vmatpush.bf16.msra.mxu0 %v1906
          %2018 = vmatpush.bf16.msra.mxu0 %v1905
          %2019 = vmatpush.bf16.msra.mxu0 %v1904
          %2020 = vmatpush.bf16.msra.mxu0 %v1903
          %2021 = vmatpush.bf16.msra.mxu0 %v1902
          %2022 = vmatpush.bf16.msra.mxu0 %v1901
          %2023 = vmatmul.bf16.gmra.mxu0 %v1676
          %v2024 = vpop.f32.mrf.mxu0
          %v2025 = vadd.f32 %v2011, %v2024
          %v2026 = vpop.f32.mrf.mxu0
          %v2027 = vadd.f32 %v2013, %v2026
          %2028 = vdwg.mxu0
          %2029 = vmatpush.bf16.msra.mxu0 %v1916
          %2030 = vmatpush.bf16.msra.mxu0 %v1915
          %2031 = vmatpush.bf16.msra.mxu0 %v1914
          %2032 = vmatpush.bf16.msra.mxu0 %v1913
          %2033 = vmatpush.bf16.msra.mxu0 %v1912
          %2034 = vmatpush.bf16.msra.mxu0 %v1911
          %2035 = vmatpush.bf16.msra.mxu0 %v1910
          %2036 = vmatpush.bf16.msra.mxu0 %v1909
          %2037 = vmatmul.bf16.gmra.mxu0 %v1677
          %v2038 = vpop.f32.mrf.mxu0
          %v2039 = vadd.f32 %v2025, %v2038
          %v2040 = vpop.f32.mrf.mxu0
          %v2041 = vadd.f32 %v2027, %v2040
          %2042 = vdwg.mxu0
          %2043 = vmatpush.bf16.msra.mxu0 %v1924
          %2044 = vmatpush.bf16.msra.mxu0 %v1923
          %2045 = vmatpush.bf16.msra.mxu0 %v1922
          %2046 = vmatpush.bf16.msra.mxu0 %v1921
          %2047 = vmatpush.bf16.msra.mxu0 %v1920
          %2048 = vmatpush.bf16.msra.mxu0 %v1919
          %2049 = vmatpush.bf16.msra.mxu0 %v1918
          %2050 = vmatpush.bf16.msra.mxu0 %v1917
          %2051 = vmatmul.bf16.gmra.mxu0 %v1678
          %v2052 = vpop.f32.mrf.mxu0
          %v2053 = vadd.f32 %v2039, %v2052
          %v2054 = vpop.f32.mrf.mxu0
          %v2055 = vadd.f32 %v2041, %v2054
          %2056 = vdwg.mxu0
          %v2057 = vld [vmem:[#allocation9] sm:$0x1]
          %v2058 = vld [vmem:[#allocation11] sm:$0x1]
          %2059 = vadd.xlane.f32.xlu0 %v2053
          %v2060 = vpop.xlane.xlu0 %2059
          %vm2061 = vcmask 1041408
          %v2062 = vsel %vm2061, %v2055, 0.0
          %2063 = vadd.xlane.f32.xlu0 %v2062
          %v2064 = vpop.xlane.xlu0 %2063
          %v2065 = vrcp.pop 128.0
          %v2066 = vmul.f32 128.0, %v2065
          %v2067 = vsub.f32 1.0, %v2066
          %v2068 = vmul.f32 %v2065, %v2067
          %v2069 = vadd.f32 %v2065, %v2068
          %vm2070 = vweird.f32 %v2065
          %v2071 = vsel %vm2070, %v2065, %v2069
          %v2072 = vmul.f32 %v2060, %v2071
          %v2073 = vmul.f32 %v2064, %v2071
          %v2074 = vsub.f32 %v2053, %v2072
          %v2075 = vsub.f32 %v2055, %v2073
          %v2076 = vmul.f32 %v2074, %v2074
          %v2077 = vmul.f32 %v2075, %v2075
          %2078 = vadd.xlane.f32.xlu0 %v2076
          %v2079 = vpop.xlane.xlu0 %2078
          %v2080 = vsel %vm2061, %v2077, 0.0
          %2081 = vadd.xlane.f32.xlu0 %v2080
          %v2082 = vpop.xlane.xlu0 %2081
          %v2083 = vmul.f32 %v2079, %v2071
          %v2084 = vmul.f32 %v2082, %v2071
          %v2085 = vadd.f32 %v2083, 1e-05
          %v2086 = vadd.f32 %v2084, 1e-05
          %v2087 = vrsqrt.pop %v2085
          %v2088 = vmul.f32 %v2087, %v2085
          %v2089 = vmul.f32 %v2088, %v2087
          %v2090 = vmul.f32 0.5, %v2089
          %v2091 = vsub.f32 1.5, %v2090
          %v2092 = vmul.f32 %v2087, %v2091
          %vm2093 = vweird.f32 %v2085
          %vm2094 = vweird.f32 %v2087
          %vm2095 = vmor %vm2093, %vm2094
          %v2096 = vsel %vm2095, %v2087, %v2092
          %v2097 = vrsqrt.pop %v2086
          %v2098 = vmul.f32 %v2097, %v2086
          %v2099 = vmul.f32 %v2098, %v2097
          %v2100 = vmul.f32 0.5, %v2099
          %v2101 = vsub.f32 1.5, %v2100
          %v2102 = vmul.f32 %v2097, %v2101
          %vm2103 = vweird.f32 %v2086
          %vm2104 = vweird.f32 %v2097
          %vm2105 = vmor %vm2103, %vm2104
          %v2106 = vsel %vm2105, %v2097, %v2102
          %v2107 = vmul.f32 %v2074, %v2096
          %v2108 = vmul.f32 %v2075, %v2106
          %v2110 = vperm.slane %v2057, 0
          %v2112 = vmul.f32 %v2107, %v2110
          %v2113 = vmul.f32 %v2108, %v2110
          %v2115 = vperm.slane %v2058, 0
          %v2117 = vadd.f32 %v2112, %v2115
          %v2118 = vadd.f32 %v2113, %v2115
          %2119 = vst [vmem:[#allocation2] sm:$0xff] %v2117
          %2120 = vst [vmem:[#allocation2 + $0x8] sm:$0x3] %v2118
        $region220: #{tpu_custom_call.1} parent=123 // pred_fallthru
          _
        %v2121 = vld [vmem:[#allocation2] sm:$0xff]
        %v2122 = vld [vmem:[#allocation2 + $0x8] sm:$0x3]
        %v2123 = vld [vmem:[%s1297] sm:$0x1]
        %v2124 = vld [vmem:[%s1306] sm:$0x1]
        %2125 = vadd.xlane.f32.xlu0 %v2121
        %v2126 = vpop.xlane.xlu0 %2125
        %vm2127 = vcmask 1041408
        %v2128 = vsel %vm2127, %v2122, 0.0
        %2129 = vadd.xlane.f32.xlu0 %v2128
        %v2130 = vpop.xlane.xlu0 %2129
        %v2131 = vrcp.pop 128.0
        %v2132 = vmul.f32 128.0, %v2131
        %v2133 = vsub.f32 1.0, %v2132
        %v2134 = vmul.f32 %v2131, %v2133
        %v2135 = vadd.f32 %v2131, %v2134
        %vm2136 = vweird.f32 %v2131
        %v2137 = vsel %vm2136, %v2131, %v2135
        %v2138 = vmul.f32 %v2126, %v2137
        %v2139 = vmul.f32 %v2130, %v2137
        %v2140 = vsub.f32 %v2121, %v2138
        %v2141 = vsub.f32 %v2122, %v2139
        %v2142 = vmul.f32 %v2140, %v2140
        %v2143 = vmul.f32 %v2141, %v2141
        %2144 = vadd.xlane.f32.xlu0 %v2142
        %v2145 = vpop.xlane.xlu0 %2144
        %v2146 = vsel %vm2127, %v2143, 0.0
        %2147 = vadd.xlane.f32.xlu0 %v2146
        %v2148 = vpop.xlane.xlu0 %2147
        %v2149 = vmul.f32 %v2145, %v2137
        %v2150 = vmul.f32 %v2148, %v2137
        %v2151 = vadd.f32 %v2149, 1e-05
        %v2152 = vadd.f32 %v2150, 1e-05
        %v2153 = vrsqrt.pop %v2151
        %v2154 = vmul.f32 %v2153, %v2151
        %v2155 = vmul.f32 %v2154, %v2153
        %v2156 = vmul.f32 0.5, %v2155
        %v2157 = vsub.f32 1.5, %v2156
        %v2158 = vmul.f32 %v2153, %v2157
        %vm2159 = vweird.f32 %v2151
        %vm2160 = vweird.f32 %v2153
        %vm2161 = vmor %vm2159, %vm2160
        %v2162 = vsel %vm2161, %v2153, %v2158
        %v2163 = vrsqrt.pop %v2152
        %v2164 = vmul.f32 %v2163, %v2152
        %v2165 = vmul.f32 %v2164, %v2163
        %v2166 = vmul.f32 0.5, %v2165
        %v2167 = vsub.f32 1.5, %v2166
        %v2168 = vmul.f32 %v2163, %v2167
        %vm2169 = vweird.f32 %v2152
        %vm2170 = vweird.f32 %v2163
        %vm2171 = vmor %vm2169, %vm2170
        %v2172 = vsel %vm2171, %v2163, %v2168
        %v2173 = vmul.f32 %v2140, %v2162
        %v2174 = vmul.f32 %v2141, %v2172
        %v2176 = vperm.slane %v2123, 0
        %v2178 = vmul.f32 %v2173, %v2176
        %v2179 = vmul.f32 %v2174, %v2176
        %v2181 = vperm.slane %v2124, 0
        %v2183 = vadd.f32 %v2178, %v2181
        %v2184 = vadd.f32 %v2179, %v2181
        %v2185 = vpack.c.bf16 %v2184, %v2183
        %v2186 = vld [vmem:[%s1316] sm:$0xff]
        %v2187 = vld [vmem:[%s1316 + $0x8] sm:$0xf]
        %v2188 = vld [vmem:[%s1316 + $0xc] sm:$0xff]
        %v2189 = vld [vmem:[%s1316 + $0x14] sm:$0xf]
        %v2190 = vld [vmem:[%s1316 + $0x18] sm:$0xff]
        %v2191 = vld [vmem:[%s1316 + $0x20] sm:$0xf]
        %v2192 = vld [vmem:[%s1316 + $0x24] sm:$0xff]
        %v2193 = vld [vmem:[%s1316 + $0x2c] sm:$0xf]
        %v2194 = vld [vmem:[%s1316 + $0x30] sm:$0xff]
        %v2195 = vld [vmem:[%s1316 + $0x38] sm:$0xf]
        %v2196 = vld [vmem:[%s1316 + $0x3c] sm:$0xff]
        %v2197 = vld [vmem:[%s1316 + $0x44] sm:$0xf]
        %v2198 = vld [vmem:[%s1316 + $0x48] sm:$0xff]
        %v2199 = vld [vmem:[%s1316 + $0x50] sm:$0xf]
        %v2200 = vld [vmem:[%s1316 + $0x54] sm:$0xff]
        %v2201 = vld [vmem:[%s1316 + $0x5c] sm:$0xf]
        %v2202 = vld [vmem:[%s1316 + $0x60] sm:$0xff]
        %v2203 = vld [vmem:[%s1316 + $0x68] sm:$0xf]
        %v2204 = vld [vmem:[%s1316 + $0x6c] sm:$0xff]
        %v2205 = vld [vmem:[%s1316 + $0x74] sm:$0xf]
        %v2206 = vld [vmem:[%s1316 + $0x78] sm:$0xff]
        %v2207 = vld [vmem:[%s1316 + $0x80] sm:$0xf]
        %v2208 = vld [vmem:[%s1316 + $0x84] sm:$0xff]
        %v2209 = vld [vmem:[%s1316 + $0x8c] sm:$0xf]
        %v2210 = vld [vmem:[%s1316 + $0x90] sm:$0xff]
        %v2211 = vld [vmem:[%s1316 + $0x98] sm:$0xf]
        %v2212 = vld [vmem:[%s1316 + $0x9c] sm:$0xff]
        %v2213 = vld [vmem:[%s1316 + $0xa4] sm:$0xf]
        %v2214 = vld [vmem:[%s1316 + $0xa8] sm:$0xff]
        %v2215 = vld [vmem:[%s1316 + $0xb0] sm:$0xf]
        %v2216 = vld [vmem:[%s1316 + $0xb4] sm:$0xff]
        %v2217 = vld [vmem:[%s1316 + $0xbc] sm:$0xf]
        %v2218 = vld [vmem:[%s1326] sm:$0x7]
        %v2220 = vperm.slane %v2218, 0
        %v2221 = vperm.slane %v2218, 1
        %v2222 = vperm.slane %v2218, 2
        %v2258 = vunpack.c.l.b16 %v2186
        %v2259 = vunpack.c.h.b16 %v2186
        %v2260 = vunpack.c.l.b16 %v2187
        %v2261 = vunpack.c.l.b16 %v2188
        %v2262 = vunpack.c.h.b16 %v2188
        %v2263 = vunpack.c.l.b16 %v2189
        %v2264 = vunpack.c.l.b16 %v2190
        %v2265 = vunpack.c.h.b16 %v2190
        %v2266 = vunpack.c.l.b16 %v2191
        %v2267 = vunpack.c.l.b16 %v2192
        %v2268 = vunpack.c.h.b16 %v2192
        %v2269 = vunpack.c.l.b16 %v2193
        %v2270 = vunpack.c.l.b16 %v2194
        %v2271 = vunpack.c.h.b16 %v2194
        %v2272 = vunpack.c.l.b16 %v2195
        %v2273 = vunpack.c.l.b16 %v2196
        %v2274 = vunpack.c.h.b16 %v2196
        %v2275 = vunpack.c.l.b16 %v2197
        %v2276 = vunpack.c.l.b16 %v2198
        %v2277 = vunpack.c.h.b16 %v2198
        %v2278 = vunpack.c.l.b16 %v2199
        %v2279 = vunpack.c.l.b16 %v2200
        %v2280 = vunpack.c.h.b16 %v2200
        %v2281 = vunpack.c.l.b16 %v2201
        %v2282 = vunpack.c.l.b16 %v2202
        %v2283 = vunpack.c.h.b16 %v2202
        %v2284 = vunpack.c.l.b16 %v2203
        %v2285 = vunpack.c.l.b16 %v2204
        %v2286 = vunpack.c.h.b16 %v2204
        %v2287 = vunpack.c.l.b16 %v2205
        %v2288 = vunpack.c.l.b16 %v2206
        %v2289 = vunpack.c.h.b16 %v2206
        %v2290 = vunpack.c.l.b16 %v2207
        %v2291 = vunpack.c.l.b16 %v2208
        %v2292 = vunpack.c.h.b16 %v2208
        %v2293 = vunpack.c.l.b16 %v2209
        %v2294 = vunpack.c.l.b16 %v2210
        %v2295 = vunpack.c.h.b16 %v2210
        %v2296 = vunpack.c.l.b16 %v2211
        %v2297 = vunpack.c.l.b16 %v2212
        %v2298 = vunpack.c.h.b16 %v2212
        %v2299 = vunpack.c.l.b16 %v2213
        %v2300 = vunpack.c.l.b16 %v2214
        %v2301 = vunpack.c.h.b16 %v2214
        %v2302 = vunpack.c.l.b16 %v2215
        %v2303 = vunpack.c.l.b16 %v2216
        %v2304 = vunpack.c.h.b16 %v2216
        %v2305 = vunpack.c.l.b16 %v2217
        %v2306 = vpack.c.b16 %v2261, %v2258
        %v2307 = vpack.c.b16 %v2262, %v2259
        %v2308 = vpack.c.b16 %v2263, %v2260
        %v2309 = vpack.c.b16 %v2267, %v2264
        %v2310 = vpack.c.b16 %v2268, %v2265
        %v2311 = vpack.c.b16 %v2269, %v2266
        %v2312 = vpack.c.b16 %v2273, %v2270
        %v2313 = vpack.c.b16 %v2274, %v2271
        %v2314 = vpack.c.b16 %v2275, %v2272
        %v2315 = vpack.c.b16 %v2279, %v2276
        %v2316 = vpack.c.b16 %v2280, %v2277
        %v2317 = vpack.c.b16 %v2281, %v2278
        %v2318 = vpack.c.b16 %v2285, %v2282
        %v2319 = vpack.c.b16 %v2286, %v2283
        %v2320 = vpack.c.b16 %v2287, %v2284
        %v2321 = vpack.c.b16 %v2291, %v2288
        %v2322 = vpack.c.b16 %v2292, %v2289
        %v2323 = vpack.c.b16 %v2293, %v2290
        %v2324 = vpack.c.b16 %v2297, %v2294
        %v2325 = vpack.c.b16 %v2298, %v2295
        %v2326 = vpack.c.b16 %v2299, %v2296
        %v2327 = vpack.c.b16 %v2303, %v2300
        %v2328 = vpack.c.b16 %v2304, %v2301
        %v2329 = vpack.c.b16 %v2305, %v2302
        %2354 = vmatpush.bf16.msra.mxu0 %v2327
        %2355 = vmatpush.bf16.msra.mxu0 %v2324
        %2356 = vmatpush.bf16.msra.mxu0 %v2321
        %2357 = vmatpush.bf16.msra.mxu0 %v2318
        %2358 = vmatpush.bf16.msra.mxu0 %v2315
        %2359 = vmatpush.bf16.msra.mxu0 %v2312
        %2360 = vmatpush.bf16.msra.mxu0 %v2309
        %2361 = vmatpush.bf16.msra.mxu0 %v2306
        %2362 = vmatmul.bf16.gmra.mxu0 %v2185
        %v2363 = vpop.f32.mrf.mxu0
        %v2364 = vadd.f32 %v2220, %v2363
        %v2365 = vpop.f32.mrf.mxu0
        %v2366 = vadd.f32 %v2220, %v2365
        %2367 = vdwg.mxu0
        %2368 = vmatpush.bf16.msra.mxu0 %v2328
        %2369 = vmatpush.bf16.msra.mxu0 %v2325
        %2370 = vmatpush.bf16.msra.mxu0 %v2322
        %2371 = vmatpush.bf16.msra.mxu0 %v2319
        %2372 = vmatpush.bf16.msra.mxu0 %v2316
        %2373 = vmatpush.bf16.msra.mxu0 %v2313
        %2374 = vmatpush.bf16.msra.mxu0 %v2310
        %2375 = vmatpush.bf16.msra.mxu0 %v2307
        %2376 = vmatmul.bf16.gmra.mxu0 %v2185
        %v2377 = vpop.f32.mrf.mxu0
        %v2378 = vadd.f32 %v2221, %v2377
        %v2379 = vpop.f32.mrf.mxu0
        %v2380 = vadd.f32 %v2221, %v2379
        %2381 = vdwg.mxu0
        %2382 = vmatpush.bf16.msra.mxu0 %v2329
        %2383 = vmatpush.bf16.msra.mxu0 %v2326
        %2384 = vmatpush.bf16.msra.mxu0 %v2323
        %2385 = vmatpush.bf16.msra.mxu0 %v2320
        %2386 = vmatpush.bf16.msra.mxu0 %v2317
        %2387 = vmatpush.bf16.msra.mxu0 %v2314
        %2388 = vmatpush.bf16.msra.mxu0 %v2311
        %2389 = vmatpush.bf16.msra.mxu0 %v2308
        %2390 = vmatmul.bf16.gmra.mxu0 %v2185
        %v2391 = vpop.f32.mrf.mxu0
        %v2392 = vadd.f32 %v2222, %v2391
        %v2393 = vpop.f32.mrf.mxu0
        %v2394 = vadd.f32 %v2222, %v2393
        %2395 = vdwg.mxu0
        %v2396 = vld [vmem:[#allocation12] sm:$0xff]
        %v2397 = vld [vmem:[#allocation12 + $0x8] sm:$0x3]
        %v2398 = vpack.c.bf16 %v2366, %v2364
        %v2399 = vpack.c.bf16 %v2380, %v2378
        %v2400 = vpack.c.bf16 %v2394, %v2392
        %vm2401 = vcmask 261120
        %v2403 = vsel %vm2401, %v2398, 0
        %v2406 = vsel %vm2401, %v2399, 0
        %2408 = vmatpush.bf16.xpose.msra.mxu0 0
        %2409 = vmatpush.bf16.xpose.msra.mxu0 0
        %2410 = vmatpush.bf16.xpose.msra.mxu0 0
        %2411 = vmatpush.bf16.xpose.msra.mxu0 0
        %2412 = vmatpush.bf16.xpose.msra.mxu0 0
        %2413 = vmatpush.bf16.xpose.msra.mxu0 0
        %2414 = vmatpush.bf16.xpose.msra.mxu0 0
        %2415 = vmatpush.bf16.xpose.msra.mxu0 %v2406
        %2416 = vmatmul.bf16.gmra.mxu0 %v2403
        %v2417 = vpop.f32.mrf.mxu0
        %v2418 = vadd.f32 0.0, %v2417
        %v2419 = vpop.f32.mrf.mxu0
        %v2420 = vadd.f32 0.0, %v2419
        %2421 = vdwg.mxu0
        %v2422 = vmul.f32 %v2418, 0.17677669
        %v2423 = vmul.f32 %v2420, 0.17677669
        %v2424 = vadd.f32 %v2422, %v2396
        %v2425 = vadd.f32 %v2423, %v2397
        %vm2426 = vcmask 80896
        %v2427 = vsel %vm2426, %v2424, -inf
        %2428 = vmax.xlane.f32.xlu0 %v2427
        %v2429 = vpop.xlane.xlu0 %2428
        %vm2430 = vcmask 74752
        %v2431 = vsel %vm2430, %v2425, -inf
        %2432 = vmax.xlane.f32.xlu0 %v2431
        %v2433 = vpop.xlane.xlu0 %2432
        %v2434 = vsub.f32 %v2424, %v2429
        %v2435 = vsub.f32 %v2425, %v2433
        %v2436 = vmul.f32 %v2434, 1.442695
        %v2437 = vpow.pop %v2436
        %v2438 = vmul.f32 %v2435, 1.442695
        %v2439 = vpow.pop %v2438
        %v2440 = vsel %vm2426, %v2437, 0.0
        %2441 = vadd.xlane.f32.xlu0 %v2440
        %v2442 = vpop.xlane.xlu0 %2441
        %v2443 = vsel %vm2430, %v2439, 0.0
        %2444 = vadd.xlane.f32.xlu0 %v2443
        %v2445 = vpop.xlane.xlu0 %2444
        %v2446 = vrcp.pop %v2442
        %v2447 = vrcp.pop %v2445
        %v2448 = vmul.f32 %v2437, %v2446
        %v2449 = vmul.f32 %v2439, %v2447
        %v2450 = vpack.c.bf16 %v2449, %v2448
        %v2452 = vsel %vm2426, %v2450, 0
        %vm2454 = vcmask 1044480
        %v2456 = vsel %vm2454, %v2400, 0
        %2458 = vmatpush.bf16.msra.mxu0 0
        %2459 = vmatpush.bf16.msra.mxu0 0
        %2460 = vmatpush.bf16.msra.mxu0 0
        %2461 = vmatpush.bf16.msra.mxu0 0
        %2462 = vmatpush.bf16.msra.mxu0 0
        %2463 = vmatpush.bf16.msra.mxu0 0
        %2464 = vmatpush.bf16.msra.mxu0 0
        %2465 = vmatpush.bf16.msra.mxu0 %v2456
        %2466 = vmatmul.bf16.gmra.mxu0 %v2452
        %v2467 = vpop.f32.mrf.mxu0
        %v2468 = vadd.f32 0.0, %v2467
        %v2469 = vpop.f32.mrf.mxu0
        %v2470 = vadd.f32 0.0, %v2469
        %2471 = vdwg.mxu0
        %2473 = vrot.lane.b32.xlu0 %v2398, 96
        %v2474 = vpop.permute.xlu0 %2473
        %2476 = vrot.lane.b32.xlu0 %v2399, 96
        %v2477 = vpop.permute.xlu0 %2476
        %v2479 = vsel %vm2401, %v2474, 0
        %v2482 = vsel %vm2401, %v2477, 0
        %2484 = vmatpush.bf16.xpose.msra.mxu0 0
        %2485 = vmatpush.bf16.xpose.msra.mxu0 0
        %2486 = vmatpush.bf16.xpose.msra.mxu0 0
        %2487 = vmatpush.bf16.xpose.msra.mxu0 0
        %2488 = vmatpush.bf16.xpose.msra.mxu0 0
        %2489 = vmatpush.bf16.xpose.msra.mxu0 0
        %2490 = vmatpush.bf16.xpose.msra.mxu0 0
        %2491 = vmatpush.bf16.xpose.msra.mxu0 %v2482
        %2492 = vmatmul.bf16.gmra.mxu0 %v2479
        %v2493 = vpop.f32.mrf.mxu0
        %v2494 = vadd.f32 0.0, %v2493
        %v2495 = vpop.f32.mrf.mxu0
        %v2496 = vadd.f32 0.0, %v2495
        %2497 = vdwg.mxu0
        %v2498 = vmul.f32 %v2494, 0.17677669
        %v2499 = vmul.f32 %v2496, 0.17677669
        %v2500 = vadd.f32 %v2498, %v2396
        %v2501 = vadd.f32 %v2499, %v2397
        %v2502 = vsel %vm2426, %v2500, -inf
        %2503 = vmax.xlane.f32.xlu0 %v2502
        %v2504 = vpop.xlane.xlu0 %2503
        %v2505 = vsel %vm2430, %v2501, -inf
        %2506 = vmax.xlane.f32.xlu0 %v2505
        %v2507 = vpop.xlane.xlu0 %2506
        %v2508 = vsub.f32 %v2500, %v2504
        %v2509 = vsub.f32 %v2501, %v2507
        %v2510 = vmul.f32 %v2508, 1.442695
        %v2511 = vpow.pop %v2510
        %v2512 = vmul.f32 %v2509, 1.442695
        %v2513 = vpow.pop %v2512
        %v2514 = vsel %vm2426, %v2511, 0.0
        %2515 = vadd.xlane.f32.xlu0 %v2514
        %v2516 = vpop.xlane.xlu0 %2515
        %v2517 = vsel %vm2430, %v2513, 0.0
        %2518 = vadd.xlane.f32.xlu0 %v2517
        %v2519 = vpop.xlane.xlu0 %2518
        %v2520 = vrcp.pop %v2516
        %v2521 = vrcp.pop %v2519
        %v2522 = vmul.f32 %v2511, %v2520
        %v2523 = vmul.f32 %v2513, %v2521
        %v2524 = vpack.c.bf16 %v2523, %v2522
        %2526 = vrot.lane.b32.xlu0 %v2400, 96
        %v2527 = vpop.permute.xlu0 %2526
        %v2529 = vsel %vm2426, %v2524, 0
        %v2532 = vsel %vm2454, %v2527, 0
        %2534 = vmatpush.bf16.msra.mxu0 0
        %2535 = vmatpush.bf16.msra.mxu0 0
        %2536 = vmatpush.bf16.msra.mxu0 0
        %2537 = vmatpush.bf16.msra.mxu0 0
        %2538 = vmatpush.bf16.msra.mxu0 0
        %2539 = vmatpush.bf16.msra.mxu0 0
        %2540 = vmatpush.bf16.msra.mxu0 0
        %2541 = vmatpush.bf16.msra.mxu0 %v2532
        %2542 = vmatmul.bf16.gmra.mxu0 %v2529
        %v2543 = vpop.f32.mrf.mxu0
        %v2544 = vadd.f32 0.0, %v2543
        %v2545 = vpop.f32.mrf.mxu0
        %v2546 = vadd.f32 0.0, %v2545
        %2547 = vdwg.mxu0
        %2548 = vrot.lane.b32.xlu0 %v2398, 64
        %v2549 = vpop.permute.xlu0 %2548
        %2550 = vrot.lane.b32.xlu0 %v2399, 64
        %v2551 = vpop.permute.xlu0 %2550
        %v2553 = vsel %vm2401, %v2549, 0
        %v2556 = vsel %vm2401, %v2551, 0
        %2558 = vmatpush.bf16.xpose.msra.mxu0 0
        %2559 = vmatpush.bf16.xpose.msra.mxu0 0
        %2560 = vmatpush.bf16.xpose.msra.mxu0 0
        %2561 = vmatpush.bf16.xpose.msra.mxu0 0
        %2562 = vmatpush.bf16.xpose.msra.mxu0 0
        %2563 = vmatpush.bf16.xpose.msra.mxu0 0
        %2564 = vmatpush.bf16.xpose.msra.mxu0 0
        %2565 = vmatpush.bf16.xpose.msra.mxu0 %v2556
        %2566 = vmatmul.bf16.gmra.mxu0 %v2553
        %v2567 = vpop.f32.mrf.mxu0
        %v2568 = vadd.f32 0.0, %v2567
        %v2569 = vpop.f32.mrf.mxu0
        %v2570 = vadd.f32 0.0, %v2569
        %2571 = vdwg.mxu0
        %v2572 = vmul.f32 %v2568, 0.17677669
        %v2573 = vmul.f32 %v2570, 0.17677669
        %v2574 = vadd.f32 %v2572, %v2396
        %v2575 = vadd.f32 %v2573, %v2397
        %v2576 = vsel %vm2426, %v2574, -inf
        %2577 = vmax.xlane.f32.xlu0 %v2576
        %v2578 = vpop.xlane.xlu0 %2577
        %v2579 = vsel %vm2430, %v2575, -inf
        %2580 = vmax.xlane.f32.xlu0 %v2579
        %v2581 = vpop.xlane.xlu0 %2580
        %v2582 = vsub.f32 %v2574, %v2578
        %v2583 = vsub.f32 %v2575, %v2581
        %v2584 = vmul.f32 %v2582, 1.442695
        %v2585 = vpow.pop %v2584
        %v2586 = vmul.f32 %v2583, 1.442695
        %v2587 = vpow.pop %v2586
        %v2588 = vsel %vm2426, %v2585, 0.0
        %2589 = vadd.xlane.f32.xlu0 %v2588
        %v2590 = vpop.xlane.xlu0 %2589
        %v2591 = vsel %vm2430, %v2587, 0.0
        %2592 = vadd.xlane.f32.xlu0 %v2591
        %v2593 = vpop.xlane.xlu0 %2592
        %v2594 = vrcp.pop %v2590
        %v2595 = vrcp.pop %v2593
        %v2596 = vmul.f32 %v2585, %v2594
        %v2597 = vmul.f32 %v2587, %v2595
        %v2598 = vpack.c.bf16 %v2597, %v2596
        %2599 = vrot.lane.b32.xlu0 %v2400, 64
        %v2600 = vpop.permute.xlu0 %2599
        %v2602 = vsel %vm2426, %v2598, 0
        %v2605 = vsel %vm2454, %v2600, 0
        %2607 = vmatpush.bf16.msra.mxu0 0
        %2608 = vmatpush.bf16.msra.mxu0 0
        %2609 = vmatpush.bf16.msra.mxu0 0
        %2610 = vmatpush.bf16.msra.mxu0 0
        %2611 = vmatpush.bf16.msra.mxu0 0
        %2612 = vmatpush.bf16.msra.mxu0 0
        %2613 = vmatpush.bf16.msra.mxu0 0
        %2614 = vmatpush.bf16.msra.mxu0 %v2605
        %2615 = vmatmul.bf16.gmra.mxu0 %v2602
        %v2616 = vpop.f32.mrf.mxu0
        %v2617 = vadd.f32 0.0, %v2616
        %v2618 = vpop.f32.mrf.mxu0
        %v2619 = vadd.f32 0.0, %v2618
        %2620 = vdwg.mxu0
        %2621 = vrot.lane.b32.xlu0 %v2398, 32
        %v2622 = vpop.permute.xlu0 %2621
        %2623 = vrot.lane.b32.xlu0 %v2399, 32
        %v2624 = vpop.permute.xlu0 %2623
        %v2626 = vsel %vm2401, %v2622, 0
        %v2629 = vsel %vm2401, %v2624, 0
        %2631 = vmatpush.bf16.xpose.msra.mxu0 0
        %2632 = vmatpush.bf16.xpose.msra.mxu0 0
        %2633 = vmatpush.bf16.xpose.msra.mxu0 0
        %2634 = vmatpush.bf16.xpose.msra.mxu0 0
        %2635 = vmatpush.bf16.xpose.msra.mxu0 0
        %2636 = vmatpush.bf16.xpose.msra.mxu0 0
        %2637 = vmatpush.bf16.xpose.msra.mxu0 0
        %2638 = vmatpush.bf16.xpose.msra.mxu0 %v2629
        %2639 = vmatmul.bf16.gmra.mxu0 %v2626
        %v2640 = vpop.f32.mrf.mxu0
        %v2641 = vadd.f32 0.0, %v2640
        %v2642 = vpop.f32.mrf.mxu0
        %v2643 = vadd.f32 0.0, %v2642
        %2644 = vdwg.mxu0
        %v2645 = vmul.f32 %v2641, 0.17677669
        %v2646 = vmul.f32 %v2643, 0.17677669
        %v2647 = vadd.f32 %v2645, %v2396
        %v2648 = vadd.f32 %v2646, %v2397
        %v2649 = vsel %vm2426, %v2647, -inf
        %2650 = vmax.xlane.f32.xlu0 %v2649
        %v2651 = vpop.xlane.xlu0 %2650
        %v2652 = vsel %vm2430, %v2648, -inf
        %2653 = vmax.xlane.f32.xlu0 %v2652
        %v2654 = vpop.xlane.xlu0 %2653
        %v2655 = vsub.f32 %v2647, %v2651
        %v2656 = vsub.f32 %v2648, %v2654
        %v2657 = vmul.f32 %v2655, 1.442695
        %v2658 = vpow.pop %v2657
        %v2659 = vmul.f32 %v2656, 1.442695
        %v2660 = vpow.pop %v2659
        %v2661 = vsel %vm2426, %v2658, 0.0
        %2662 = vadd.xlane.f32.xlu0 %v2661
        %v2663 = vpop.xlane.xlu0 %2662
        %v2664 = vsel %vm2430, %v2660, 0.0
        %2665 = vadd.xlane.f32.xlu0 %v2664
        %v2666 = vpop.xlane.xlu0 %2665
        %v2667 = vrcp.pop %v2663
        %v2668 = vrcp.pop %v2666
        %v2669 = vmul.f32 %v2658, %v2667
        %v2670 = vmul.f32 %v2660, %v2668
        %v2671 = vpack.c.bf16 %v2670, %v2669
        %2672 = vrot.lane.b32.xlu0 %v2400, 32
        %v2673 = vpop.permute.xlu0 %2672
        %v2675 = vsel %vm2426, %v2671, 0
        %v2678 = vsel %vm2454, %v2673, 0
        %2680 = vmatpush.bf16.msra.mxu0 0
        %2681 = vmatpush.bf16.msra.mxu0 0
        %2682 = vmatpush.bf16.msra.mxu0 0
        %2683 = vmatpush.bf16.msra.mxu0 0
        %2684 = vmatpush.bf16.msra.mxu0 0
        %2685 = vmatpush.bf16.msra.mxu0 0
        %2686 = vmatpush.bf16.msra.mxu0 0
        %2687 = vmatpush.bf16.msra.mxu0 %v2678
        %2688 = vmatmul.bf16.gmra.mxu0 %v2675
        %v2689 = vpop.f32.mrf.mxu0
        %v2690 = vadd.f32 0.0, %v2689
        %v2691 = vpop.f32.mrf.mxu0
        %v2692 = vadd.f32 0.0, %v2691
        %2693 = vdwg.mxu0
        %2696 = vrot.lane.b32.xlu0 %v2544, 32
        %v2697 = vpop.permute.xlu0 %2696
        %2698 = vrot.lane.b32.xlu0 %v2546, 32
        %v2699 = vpop.permute.xlu0 %2698
        %2704 = vrot.lane.b32.xlu0 %v2617, 64
        %v2705 = vpop.permute.xlu0 %2704
        %2706 = vrot.lane.b32.xlu0 %v2619, 64
        %v2707 = vpop.permute.xlu0 %2706
        %2712 = vrot.lane.b32.xlu0 %v2690, 96
        %v2713 = vpop.permute.xlu0 %2712
        %2714 = vrot.lane.b32.xlu0 %v2692, 96
        %v2715 = vpop.permute.xlu0 %2714
        %v2718 = vsel %vm2401, %v2468, %v2697
        %v2719 = vsel %vm2401, %v2470, %v2699
        %vm2720 = vcmask 523264
        %v2721 = vsel %vm2720, %v2718, %v2705
        %v2722 = vsel %vm2720, %v2719, %v2707
        %vm2723 = vcmask 785408
        %v2724 = vsel %vm2723, %v2721, %v2713
        %v2725 = vsel %vm2723, %v2722, %v2715
        %v2726 = vpack.c.bf16 %v2725, %v2724
        %v2727 = vld [vmem:[%s1336] sm:$0xf]
        %v2728 = vld [vmem:[%s1336 + $0x4] sm:$0xf]
        %v2729 = vld [vmem:[%s1336 + $0x8] sm:$0xf]
        %v2730 = vld [vmem:[%s1336 + $0xc] sm:$0xf]
        %v2731 = vld [vmem:[%s1336 + $0x10] sm:$0xf]
        %v2732 = vld [vmem:[%s1336 + $0x14] sm:$0xf]
        %v2733 = vld [vmem:[%s1336 + $0x18] sm:$0xf]
        %v2734 = vld [vmem:[%s1336 + $0x1c] sm:$0xf]
        %v2735 = vld [vmem:[%s1336 + $0x20] sm:$0xf]
        %v2736 = vld [vmem:[%s1336 + $0x24] sm:$0xf]
        %v2737 = vld [vmem:[%s1336 + $0x28] sm:$0xf]
        %v2738 = vld [vmem:[%s1336 + $0x2c] sm:$0xf]
        %v2739 = vld [vmem:[%s1336 + $0x30] sm:$0xf]
        %v2740 = vld [vmem:[%s1336 + $0x34] sm:$0xf]
        %v2741 = vld [vmem:[%s1336 + $0x38] sm:$0xf]
        %v2742 = vld [vmem:[%s1336 + $0x3c] sm:$0xf]
        %v2743 = vld [vmem:[%s1345] sm:$0x1]
        %v2745 = vperm.slane %v2743, 0
        %v2763 = vunpack.c.l.b16 %v2727
        %v2764 = vunpack.c.l.b16 %v2728
        %v2765 = vunpack.c.l.b16 %v2729
        %v2766 = vunpack.c.l.b16 %v2730
        %v2767 = vunpack.c.l.b16 %v2731
        %v2768 = vunpack.c.l.b16 %v2732
        %v2769 = vunpack.c.l.b16 %v2733
        %v2770 = vunpack.c.l.b16 %v2734
        %v2771 = vunpack.c.l.b16 %v2735
        %v2772 = vunpack.c.l.b16 %v2736
        %v2773 = vunpack.c.l.b16 %v2737
        %v2774 = vunpack.c.l.b16 %v2738
        %v2775 = vunpack.c.l.b16 %v2739
        %v2776 = vunpack.c.l.b16 %v2740
        %v2777 = vunpack.c.l.b16 %v2741
        %v2778 = vunpack.c.l.b16 %v2742
        %v2779 = vpack.c.b16 %v2764, %v2763
        %v2780 = vpack.c.b16 %v2766, %v2765
        %v2781 = vpack.c.b16 %v2768, %v2767
        %v2782 = vpack.c.b16 %v2770, %v2769
        %v2783 = vpack.c.b16 %v2772, %v2771
        %v2784 = vpack.c.b16 %v2774, %v2773
        %v2785 = vpack.c.b16 %v2776, %v2775
        %v2786 = vpack.c.b16 %v2778, %v2777
        %2795 = vmatpush.bf16.msra.mxu0 %v2786
        %2796 = vmatpush.bf16.msra.mxu0 %v2785
        %2797 = vmatpush.bf16.msra.mxu0 %v2784
        %2798 = vmatpush.bf16.msra.mxu0 %v2783
        %2799 = vmatpush.bf16.msra.mxu0 %v2782
        %2800 = vmatpush.bf16.msra.mxu0 %v2781
        %2801 = vmatpush.bf16.msra.mxu0 %v2780
        %2802 = vmatpush.bf16.msra.mxu0 %v2779
        %2803 = vmatmul.bf16.gmra.mxu0 %v2726
        %v2804 = vpop.f32.mrf.mxu0
        %v2805 = vadd.f32 %v2745, %v2804
        %v2806 = vpop.f32.mrf.mxu0
        %v2807 = vadd.f32 %v2745, %v2806
        %2808 = vdwg.mxu0
        %v2809 = vadd.f32 %v2121, %v2805
        %v2810 = vadd.f32 %v2122, %v2807
        %v2811 = vld [vmem:[%s1354] sm:$0x1]
        %v2812 = vld [vmem:[%s1363] sm:$0x1]
        %2813 = vadd.xlane.f32.xlu0 %v2809
        %v2814 = vpop.xlane.xlu0 %2813
        %v2815 = vsel %vm2127, %v2810, 0.0
        %2816 = vadd.xlane.f32.xlu0 %v2815
        %v2817 = vpop.xlane.xlu0 %2816
        %v2818 = vmul.f32 %v2814, %v2137
        %v2819 = vmul.f32 %v2817, %v2137
        %v2820 = vsub.f32 %v2809, %v2818
        %v2821 = vsub.f32 %v2810, %v2819
        %v2822 = vmul.f32 %v2820, %v2820
        %v2823 = vmul.f32 %v2821, %v2821
        %2824 = vadd.xlane.f32.xlu0 %v2822
        %v2825 = vpop.xlane.xlu0 %2824
        %v2826 = vsel %vm2127, %v2823, 0.0
        %2827 = vadd.xlane.f32.xlu0 %v2826
        %v2828 = vpop.xlane.xlu0 %2827
        %v2829 = vmul.f32 %v2825, %v2137
        %v2830 = vmul.f32 %v2828, %v2137
        %v2831 = vadd.f32 %v2829, 1e-05
        %v2832 = vadd.f32 %v2830, 1e-05
        %v2833 = vrsqrt.pop %v2831
        %v2834 = vmul.f32 %v2833, %v2831
        %v2835 = vmul.f32 %v2834, %v2833
        %v2836 = vmul.f32 0.5, %v2835
        %v2837 = vsub.f32 1.5, %v2836
        %v2838 = vmul.f32 %v2833, %v2837
        %vm2839 = vweird.f32 %v2831
        %vm2840 = vweird.f32 %v2833
        %vm2841 = vmor %vm2839, %vm2840
        %v2842 = vsel %vm2841, %v2833, %v2838
        %v2843 = vrsqrt.pop %v2832
        %v2844 = vmul.f32 %v2843, %v2832
        %v2845 = vmul.f32 %v2844, %v2843
        %v2846 = vmul.f32 0.5, %v2845
        %v2847 = vsub.f32 1.5, %v2846
        %v2848 = vmul.f32 %v2843, %v2847
        %vm2849 = vweird.f32 %v2832
        %vm2850 = vweird.f32 %v2843
        %vm2851 = vmor %vm2849, %vm2850
        %v2852 = vsel %vm2851, %v2843, %v2848
        %v2853 = vmul.f32 %v2820, %v2842
        %v2854 = vmul.f32 %v2821, %v2852
        %v2856 = vperm.slane %v2811, 0
        %v2858 = vmul.f32 %v2853, %v2856
        %v2859 = vmul.f32 %v2854, %v2856
        %v2861 = vperm.slane %v2812, 0
        %v2863 = vadd.f32 %v2858, %v2861
        %v2864 = vadd.f32 %v2859, %v2861
        %v2865 = vpack.c.bf16 %v2864, %v2863
        %v2866 = vld [vmem:[%s1373] sm:$0xff]
        %v2867 = vld [vmem:[%s1373 + $0x8] sm:$0xff]
        %v2868 = vld [vmem:[%s1373 + $0x10] sm:$0xff]
        %v2869 = vld [vmem:[%s1373 + $0x18] sm:$0xff]
        %v2870 = vld [vmem:[%s1373 + $0x20] sm:$0xff]
        %v2871 = vld [vmem:[%s1373 + $0x28] sm:$0xff]
        %v2872 = vld [vmem:[%s1373 + $0x30] sm:$0xff]
        %v2873 = vld [vmem:[%s1373 + $0x38] sm:$0xff]
        %v2874 = vld [vmem:[%s1373 + $0x40] sm:$0xff]
        %v2875 = vld [vmem:[%s1373 + $0x48] sm:$0xff]
        %v2876 = vld [vmem:[%s1373 + $0x50] sm:$0xff]
        %v2877 = vld [vmem:[%s1373 + $0x58] sm:$0xff]
        %v2878 = vld [vmem:[%s1373 + $0x60] sm:$0xff]
        %v2879 = vld [vmem:[%s1373 + $0x68] sm:$0xff]
        %v2880 = vld [vmem:[%s1373 + $0x70] sm:$0xff]
        %v2881 = vld [vmem:[%s1373 + $0x78] sm:$0xff]
        %v2882 = vld [vmem:[%s1373 + $0x80] sm:$0xff]
        %v2883 = vld [vmem:[%s1373 + $0x88] sm:$0xff]
        %v2884 = vld [vmem:[%s1373 + $0x90] sm:$0xff]
        %v2885 = vld [vmem:[%s1373 + $0x98] sm:$0xff]
        %v2886 = vld [vmem:[%s1373 + $0xa0] sm:$0xff]
        %v2887 = vld [vmem:[%s1373 + $0xa8] sm:$0xff]
        %v2888 = vld [vmem:[%s1373 + $0xb0] sm:$0xff]
        %v2889 = vld [vmem:[%s1373 + $0xb8] sm:$0xff]
        %v2890 = vld [vmem:[%s1373 + $0xc0] sm:$0xff]
        %v2891 = vld [vmem:[%s1373 + $0xc8] sm:$0xff]
        %v2892 = vld [vmem:[%s1373 + $0xd0] sm:$0xff]
        %v2893 = vld [vmem:[%s1373 + $0xd8] sm:$0xff]
        %v2894 = vld [vmem:[%s1373 + $0xe0] sm:$0xff]
        %v2895 = vld [vmem:[%s1373 + $0xe8] sm:$0xff]
        %v2896 = vld [vmem:[%s1373 + $0xf0] sm:$0xff]
        %v2897 = vld [vmem:[%s1373 + $0xf8] sm:$0xff]
        %v2898 = vld [vmem:[%s1545] sm:$0xf]
        %v2900 = vperm.slane %v2898, 0
        %v2901 = vperm.slane %v2898, 1
        %v2902 = vperm.slane %v2898, 2
        %v2903 = vperm.slane %v2898, 3
        %v2940 = vunpack.c.l.b16 %v2866
        %v2941 = vunpack.c.h.b16 %v2866
        %v2942 = vunpack.c.l.b16 %v2867
        %v2943 = vunpack.c.h.b16 %v2867
        %v2944 = vunpack.c.l.b16 %v2868
        %v2945 = vunpack.c.h.b16 %v2868
        %v2946 = vunpack.c.l.b16 %v2869
        %v2947 = vunpack.c.h.b16 %v2869
        %v2948 = vunpack.c.l.b16 %v2870
        %v2949 = vunpack.c.h.b16 %v2870
        %v2950 = vunpack.c.l.b16 %v2871
        %v2951 = vunpack.c.h.b16 %v2871
        %v2952 = vunpack.c.l.b16 %v2872
        %v2953 = vunpack.c.h.b16 %v2872
        %v2954 = vunpack.c.l.b16 %v2873
        %v2955 = vunpack.c.h.b16 %v2873
        %v2956 = vunpack.c.l.b16 %v2874
        %v2957 = vunpack.c.h.b16 %v2874
        %v2958 = vunpack.c.l.b16 %v2875
        %v2959 = vunpack.c.h.b16 %v2875
        %v2960 = vunpack.c.l.b16 %v2876
        %v2961 = vunpack.c.h.b16 %v2876
        %v2962 = vunpack.c.l.b16 %v2877
        %v2963 = vunpack.c.h.b16 %v2877
        %v2964 = vunpack.c.l.b16 %v2878
        %v2965 = vunpack.c.h.b16 %v2878
        %v2966 = vunpack.c.l.b16 %v2879
        %v2967 = vunpack.c.h.b16 %v2879
        %v2968 = vunpack.c.l.b16 %v2880
        %v2969 = vunpack.c.h.b16 %v2880
        %v2970 = vunpack.c.l.b16 %v2881
        %v2971 = vunpack.c.h.b16 %v2881
        %v2972 = vunpack.c.l.b16 %v2882
        %v2973 = vunpack.c.h.b16 %v2882
        %v2974 = vunpack.c.l.b16 %v2883
        %v2975 = vunpack.c.h.b16 %v2883
        %v2976 = vunpack.c.l.b16 %v2884
        %v2977 = vunpack.c.h.b16 %v2884
        %v2978 = vunpack.c.l.b16 %v2885
        %v2979 = vunpack.c.h.b16 %v2885
        %v2980 = vunpack.c.l.b16 %v2886
        %v2981 = vunpack.c.h.b16 %v2886
        %v2982 = vunpack.c.l.b16 %v2887
        %v2983 = vunpack.c.h.b16 %v2887
        %v2984 = vunpack.c.l.b16 %v2888
        %v2985 = vunpack.c.h.b16 %v2888
        %v2986 = vunpack.c.l.b16 %v2889
        %v2987 = vunpack.c.h.b16 %v2889
        %v2988 = vunpack.c.l.b16 %v2890
        %v2989 = vunpack.c.h.b16 %v2890
        %v2990 = vunpack.c.l.b16 %v2891
        %v2991 = vunpack.c.h.b16 %v2891
        %v2992 = vunpack.c.l.b16 %v2892
        %v2993 = vunpack.c.h.b16 %v2892
        %v2994 = vunpack.c.l.b16 %v2893
        %v2995 = vunpack.c.h.b16 %v2893
        %v2996 = vunpack.c.l.b16 %v2894
        %v2997 = vunpack.c.h.b16 %v2894
        %v2998 = vunpack.c.l.b16 %v2895
        %v2999 = vunpack.c.h.b16 %v2895
        %v3000 = vunpack.c.l.b16 %v2896
        %v3001 = vunpack.c.h.b16 %v2896
        %v3002 = vunpack.c.l.b16 %v2897
        %v3003 = vunpack.c.h.b16 %v2897
        %v3004 = vpack.c.b16 %v2944, %v2940
        %v3005 = vpack.c.b16 %v2945, %v2941
        %v3006 = vpack.c.b16 %v2946, %v2942
        %v3007 = vpack.c.b16 %v2947, %v2943
        %v3008 = vpack.c.b16 %v2952, %v2948
        %v3009 = vpack.c.b16 %v2953, %v2949
        %v3010 = vpack.c.b16 %v2954, %v2950
        %v3011 = vpack.c.b16 %v2955, %v2951
        %v3012 = vpack.c.b16 %v2960, %v2956
        %v3013 = vpack.c.b16 %v2961, %v2957
        %v3014 = vpack.c.b16 %v2962, %v2958
        %v3015 = vpack.c.b16 %v2963, %v2959
        %v3016 = vpack.c.b16 %v2968, %v2964
        %v3017 = vpack.c.b16 %v2969, %v2965
        %v3018 = vpack.c.b16 %v2970, %v2966
        %v3019 = vpack.c.b16 %v2971, %v2967
        %v3020 = vpack.c.b16 %v2976, %v2972
        %v3021 = vpack.c.b16 %v2977, %v2973
        %v3022 = vpack.c.b16 %v2978, %v2974
        %v3023 = vpack.c.b16 %v2979, %v2975
        %v3024 = vpack.c.b16 %v2984, %v2980
        %v3025 = vpack.c.b16 %v2985, %v2981
        %v3026 = vpack.c.b16 %v2986, %v2982
        %v3027 = vpack.c.b16 %v2987, %v2983
        %v3028 = vpack.c.b16 %v2992, %v2988
        %v3029 = vpack.c.b16 %v2993, %v2989
        %v3030 = vpack.c.b16 %v2994, %v2990
        %v3031 = vpack.c.b16 %v2995, %v2991
        %v3032 = vpack.c.b16 %v3000, %v2996
        %v3033 = vpack.c.b16 %v3001, %v2997
        %v3034 = vpack.c.b16 %v3002, %v2998
        %v3035 = vpack.c.b16 %v3003, %v2999
        %3068 = vmatpush.bf16.msra.mxu0 %v3032
        %3069 = vmatpush.bf16.msra.mxu0 %v3028
        %3070 = vmatpush.bf16.msra.mxu0 %v3024
        %3071 = vmatpush.bf16.msra.mxu0 %v3020
        %3072 = vmatpush.bf16.msra.mxu0 %v3016
        %3073 = vmatpush.bf16.msra.mxu0 %v3012
        %3074 = vmatpush.bf16.msra.mxu0 %v3008
        %3075 = vmatpush.bf16.msra.mxu0 %v3004
        %3076 = vmatmul.bf16.gmra.mxu0 %v2865
        %v3077 = vpop.f32.mrf.mxu0
        %v3078 = vadd.f32 %v2900, %v3077
        %v3079 = vpop.f32.mrf.mxu0
        %v3080 = vadd.f32 %v2900, %v3079
        %3081 = vdwg.mxu0
        %3082 = vmatpush.bf16.msra.mxu0 %v3033
        %3083 = vmatpush.bf16.msra.mxu0 %v3029
        %3084 = vmatpush.bf16.msra.mxu0 %v3025
        %3085 = vmatpush.bf16.msra.mxu0 %v3021
        %3086 = vmatpush.bf16.msra.mxu0 %v3017
        %3087 = vmatpush.bf16.msra.mxu0 %v3013
        %3088 = vmatpush.bf16.msra.mxu0 %v3009
        %3089 = vmatpush.bf16.msra.mxu0 %v3005
        %3090 = vmatmul.bf16.gmra.mxu0 %v2865
        %v3091 = vpop.f32.mrf.mxu0
        %v3092 = vadd.f32 %v2901, %v3091
        %v3093 = vpop.f32.mrf.mxu0
        %v3094 = vadd.f32 %v2901, %v3093
        %3095 = vdwg.mxu0
        %3096 = vmatpush.bf16.msra.mxu0 %v3034
        %3097 = vmatpush.bf16.msra.mxu0 %v3030
        %3098 = vmatpush.bf16.msra.mxu0 %v3026
        %3099 = vmatpush.bf16.msra.mxu0 %v3022
        %3100 = vmatpush.bf16.msra.mxu0 %v3018
        %3101 = vmatpush.bf16.msra.mxu0 %v3014
        %3102 = vmatpush.bf16.msra.mxu0 %v3010
        %3103 = vmatpush.bf16.msra.mxu0 %v3006
        %3104 = vmatmul.bf16.gmra.mxu0 %v2865
        %v3105 = vpop.f32.mrf.mxu0
        %v3106 = vadd.f32 %v2902, %v3105
        %v3107 = vpop.f32.mrf.mxu0
        %v3108 = vadd.f32 %v2902, %v3107
        %3109 = vdwg.mxu0
        %3110 = vmatpush.bf16.msra.mxu0 %v3035
        %3111 = vmatpush.bf16.msra.mxu0 %v3031
        %3112 = vmatpush.bf16.msra.mxu0 %v3027
        %3113 = vmatpush.bf16.msra.mxu0 %v3023
        %3114 = vmatpush.bf16.msra.mxu0 %v3019
        %3115 = vmatpush.bf16.msra.mxu0 %v3015
        %3116 = vmatpush.bf16.msra.mxu0 %v3011
        %3117 = vmatpush.bf16.msra.mxu0 %v3007
        %3118 = vmatmul.bf16.gmra.mxu0 %v2865
        %v3119 = vpop.f32.mrf.mxu0
        %v3120 = vadd.f32 %v2903, %v3119
        %v3121 = vpop.f32.mrf.mxu0
        %v3122 = vadd.f32 %v2903, %v3121
        %3123 = vdwg.mxu0
        %v3124 = vmul.f32 %v3078, 1.702
        %v3125 = vmul.f32 %v3092, 1.702
        %v3126 = vmul.f32 %v3106, 1.702
        %v3127 = vmul.f32 %v3120, 1.702
        %v3128 = vmul.f32 %v3080, 1.702
        %v3129 = vmul.f32 %v3094, 1.702
        %v3130 = vmul.f32 %v3108, 1.702
        %v3131 = vmul.f32 %v3122, 1.702
        %v3132 = vxor.u32 %v3124, 2147483648
        %v3133 = vxor.u32 %v3125, 2147483648
        %v3134 = vxor.u32 %v3126, 2147483648
        %v3135 = vxor.u32 %v3127, 2147483648
        %v3136 = vxor.u32 %v3128, 2147483648
        %v3137 = vxor.u32 %v3129, 2147483648
        %v3138 = vxor.u32 %v3130, 2147483648
        %v3139 = vxor.u32 %v3131, 2147483648
        %v3140 = vmul.f32 %v3132, 1.442695
        %v3141 = vpow.pop %v3140
        %v3142 = vmul.f32 %v3133, 1.442695
        %v3143 = vpow.pop %v3142
        %v3144 = vmul.f32 %v3134, 1.442695
        %v3145 = vpow.pop %v3144
        %v3146 = vmul.f32 %v3135, 1.442695
        %v3147 = vpow.pop %v3146
        %v3148 = vmul.f32 %v3136, 1.442695
        %v3149 = vpow.pop %v3148
        %v3150 = vmul.f32 %v3137, 1.442695
        %v3151 = vpow.pop %v3150
        %v3152 = vmul.f32 %v3138, 1.442695
        %v3153 = vpow.pop %v3152
        %v3154 = vmul.f32 %v3139, 1.442695
        %v3155 = vpow.pop %v3154
        %v3156 = vadd.f32 %v3141, 1.0
        %v3157 = vadd.f32 %v3143, 1.0
        %v3158 = vadd.f32 %v3145, 1.0
        %v3159 = vadd.f32 %v3147, 1.0
        %v3160 = vadd.f32 %v3149, 1.0
        %v3161 = vadd.f32 %v3151, 1.0
        %v3162 = vadd.f32 %v3153, 1.0
        %v3163 = vadd.f32 %v3155, 1.0
        %v3164 = vrcp.pop %v3156
        %v3165 = vmul.f32 %v3156, %v3164
        %v3166 = vsub.f32 1.0, %v3165
        %v3167 = vmul.f32 %v3164, %v3166
        %v3168 = vadd.f32 %v3164, %v3167
        %vm3169 = vweird.f32 %v3156
        %vm3170 = vweird.f32 %v3164
        %vm3171 = vmor %vm3169, %vm3170
        %v3172 = vsel %vm3171, %v3164, %v3168
        %v3173 = vand.u32 2147483647, %v3156
        %vm3174 = vcmp.eq.f32.partialorder %v3173, 8.507059e+37
        %v3175 = vand.u32 %v3156, 2147483648
        %v3176 = vor.u32 1.1754944e-38, %v3175
        %v3177 = vsel %vm3174, %v3176, %v3172
        %v3178 = vmul.f32 1.0, %v3177
        %v3179 = vrcp.pop %v3157
        %v3180 = vmul.f32 %v3157, %v3179
        %v3181 = vsub.f32 1.0, %v3180
        %v3182 = vmul.f32 %v3179, %v3181
        %v3183 = vadd.f32 %v3179, %v3182
        %vm3184 = vweird.f32 %v3157
        %vm3185 = vweird.f32 %v3179
        %vm3186 = vmor %vm3184, %vm3185
        %v3187 = vsel %vm3186, %v3179, %v3183
        %v3188 = vand.u32 2147483647, %v3157
        %vm3189 = vcmp.eq.f32.partialorder %v3188, 8.507059e+37
        %v3190 = vand.u32 %v3157, 2147483648
        %v3191 = vor.u32 1.1754944e-38, %v3190
        %v3192 = vsel %vm3189, %v3191, %v3187
        %v3193 = vmul.f32 1.0, %v3192
        %v3194 = vrcp.pop %v3158
        %v3195 = vmul.f32 %v3158, %v3194
        %v3196 = vsub.f32 1.0, %v3195
        %v3197 = vmul.f32 %v3194, %v3196
        %v3198 = vadd.f32 %v3194, %v3197
        %vm3199 = vweird.f32 %v3158
        %vm3200 = vweird.f32 %v3194
        %vm3201 = vmor %vm3199, %vm3200
        %v3202 = vsel %vm3201, %v3194, %v3198
        %v3203 = vand.u32 2147483647, %v3158
        %vm3204 = vcmp.eq.f32.partialorder %v3203, 8.507059e+37
        %v3205 = vand.u32 %v3158, 2147483648
        %v3206 = vor.u32 1.1754944e-38, %v3205
        %v3207 = vsel %vm3204, %v3206, %v3202
        %v3208 = vmul.f32 1.0, %v3207
        %v3209 = vrcp.pop %v3159
        %v3210 = vmul.f32 %v3159, %v3209
        %v3211 = vsub.f32 1.0, %v3210
        %v3212 = vmul.f32 %v3209, %v3211
        %v3213 = vadd.f32 %v3209, %v3212
        %vm3214 = vweird.f32 %v3159
        %vm3215 = vweird.f32 %v3209
        %vm3216 = vmor %vm3214, %vm3215
        %v3217 = vsel %vm3216, %v3209, %v3213
        %v3218 = vand.u32 2147483647, %v3159
        %vm3219 = vcmp.eq.f32.partialorder %v3218, 8.507059e+37
        %v3220 = vand.u32 %v3159, 2147483648
        %v3221 = vor.u32 1.1754944e-38, %v3220
        %v3222 = vsel %vm3219, %v3221, %v3217
        %v3223 = vmul.f32 1.0, %v3222
        %v3224 = vrcp.pop %v3160
        %v3225 = vmul.f32 %v3160, %v3224
        %v3226 = vsub.f32 1.0, %v3225
        %v3227 = vmul.f32 %v3224, %v3226
        %v3228 = vadd.f32 %v3224, %v3227
        %vm3229 = vweird.f32 %v3160
        %vm3230 = vweird.f32 %v3224
        %vm3231 = vmor %vm3229, %vm3230
        %v3232 = vsel %vm3231, %v3224, %v3228
        %v3233 = vand.u32 2147483647, %v3160
        %vm3234 = vcmp.eq.f32.partialorder %v3233, 8.507059e+37
        %v3235 = vand.u32 %v3160, 2147483648
        %v3236 = vor.u32 1.1754944e-38, %v3235
        %v3237 = vsel %vm3234, %v3236, %v3232
        %v3238 = vmul.f32 1.0, %v3237
        %v3239 = vrcp.pop %v3161
        %v3240 = vmul.f32 %v3161, %v3239
        %v3241 = vsub.f32 1.0, %v3240
        %v3242 = vmul.f32 %v3239, %v3241
        %v3243 = vadd.f32 %v3239, %v3242
        %vm3244 = vweird.f32 %v3161
        %vm3245 = vweird.f32 %v3239
        %vm3246 = vmor %vm3244, %vm3245
        %v3247 = vsel %vm3246, %v3239, %v3243
        %v3248 = vand.u32 2147483647, %v3161
        %vm3249 = vcmp.eq.f32.partialorder %v3248, 8.507059e+37
        %v3250 = vand.u32 %v3161, 2147483648
        %v3251 = vor.u32 1.1754944e-38, %v3250
        %v3252 = vsel %vm3249, %v3251, %v3247
        %v3253 = vmul.f32 1.0, %v3252
        %v3254 = vrcp.pop %v3162
        %v3255 = vmul.f32 %v3162, %v3254
        %v3256 = vsub.f32 1.0, %v3255
        %v3257 = vmul.f32 %v3254, %v3256
        %v3258 = vadd.f32 %v3254, %v3257
        %vm3259 = vweird.f32 %v3162
        %vm3260 = vweird.f32 %v3254
        %vm3261 = vmor %vm3259, %vm3260
        %v3262 = vsel %vm3261, %v3254, %v3258
        %v3263 = vand.u32 2147483647, %v3162
        %vm3264 = vcmp.eq.f32.partialorder %v3263, 8.507059e+37
        %v3265 = vand.u32 %v3162, 2147483648
        %v3266 = vor.u32 1.1754944e-38, %v3265
        %v3267 = vsel %vm3264, %v3266, %v3262
        %v3268 = vmul.f32 1.0, %v3267
        %v3269 = vrcp.pop %v3163
        %v3270 = vmul.f32 %v3163, %v3269
        %v3271 = vsub.f32 1.0, %v3270
        %v3272 = vmul.f32 %v3269, %v3271
        %v3273 = vadd.f32 %v3269, %v3272
        %vm3274 = vweird.f32 %v3163
        %vm3275 = vweird.f32 %v3269
        %vm3276 = vmor %vm3274, %vm3275
        %v3277 = vsel %vm3276, %v3269, %v3273
        %v3278 = vand.u32 2147483647, %v3163
        %vm3279 = vcmp.eq.f32.partialorder %v3278, 8.507059e+37
        %v3280 = vand.u32 %v3163, 2147483648
        %v3281 = vor.u32 1.1754944e-38, %v3280
        %v3282 = vsel %vm3279, %v3281, %v3277
        %v3283 = vmul.f32 1.0, %v3282
        %v3284 = vmul.f32 %v3078, %v3178
        %v3285 = vmul.f32 %v3092, %v3193
        %v3286 = vmul.f32 %v3106, %v3208
        %v3287 = vmul.f32 %v3120, %v3223
        %v3288 = vmul.f32 %v3080, %v3238
        %v3289 = vmul.f32 %v3094, %v3253
        %v3290 = vmul.f32 %v3108, %v3268
        %v3291 = vmul.f32 %v3122, %v3283
        %v3292 = vpack.c.bf16 %v3288, %v3284
        %v3293 = vpack.c.bf16 %v3289, %v3285
        %v3294 = vpack.c.bf16 %v3290, %v3286
        %v3295 = vpack.c.bf16 %v3291, %v3287
        %v3296 = vld [vmem:[%s1383] sm:$0xf]
        %v3297 = vld [vmem:[%s1383 + $0x4] sm:$0xf]
        %v3298 = vld [vmem:[%s1383 + $0x8] sm:$0xf]
        %v3299 = vld [vmem:[%s1383 + $0xc] sm:$0xf]
        %v3300 = vld [vmem:[%s1383 + $0x10] sm:$0xf]
        %v3301 = vld [vmem:[%s1383 + $0x14] sm:$0xf]
        %v3302 = vld [vmem:[%s1383 + $0x18] sm:$0xf]
        %v3303 = vld [vmem:[%s1383 + $0x1c] sm:$0xf]
        %v3304 = vld [vmem:[%s1383 + $0x20] sm:$0xf]
        %v3305 = vld [vmem:[%s1383 + $0x24] sm:$0xf]
        %v3306 = vld [vmem:[%s1383 + $0x28] sm:$0xf]
        %v3307 = vld [vmem:[%s1383 + $0x2c] sm:$0xf]
        %v3308 = vld [vmem:[%s1383 + $0x30] sm:$0xf]
        %v3309 = vld [vmem:[%s1383 + $0x34] sm:$0xf]
        %v3310 = vld [vmem:[%s1383 + $0x38] sm:$0xf]
        %v3311 = vld [vmem:[%s1383 + $0x3c] sm:$0xf]
        %v3312 = vld [vmem:[%s1383 + $0x40] sm:$0xf]
        %v3313 = vld [vmem:[%s1383 + $0x44] sm:$0xf]
        %v3314 = vld [vmem:[%s1383 + $0x48] sm:$0xf]
        %v3315 = vld [vmem:[%s1383 + $0x4c] sm:$0xf]
        %v3316 = vld [vmem:[%s1383 + $0x50] sm:$0xf]
        %v3317 = vld [vmem:[%s1383 + $0x54] sm:$0xf]
        %v3318 = vld [vmem:[%s1383 + $0x58] sm:$0xf]
        %v3319 = vld [vmem:[%s1383 + $0x5c] sm:$0xf]
        %v3320 = vld [vmem:[%s1383 + $0x60] sm:$0xf]
        %v3321 = vld [vmem:[%s1383 + $0x64] sm:$0xf]
        %v3322 = vld [vmem:[%s1383 + $0x68] sm:$0xf]
        %v3323 = vld [vmem:[%s1383 + $0x6c] sm:$0xf]
        %v3324 = vld [vmem:[%s1383 + $0x70] sm:$0xf]
        %v3325 = vld [vmem:[%s1383 + $0x74] sm:$0xf]
        %v3326 = vld [vmem:[%s1383 + $0x78] sm:$0xf]
        %v3327 = vld [vmem:[%s1383 + $0x7c] sm:$0xf]
        %v3328 = vld [vmem:[%s1383 + $0x80] sm:$0xf]
        %v3329 = vld [vmem:[%s1383 + $0x84] sm:$0xf]
        %v3330 = vld [vmem:[%s1383 + $0x88] sm:$0xf]
        %v3331 = vld [vmem:[%s1383 + $0x8c] sm:$0xf]
        %v3332 = vld [vmem:[%s1383 + $0x90] sm:$0xf]
        %v3333 = vld [vmem:[%s1383 + $0x94] sm:$0xf]
        %v3334 = vld [vmem:[%s1383 + $0x98] sm:$0xf]
        %v3335 = vld [vmem:[%s1383 + $0x9c] sm:$0xf]
        %v3336 = vld [vmem:[%s1383 + $0xa0] sm:$0xf]
        %v3337 = vld [vmem:[%s1383 + $0xa4] sm:$0xf]
        %v3338 = vld [vmem:[%s1383 + $0xa8] sm:$0xf]
        %v3339 = vld [vmem:[%s1383 + $0xac] sm:$0xf]
        %v3340 = vld [vmem:[%s1383 + $0xb0] sm:$0xf]
        %v3341 = vld [vmem:[%s1383 + $0xb4] sm:$0xf]
        %v3342 = vld [vmem:[%s1383 + $0xb8] sm:$0xf]
        %v3343 = vld [vmem:[%s1383 + $0xbc] sm:$0xf]
        %v3344 = vld [vmem:[%s1383 + $0xc0] sm:$0xf]
        %v3345 = vld [vmem:[%s1383 + $0xc4] sm:$0xf]
        %v3346 = vld [vmem:[%s1383 + $0xc8] sm:$0xf]
        %v3347 = vld [vmem:[%s1383 + $0xcc] sm:$0xf]
        %v3348 = vld [vmem:[%s1383 + $0xd0] sm:$0xf]
        %v3349 = vld [vmem:[%s1383 + $0xd4] sm:$0xf]
        %v3350 = vld [vmem:[%s1383 + $0xd8] sm:$0xf]
        %v3351 = vld [vmem:[%s1383 + $0xdc] sm:$0xf]
        %v3352 = vld [vmem:[%s1383 + $0xe0] sm:$0xf]
        %v3353 = vld [vmem:[%s1383 + $0xe4] sm:$0xf]
        %v3354 = vld [vmem:[%s1383 + $0xe8] sm:$0xf]
        %v3355 = vld [vmem:[%s1383 + $0xec] sm:$0xf]
        %v3356 = vld [vmem:[%s1383 + $0xf0] sm:$0xf]
        %v3357 = vld [vmem:[%s1383 + $0xf4] sm:$0xf]
        %v3358 = vld [vmem:[%s1383 + $0xf8] sm:$0xf]
        %v3359 = vld [vmem:[%s1383 + $0xfc] sm:$0xf]
        %v3360 = vld [vmem:[%s1392] sm:$0x1]
        %v3362 = vperm.slane %v3360, 0
        %v3428 = vunpack.c.l.b16 %v3296
        %v3429 = vunpack.c.l.b16 %v3297
        %v3430 = vunpack.c.l.b16 %v3298
        %v3431 = vunpack.c.l.b16 %v3299
        %v3432 = vunpack.c.l.b16 %v3300
        %v3433 = vunpack.c.l.b16 %v3301
        %v3434 = vunpack.c.l.b16 %v3302
        %v3435 = vunpack.c.l.b16 %v3303
        %v3436 = vunpack.c.l.b16 %v3304
        %v3437 = vunpack.c.l.b16 %v3305
        %v3438 = vunpack.c.l.b16 %v3306
        %v3439 = vunpack.c.l.b16 %v3307
        %v3440 = vunpack.c.l.b16 %v3308
        %v3441 = vunpack.c.l.b16 %v3309
        %v3442 = vunpack.c.l.b16 %v3310
        %v3443 = vunpack.c.l.b16 %v3311
        %v3444 = vunpack.c.l.b16 %v3312
        %v3445 = vunpack.c.l.b16 %v3313
        %v3446 = vunpack.c.l.b16 %v3314
        %v3447 = vunpack.c.l.b16 %v3315
        %v3448 = vunpack.c.l.b16 %v3316
        %v3449 = vunpack.c.l.b16 %v3317
        %v3450 = vunpack.c.l.b16 %v3318
        %v3451 = vunpack.c.l.b16 %v3319
        %v3452 = vunpack.c.l.b16 %v3320
        %v3453 = vunpack.c.l.b16 %v3321
        %v3454 = vunpack.c.l.b16 %v3322
        %v3455 = vunpack.c.l.b16 %v3323
        %v3456 = vunpack.c.l.b16 %v3324
        %v3457 = vunpack.c.l.b16 %v3325
        %v3458 = vunpack.c.l.b16 %v3326
        %v3459 = vunpack.c.l.b16 %v3327
        %v3460 = vunpack.c.l.b16 %v3328
        %v3461 = vunpack.c.l.b16 %v3329
        %v3462 = vunpack.c.l.b16 %v3330
        %v3463 = vunpack.c.l.b16 %v3331
        %v3464 = vunpack.c.l.b16 %v3332
        %v3465 = vunpack.c.l.b16 %v3333
        %v3466 = vunpack.c.l.b16 %v3334
        %v3467 = vunpack.c.l.b16 %v3335
        %v3468 = vunpack.c.l.b16 %v3336
        %v3469 = vunpack.c.l.b16 %v3337
        %v3470 = vunpack.c.l.b16 %v3338
        %v3471 = vunpack.c.l.b16 %v3339
        %v3472 = vunpack.c.l.b16 %v3340
        %v3473 = vunpack.c.l.b16 %v3341
        %v3474 = vunpack.c.l.b16 %v3342
        %v3475 = vunpack.c.l.b16 %v3343
        %v3476 = vunpack.c.l.b16 %v3344
        %v3477 = vunpack.c.l.b16 %v3345
        %v3478 = vunpack.c.l.b16 %v3346
        %v3479 = vunpack.c.l.b16 %v3347
        %v3480 = vunpack.c.l.b16 %v3348
        %v3481 = vunpack.c.l.b16 %v3349
        %v3482 = vunpack.c.l.b16 %v3350
        %v3483 = vunpack.c.l.b16 %v3351
        %v3484 = vunpack.c.l.b16 %v3352
        %v3485 = vunpack.c.l.b16 %v3353
        %v3486 = vunpack.c.l.b16 %v3354
        %v3487 = vunpack.c.l.b16 %v3355
        %v3488 = vunpack.c.l.b16 %v3356
        %v3489 = vunpack.c.l.b16 %v3357
        %v3490 = vunpack.c.l.b16 %v3358
        %v3491 = vunpack.c.l.b16 %v3359
        %v3492 = vpack.c.b16 %v3429, %v3428
        %v3493 = vpack.c.b16 %v3431, %v3430
        %v3494 = vpack.c.b16 %v3433, %v3432
        %v3495 = vpack.c.b16 %v3435, %v3434
        %v3496 = vpack.c.b16 %v3437, %v3436
        %v3497 = vpack.c.b16 %v3439, %v3438
        %v3498 = vpack.c.b16 %v3441, %v3440
        %v3499 = vpack.c.b16 %v3443, %v3442
        %v3500 = vpack.c.b16 %v3445, %v3444
        %v3501 = vpack.c.b16 %v3447, %v3446
        %v3502 = vpack.c.b16 %v3449, %v3448
        %v3503 = vpack.c.b16 %v3451, %v3450
        %v3504 = vpack.c.b16 %v3453, %v3452
        %v3505 = vpack.c.b16 %v3455, %v3454
        %v3506 = vpack.c.b16 %v3457, %v3456
        %v3507 = vpack.c.b16 %v3459, %v3458
        %v3508 = vpack.c.b16 %v3461, %v3460
        %v3509 = vpack.c.b16 %v3463, %v3462
        %v3510 = vpack.c.b16 %v3465, %v3464
        %v3511 = vpack.c.b16 %v3467, %v3466
        %v3512 = vpack.c.b16 %v3469, %v3468
        %v3513 = vpack.c.b16 %v3471, %v3470
        %v3514 = vpack.c.b16 %v3473, %v3472
        %v3515 = vpack.c.b16 %v3475, %v3474
        %v3516 = vpack.c.b16 %v3477, %v3476
        %v3517 = vpack.c.b16 %v3479, %v3478
        %v3518 = vpack.c.b16 %v3481, %v3480
        %v3519 = vpack.c.b16 %v3483, %v3482
        %v3520 = vpack.c.b16 %v3485, %v3484
        %v3521 = vpack.c.b16 %v3487, %v3486
        %v3522 = vpack.c.b16 %v3489, %v3488
        %v3523 = vpack.c.b16 %v3491, %v3490
        %3556 = vmatpush.bf16.msra.mxu0 %v3499
        %3557 = vmatpush.bf16.msra.mxu0 %v3498
        %3558 = vmatpush.bf16.msra.mxu0 %v3497
        %3559 = vmatpush.bf16.msra.mxu0 %v3496
        %3560 = vmatpush.bf16.msra.mxu0 %v3495
        %3561 = vmatpush.bf16.msra.mxu0 %v3494
        %3562 = vmatpush.bf16.msra.mxu0 %v3493
        %3563 = vmatpush.bf16.msra.mxu0 %v3492
        %3564 = vmatmul.bf16.gmra.mxu0 %v3292
        %v3565 = vpop.f32.mrf.mxu0
        %v3566 = vadd.f32 %v3362, %v3565
        %v3567 = vpop.f32.mrf.mxu0
        %v3568 = vadd.f32 %v3362, %v3567
        %3569 = vdwg.mxu0
        %3570 = vmatpush.bf16.msra.mxu0 %v3507
        %3571 = vmatpush.bf16.msra.mxu0 %v3506
        %3572 = vmatpush.bf16.msra.mxu0 %v3505
        %3573 = vmatpush.bf16.msra.mxu0 %v3504
        %3574 = vmatpush.bf16.msra.mxu0 %v3503
        %3575 = vmatpush.bf16.msra.mxu0 %v3502
        %3576 = vmatpush.bf16.msra.mxu0 %v3501
        %3577 = vmatpush.bf16.msra.mxu0 %v3500
        %3578 = vmatmul.bf16.gmra.mxu0 %v3293
        %v3579 = vpop.f32.mrf.mxu0
        %v3580 = vadd.f32 %v3566, %v3579
        %v3581 = vpop.f32.mrf.mxu0
        %v3582 = vadd.f32 %v3568, %v3581
        %3583 = vdwg.mxu0
        %3584 = vmatpush.bf16.msra.mxu0 %v3515
        %3585 = vmatpush.bf16.msra.mxu0 %v3514
        %3586 = vmatpush.bf16.msra.mxu0 %v3513
        %3587 = vmatpush.bf16.msra.mxu0 %v3512
        %3588 = vmatpush.bf16.msra.mxu0 %v3511
        %3589 = vmatpush.bf16.msra.mxu0 %v3510
        %3590 = vmatpush.bf16.msra.mxu0 %v3509
        %3591 = vmatpush.bf16.msra.mxu0 %v3508
        %3592 = vmatmul.bf16.gmra.mxu0 %v3294
        %v3593 = vpop.f32.mrf.mxu0
        %v3594 = vadd.f32 %v3580, %v3593
        %v3595 = vpop.f32.mrf.mxu0
        %v3596 = vadd.f32 %v3582, %v3595
        %3597 = vdwg.mxu0
        %3598 = vmatpush.bf16.msra.mxu0 %v3523
        %3599 = vmatpush.bf16.msra.mxu0 %v3522
        %3600 = vmatpush.bf16.msra.mxu0 %v3521
        %3601 = vmatpush.bf16.msra.mxu0 %v3520
        %3602 = vmatpush.bf16.msra.mxu0 %v3519
        %3603 = vmatpush.bf16.msra.mxu0 %v3518
        %3604 = vmatpush.bf16.msra.mxu0 %v3517
        %3605 = vmatpush.bf16.msra.mxu0 %v3516
        %3606 = vmatmul.bf16.gmra.mxu0 %v3295
        %v3607 = vpop.f32.mrf.mxu0
        %v3608 = vadd.f32 %v3594, %v3607
        %v3609 = vpop.f32.mrf.mxu0
        %v3610 = vadd.f32 %v3596, %v3609
        %3611 = vdwg.mxu0
        %v3612 = vadd.f32 %v2809, %v3608
        %v3613 = vadd.f32 %v2810, %v3610
        %3614 = vst [vmem:[#allocation2] sm:$0xff] %v3612
        %3615 = vst [vmem:[#allocation2 + $0x8] sm:$0x3] %v3613
        %p3616 = scmp.eq.s32.totalorder %s105, 1
        // Predicated region
        $region221: #{tpu_custom_call.1} parent=123 // pred_check
          %p3617 = pneg %p3616
        $region222: #{tpu_custom_call.1} parent=123 // pred_check_branch
          %3619 = sbr.rel (%p3617) target = $region224
        $region223: #{tpu_custom_call.1} parent=123 // pred_region
          %v3620 = vld [vmem:[#allocation2] sm:$0xff]
          %v3621 = vld [vmem:[#allocation2 + $0x8] sm:$0x3]
          %v3622 = vld [vmem:[#allocation14] sm:$0x3]
          %v3623 = vperm.slane %v3622, 0
          %v3624 = vlaneseq
          %v3625 = vshrl.u32 %v3624, 7
          %3627 = vset.pattern.permute.xlu0 %v3625
          %3628 = vperm.xlu0 %3627, %v3623
          %v3629 = vpop.permute.xlu0 %3628
          %v3630 = vlaneseq
          %v3631 = vshrl.u32 %v3630, 7
          %v3632 = vadd.s32 %v3631, 8
          %3633 = vset.pattern.permute.xlu0 %v3632
          %3634 = vperm.xlu0 %3633, %v3623
          %v3635 = vpop.permute.xlu0 %3634
          %v3636 = vperm.slane %v3622, 1
          %v3637 = vlaneseq
          %v3638 = vshrl.u32 %v3637, 7
          %3640 = vset.pattern.permute.xlu0 %v3638
          %3641 = vperm.xlu0 %3640, %v3636
          %v3642 = vpop.permute.xlu0 %3641
          %v3643 = vlaneseq
          %v3644 = vshrl.u32 %v3643, 7
          %v3645 = vadd.s32 %v3644, 8
          %3646 = vset.pattern.permute.xlu0 %v3645
          %3647 = vperm.xlu0 %3646, %v3636
          %v3648 = vpop.permute.xlu0 %3647
          %v3649 = vmul.f32 %v3629, %v3620
          %v3650 = vmul.f32 %v3635, %v3621
          %v3651 = vmul.f32 %v3642, %v3620
          %v3652 = vmul.f32 %v3648, %v3621
          %v3653 = vsel %vm2127, %v3650, 0.0
          %v3654 = vadd.f32 %v3649, %v3653
          %v3655 = vrot.slane %v3654, 4
          %v3656 = vadd.f32 %v3654, %v3655
          %v3657 = vrot.slane %v3656, 2
          %v3658 = vadd.f32 %v3656, %v3657
          %v3659 = vrot.slane %v3658, 1
          %v3660 = vadd.f32 %v3658, %v3659
          %v3661 = vsel %vm2127, %v3652, 0.0
          %v3662 = vadd.f32 %v3651, %v3661
          %v3663 = vrot.slane %v3662, 4
          %v3664 = vadd.f32 %v3662, %v3663
          %v3665 = vrot.slane %v3664, 2
          %v3666 = vadd.f32 %v3664, %v3665
          %v3667 = vrot.slane %v3666, 1
          %v3668 = vadd.f32 %v3666, %v3667
          %vm3671 = vcmask 1041409
          %v3672 = vsel %vm3671, %v3668, %v3660
          %3674 = vst [vmem:[#allocation39] sm:$0x3] %v3672
        $region224: #{tpu_custom_call.1} parent=123 // pred_fallthru
          _
        %p3675 = scmp.eq.s32.totalorder %s105, 2
        // Predicated region
        $region225: #{tpu_custom_call.1} parent=123 // pred_check
          %p3676 = pneg %p3675
        $region226: #{tpu_custom_call.1} parent=123 // pred_check_branch
          %3678 = sbr.rel (%p3676) target = $region228
        $region227: #{tpu_custom_call.1} parent=123 // pred_region
          %v3679 = vld [vmem:[#allocation2] sm:$0xff]
          %v3680 = vld [vmem:[#allocation2 + $0x8] sm:$0x3]
          %v3681 = vld [vmem:[#allocation14] sm:$0x3]
          %v3682 = vperm.slane %v3681, 0
          %v3683 = vlaneseq
          %v3684 = vshrl.u32 %v3683, 7
          %3686 = vset.pattern.permute.xlu0 %v3684
          %3687 = vperm.xlu0 %3686, %v3682
          %v3688 = vpop.permute.xlu0 %3687
          %v3689 = vlaneseq
          %v3690 = vshrl.u32 %v3689, 7
          %v3691 = vadd.s32 %v3690, 8
          %3692 = vset.pattern.permute.xlu0 %v3691
          %3693 = vperm.xlu0 %3692, %v3682
          %v3694 = vpop.permute.xlu0 %3693
          %v3695 = vperm.slane %v3681, 1
          %v3696 = vlaneseq
          %v3697 = vshrl.u32 %v3696, 7
          %3699 = vset.pattern.permute.xlu0 %v3697
          %3700 = vperm.xlu0 %3699, %v3695
          %v3701 = vpop.permute.xlu0 %3700
          %v3702 = vlaneseq
          %v3703 = vshrl.u32 %v3702, 7
          %v3704 = vadd.s32 %v3703, 8
          %3705 = vset.pattern.permute.xlu0 %v3704
          %3706 = vperm.xlu0 %3705, %v3695
          %v3707 = vpop.permute.xlu0 %3706
          %v3708 = vmul.f32 %v3688, %v3679
          %v3709 = vmul.f32 %v3694, %v3680
          %v3710 = vmul.f32 %v3701, %v3679
          %v3711 = vmul.f32 %v3707, %v3680
          %v3712 = vsel %vm2127, %v3709, 0.0
          %v3713 = vadd.f32 %v3708, %v3712
          %v3714 = vrot.slane %v3713, 4
          %v3715 = vadd.f32 %v3713, %v3714
          %v3716 = vrot.slane %v3715, 2
          %v3717 = vadd.f32 %v3715, %v3716
          %v3718 = vrot.slane %v3717, 1
          %v3719 = vadd.f32 %v3717, %v3718
          %v3720 = vsel %vm2127, %v3711, 0.0
          %v3721 = vadd.f32 %v3710, %v3720
          %v3722 = vrot.slane %v3721, 4
          %v3723 = vadd.f32 %v3721, %v3722
          %v3724 = vrot.slane %v3723, 2
          %v3725 = vadd.f32 %v3723, %v3724
          %v3726 = vrot.slane %v3725, 1
          %v3727 = vadd.f32 %v3725, %v3726
          %vm3730 = vcmask 1041409
          %v3731 = vsel %vm3730, %v3727, %v3719
          %3733 = vst [vmem:[#allocation40] sm:$0x3] %v3731
          %v3734 = vld [vmem:[#allocation32] sm:$0x1]
          %v3735 = vld [vmem:[#allocation33] sm:$0x1]
          %v3736 = vsel %vm2127, %v3731, 0.0
          %3737 = vadd.xlane.f32.xlu0 %v3736
          %v3738 = vpop.xlane.xlu0 %3737
          %v3739 = vmul.f32 %v3738, %v2137
          %v3741 = vrot.slane %v3739, 1
          %v3744 = vsub.f32 %v3719, %v3739
          %v3745 = vsub.f32 %v3727, %v3741
          %v3746 = vmul.f32 %v3744, %v3744
          %v3747 = vmul.f32 %v3745, %v3745
          %v3750 = vrot.slane %v3747, 7
          %v3751 = vsel %vm3730, %v3750, %v3746
          %v3753 = vsel %vm2127, %v3751, 0.0
          %3754 = vadd.xlane.f32.xlu0 %v3753
          %v3755 = vpop.xlane.xlu0 %3754
          %v3756 = vmul.f32 %v3755, %v2137
          %v3757 = vadd.f32 %v3756, 1e-05
          %v3758 = vrsqrt.pop %v3757
          %v3759 = vmul.f32 %v3758, %v3757
          %v3760 = vmul.f32 %v3759, %v3758
          %v3761 = vmul.f32 0.5, %v3760
          %v3762 = vsub.f32 1.5, %v3761
          %v3763 = vmul.f32 %v3758, %v3762
          %vm3764 = vweird.f32 %v3757
          %vm3765 = vweird.f32 %v3758
          %vm3766 = vmor %vm3764, %vm3765
          %v3767 = vsel %vm3766, %v3758, %v3763
          %v3769 = vrot.slane %v3767, 1
          %v3772 = vmul.f32 %v3744, %v3767
          %v3773 = vmul.f32 %v3745, %v3769
          %v3775 = vperm.slane %v3734, 0
          %v3777 = vmul.f32 %v3772, %v3775
          %v3778 = vmul.f32 %v3773, %v3775
          %v3780 = vperm.slane %v3735, 0
          %v3782 = vadd.f32 %v3777, %v3780
          %v3783 = vadd.f32 %v3778, %v3780
          %v3784 = vpack.c.bf16 %v3782, %v3782
          %v3785 = vpack.c.bf16 %v3783, %v3783
          %v3786 = vld [vmem:[#allocation35] sm:$0xf]
          %v3787 = vld [vmem:[#allocation35 + $0x4] sm:$0xf]
          %v3788 = vld [vmem:[#allocation35 + $0x8] sm:$0xf]
          %v3789 = vld [vmem:[#allocation35 + $0xc] sm:$0xf]
          %v3790 = vld [vmem:[#allocation35 + $0x10] sm:$0xf]
          %v3791 = vld [vmem:[#allocation35 + $0x14] sm:$0xf]
          %v3792 = vld [vmem:[#allocation35 + $0x18] sm:$0xf]
          %v3793 = vld [vmem:[#allocation35 + $0x1c] sm:$0xf]
          %v3794 = vld [vmem:[#allocation35 + $0x20] sm:$0xf]
          %v3795 = vld [vmem:[#allocation35 + $0x24] sm:$0xf]
          %v3796 = vld [vmem:[#allocation35 + $0x28] sm:$0xf]
          %v3797 = vld [vmem:[#allocation35 + $0x2c] sm:$0xf]
          %v3798 = vld [vmem:[#allocation35 + $0x30] sm:$0xf]
          %v3799 = vld [vmem:[#allocation35 + $0x34] sm:$0xf]
          %v3800 = vld [vmem:[#allocation35 + $0x38] sm:$0xf]
          %v3801 = vld [vmem:[#allocation35 + $0x3c] sm:$0xf]
          %v3804 = vunpack.c.l.b16 %v3784
          %v3805 = vunpack.c.l.b16 %v3785
          %v3806 = vrot.slane %v3805, 7
          %v3807 = vsel %vm3730, %v3806, %v3804
          %v3808 = vpack.c.b16 %v3807, %v3807
          %v3826 = vunpack.c.l.b16 %v3786
          %v3827 = vunpack.c.l.b16 %v3787
          %v3828 = vunpack.c.l.b16 %v3788
          %v3829 = vunpack.c.l.b16 %v3789
          %v3830 = vunpack.c.l.b16 %v3790
          %v3831 = vunpack.c.l.b16 %v3791
          %v3832 = vunpack.c.l.b16 %v3792
          %v3833 = vunpack.c.l.b16 %v3793
          %v3834 = vunpack.c.l.b16 %v3794
          %v3835 = vunpack.c.l.b16 %v3795
          %v3836 = vunpack.c.l.b16 %v3796
          %v3837 = vunpack.c.l.b16 %v3797
          %v3838 = vunpack.c.l.b16 %v3798
          %v3839 = vunpack.c.l.b16 %v3799
          %v3840 = vunpack.c.l.b16 %v3800
          %v3841 = vunpack.c.l.b16 %v3801
          %v3842 = vpack.c.b16 %v3827, %v3826
          %v3843 = vpack.c.b16 %v3829, %v3828
          %v3844 = vpack.c.b16 %v3831, %v3830
          %v3845 = vpack.c.b16 %v3833, %v3832
          %v3846 = vpack.c.b16 %v3835, %v3834
          %v3847 = vpack.c.b16 %v3837, %v3836
          %v3848 = vpack.c.b16 %v3839, %v3838
          %v3849 = vpack.c.b16 %v3841, %v3840
          %3858 = vmatpush.bf16.msra.mxu0 %v3849
          %3859 = vmatpush.bf16.msra.mxu0 %v3848
          %3860 = vmatpush.bf16.msra.mxu0 %v3847
          %3861 = vmatpush.bf16.msra.mxu0 %v3846
          %3862 = vmatpush.bf16.msra.mxu0 %v3845
          %3863 = vmatpush.bf16.msra.mxu0 %v3844
          %3864 = vmatpush.bf16.msra.mxu0 %v3843
          %3865 = vmatpush.bf16.msra.mxu0 %v3842
          %3866 = vmatmul.bf16.gmra.mxu0 %v3808
          %v3867 = vpop.f32.mrf.mxu0
          %v3868 = vadd.f32 0.0, %v3867
          %v3869 = vpop.f32.mrf.mxu0
          %3870 = vdwg.mxu0
          %3871 = vst [vmem:[#allocation42] sm:$0x3] %v3868
          %v3872 = vld [vmem:[%s45] sm:$0xf]
          %v3873 = vperm.slane %v3872, 2
          %v3874 = vsub.f32 %v3719, %v3873
          %v3875 = vsub.f32 %v3727, %v3873
          %v3876 = vadd.f32 %v3872, 1e-05
          %v3877 = vrsqrt.pop %v3876
          %v3878 = vmul.f32 %v3877, %v3876
          %v3879 = vmul.f32 %v3878, %v3877
          %v3880 = vmul.f32 0.5, %v3879
          %v3881 = vsub.f32 1.5, %v3880
          %v3882 = vmul.f32 %v3877, %v3881
          %vm3883 = vweird.f32 %v3876
          %vm3884 = vweird.f32 %v3877
          %vm3885 = vmor %vm3883, %vm3884
          %v3886 = vsel %vm3885, %v3877, %v3882
          %v3887 = vperm.slane %v3886, 3
          %v3888 = vmul.f32 %v3874, %v3887
          %v3889 = vmul.f32 %v3875, %v3887
          %v3890 = vperm.slane %v3872, 0
          %v3891 = vmul.f32 %v3888, %v3890
          %v3892 = vmul.f32 %v3889, %v3890
          %v3893 = vperm.slane %v3872, 1
          %v3894 = vadd.f32 %v3891, %v3893
          %v3895 = vadd.f32 %v3892, %v3893
          %v3896 = vld [vmem:[%s47] sm:$0xf]
          %v3897 = vperm.slane %v3896, 2
          %v3898 = vsub.f32 %v3868, %v3897
          %v3899 = vadd.f32 %v3896, 1e-05
          %v3900 = vrsqrt.pop %v3899
          %v3901 = vmul.f32 %v3900, %v3899
          %v3902 = vmul.f32 %v3901, %v3900
          %v3903 = vmul.f32 0.5, %v3902
          %v3904 = vsub.f32 1.5, %v3903
          %v3905 = vmul.f32 %v3900, %v3904
          %vm3906 = vweird.f32 %v3899
          %vm3907 = vweird.f32 %v3900
          %vm3908 = vmor %vm3906, %vm3907
          %v3909 = vsel %vm3908, %v3900, %v3905
          %v3910 = vperm.slane %v3909, 3
          %v3911 = vmul.f32 %v3898, %v3910
          %v3912 = vperm.slane %v3896, 0
          %v3913 = vmul.f32 %v3911, %v3912
          %v3914 = vperm.slane %v3896, 1
          %v3915 = vadd.f32 %v3913, %v3914
          %v3918 = vrot.slane %v3895, 7
          %v3919 = vsel %vm3730, %v3918, %v3894
          %3921 = vst [vmem:[#allocation43] sm:$0x3] %v3919
          %3922 = vst [vmem:[#allocation45] sm:$0x3] %v3915
          %v3923 = vpack.c.bf16 %v3894, %v3894
          %v3924 = vpack.c.bf16 %v3895, %v3895
          %v3925 = vld [vmem:[#allocation36] sm:$0xf]
          %v3926 = vld [vmem:[#allocation36 + $0x4] sm:$0xf]
          %v3927 = vld [vmem:[#allocation36 + $0x8] sm:$0xf]
          %v3928 = vld [vmem:[#allocation36 + $0xc] sm:$0xf]
          %v3929 = vld [vmem:[#allocation36 + $0x10] sm:$0xf]
          %v3930 = vld [vmem:[#allocation36 + $0x14] sm:$0xf]
          %v3931 = vld [vmem:[#allocation36 + $0x18] sm:$0xf]
          %v3932 = vld [vmem:[#allocation36 + $0x1c] sm:$0xf]
          %v3933 = vld [vmem:[#allocation36 + $0x20] sm:$0xf]
          %v3934 = vld [vmem:[#allocation36 + $0x24] sm:$0xf]
          %v3935 = vld [vmem:[#allocation36 + $0x28] sm:$0xf]
          %v3936 = vld [vmem:[#allocation36 + $0x2c] sm:$0xf]
          %v3937 = vld [vmem:[#allocation36 + $0x30] sm:$0xf]
          %v3938 = vld [vmem:[#allocation36 + $0x34] sm:$0xf]
          %v3939 = vld [vmem:[#allocation36 + $0x38] sm:$0xf]
          %v3940 = vld [vmem:[#allocation36 + $0x3c] sm:$0xf]
          %v3943 = vunpack.c.l.b16 %v3923
          %v3944 = vunpack.c.l.b16 %v3924
          %v3945 = vrot.slane %v3944, 7
          %v3946 = vsel %vm3730, %v3945, %v3943
          %v3947 = vpack.c.b16 %v3946, %v3946
          %v3965 = vunpack.c.l.b16 %v3925
          %v3966 = vunpack.c.l.b16 %v3926
          %v3967 = vunpack.c.l.b16 %v3927
          %v3968 = vunpack.c.l.b16 %v3928
          %v3969 = vunpack.c.l.b16 %v3929
          %v3970 = vunpack.c.l.b16 %v3930
          %v3971 = vunpack.c.l.b16 %v3931
          %v3972 = vunpack.c.l.b16 %v3932
          %v3973 = vunpack.c.l.b16 %v3933
          %v3974 = vunpack.c.l.b16 %v3934
          %v3975 = vunpack.c.l.b16 %v3935
          %v3976 = vunpack.c.l.b16 %v3936
          %v3977 = vunpack.c.l.b16 %v3937
          %v3978 = vunpack.c.l.b16 %v3938
          %v3979 = vunpack.c.l.b16 %v3939
          %v3980 = vunpack.c.l.b16 %v3940
          %v3981 = vpack.c.b16 %v3966, %v3965
          %v3982 = vpack.c.b16 %v3968, %v3967
          %v3983 = vpack.c.b16 %v3970, %v3969
          %v3984 = vpack.c.b16 %v3972, %v3971
          %v3985 = vpack.c.b16 %v3974, %v3973
          %v3986 = vpack.c.b16 %v3976, %v3975
          %v3987 = vpack.c.b16 %v3978, %v3977
          %v3988 = vpack.c.b16 %v3980, %v3979
          %3997 = vmatpush.bf16.msra.mxu0 %v3988
          %3998 = vmatpush.bf16.msra.mxu0 %v3987
          %3999 = vmatpush.bf16.msra.mxu0 %v3986
          %4000 = vmatpush.bf16.msra.mxu0 %v3985
          %4001 = vmatpush.bf16.msra.mxu0 %v3984
          %4002 = vmatpush.bf16.msra.mxu0 %v3983
          %4003 = vmatpush.bf16.msra.mxu0 %v3982
          %4004 = vmatpush.bf16.msra.mxu0 %v3981
          %4005 = vmatmul.bf16.gmra.mxu0 %v3947
          %v4006 = vpop.f32.mrf.mxu0
          %v4007 = vadd.f32 0.0, %v4006
          %v4008 = vpop.f32.mrf.mxu0
          %4009 = vdwg.mxu0
          %4010 = vst [vmem:[#allocation46] sm:$0x3] %v4007
          %v4011 = vpack.c.bf16 %v3915, %v3915
          %v4012 = vld [vmem:[#allocation38] sm:$0xf]
          %v4013 = vld [vmem:[#allocation38 + $0x4] sm:$0xf]
          %v4014 = vld [vmem:[#allocation38 + $0x8] sm:$0xf]
          %v4015 = vld [vmem:[#allocation38 + $0xc] sm:$0xf]
          %v4016 = vld [vmem:[#allocation38 + $0x10] sm:$0xf]
          %v4017 = vld [vmem:[#allocation38 + $0x14] sm:$0xf]
          %v4018 = vld [vmem:[#allocation38 + $0x18] sm:$0xf]
          %v4019 = vld [vmem:[#allocation38 + $0x1c] sm:$0xf]
          %v4020 = vld [vmem:[#allocation38 + $0x20] sm:$0xf]
          %v4021 = vld [vmem:[#allocation38 + $0x24] sm:$0xf]
          %v4022 = vld [vmem:[#allocation38 + $0x28] sm:$0xf]
          %v4023 = vld [vmem:[#allocation38 + $0x2c] sm:$0xf]
          %v4024 = vld [vmem:[#allocation38 + $0x30] sm:$0xf]
          %v4025 = vld [vmem:[#allocation38 + $0x34] sm:$0xf]
          %v4026 = vld [vmem:[#allocation38 + $0x38] sm:$0xf]
          %v4027 = vld [vmem:[#allocation38 + $0x3c] sm:$0xf]
          %v4044 = vunpack.c.l.b16 %v4012
          %v4045 = vunpack.c.l.b16 %v4013
          %v4046 = vunpack.c.l.b16 %v4014
          %v4047 = vunpack.c.l.b16 %v4015
          %v4048 = vunpack.c.l.b16 %v4016
          %v4049 = vunpack.c.l.b16 %v4017
          %v4050 = vunpack.c.l.b16 %v4018
          %v4051 = vunpack.c.l.b16 %v4019
          %v4052 = vunpack.c.l.b16 %v4020
          %v4053 = vunpack.c.l.b16 %v4021
          %v4054 = vunpack.c.l.b16 %v4022
          %v4055 = vunpack.c.l.b16 %v4023
          %v4056 = vunpack.c.l.b16 %v4024
          %v4057 = vunpack.c.l.b16 %v4025
          %v4058 = vunpack.c.l.b16 %v4026
          %v4059 = vunpack.c.l.b16 %v4027
          %v4060 = vpack.c.b16 %v4045, %v4044
          %v4061 = vpack.c.b16 %v4047, %v4046
          %v4062 = vpack.c.b16 %v4049, %v4048
          %v4063 = vpack.c.b16 %v4051, %v4050
          %v4064 = vpack.c.b16 %v4053, %v4052
          %v4065 = vpack.c.b16 %v4055, %v4054
          %v4066 = vpack.c.b16 %v4057, %v4056
          %v4067 = vpack.c.b16 %v4059, %v4058
          %4076 = vmatpush.bf16.msra.mxu0 %v4067
          %4077 = vmatpush.bf16.msra.mxu0 %v4066
          %4078 = vmatpush.bf16.msra.mxu0 %v4065
          %4079 = vmatpush.bf16.msra.mxu0 %v4064
          %4080 = vmatpush.bf16.msra.mxu0 %v4063
          %4081 = vmatpush.bf16.msra.mxu0 %v4062
          %4082 = vmatpush.bf16.msra.mxu0 %v4061
          %4083 = vmatpush.bf16.msra.mxu0 %v4060
          %4084 = vmatmul.bf16.gmra.mxu0 %v4011
          %v4085 = vpop.f32.mrf.mxu0
          %v4086 = vadd.f32 0.0, %v4085
          %v4087 = vpop.f32.mrf.mxu0
          %4088 = vdwg.mxu0
          %4089 = vst [vmem:[#allocation48] sm:$0x3] %v4086
        $region228: #{tpu_custom_call.1} parent=123 // pred_fallthru
          _
        // Predicated region
        $region229: #{tpu_custom_call.1} parent=123 // pred_check
          %p4090 = pneg %p724
        $region230: #{tpu_custom_call.1} parent=123 // pred_check_branch
          %4092 = sbr.rel (%p4090) target = $region232
        $region231: #{tpu_custom_call.1} parent=123 // pred_region
          %4094 = vsyncadd [#allocation5], 0
          %s4096 = sshll.u32 [#allocation39], 4
          %s4097 = int_to_ptr.vmem [resolvable:$true] %s4096
          %s4098 = sshll.u32 %s53, 4
          %s4099 = int_to_ptr.hbm [resolvable:$true] %s4098
          %4101 = dma.vmem_to_hbm [thread:$0]  %s4097, 32, %s4099, [#allocation5]
        $region232: #{tpu_custom_call.1} parent=123 // pred_fallthru
          _
        // Predicated region
        $region233: #{tpu_custom_call.1} parent=123 // pred_check
          %p4102 = pneg %p745
        $region234: #{tpu_custom_call.1} parent=123 // pred_check_branch
          %4104 = sbr.rel (%p4102) target = $region236
        $region235: #{tpu_custom_call.1} parent=123 // pred_region
          %4106 = vsyncadd [#allocation41], 0
          %s4108 = sshll.u32 [#allocation40], 4
          %s4109 = int_to_ptr.vmem [resolvable:$true] %s4108
          %s4110 = sshll.u32 %s55, 4
          %s4111 = int_to_ptr.hbm [resolvable:$true] %s4110
          %4113 = dma.vmem_to_hbm [thread:$0]  %s4109, 32, %s4111, [#allocation41]
        $region236: #{tpu_custom_call.1} parent=123 // pred_fallthru
          _
        // Predicated region
        $region237: #{tpu_custom_call.1} parent=123 // pred_check
          %p4114 = pneg %p766
        $region238: #{tpu_custom_call.1} parent=123 // pred_check_branch
          %4116 = sbr.rel (%p4114) target = $region240
        $region239: #{tpu_custom_call.1} parent=123 // pred_region
          %4118 = vsyncadd [#allocation41], 0
          %s4120 = sshll.u32 [#allocation42], 4
          %s4121 = int_to_ptr.vmem [resolvable:$true] %s4120
          %s4122 = sshll.u32 %s57, 4
          %s4123 = int_to_ptr.hbm [resolvable:$true] %s4122
          %4125 = dma.vmem_to_hbm [thread:$0]  %s4121, 32, %s4123, [#allocation41]
        $region240: #{tpu_custom_call.1} parent=123 // pred_fallthru
          _
        // Predicated region
        $region241: #{tpu_custom_call.1} parent=123 // pred_check
          %p4126 = pneg %p787
        $region242: #{tpu_custom_call.1} parent=123 // pred_check_branch
          %4128 = sbr.rel (%p4126) target = $region244
        $region243: #{tpu_custom_call.1} parent=123 // pred_region
          %4130 = vsyncadd [#allocation44], 0
          %s4132 = sshll.u32 [#allocation43], 4
          %s4133 = int_to_ptr.vmem [resolvable:$true] %s4132
          %s4134 = sshll.u32 %s59, 4
          %s4135 = int_to_ptr.hbm [resolvable:$true] %s4134
          %4137 = dma.vmem_to_hbm [thread:$0]  %s4133, 32, %s4135, [#allocation44]
        $region244: #{tpu_custom_call.1} parent=123 // pred_fallthru
          _
        // Predicated region
        $region245: #{tpu_custom_call.1} parent=123 // pred_check
          %p4138 = pneg %p808
        $region246: #{tpu_custom_call.1} parent=123 // pred_check_branch
          %4140 = sbr.rel (%p4138) target = $region248
        $region247: #{tpu_custom_call.1} parent=123 // pred_region
          %4142 = vsyncadd [#allocation44], 0
          %s4144 = sshll.u32 [#allocation45], 4
          %s4145 = int_to_ptr.vmem [resolvable:$true] %s4144
          %s4146 = sshll.u32 %s61, 4
          %s4147 = int_to_ptr.hbm [resolvable:$true] %s4146
          %4149 = dma.vmem_to_hbm [thread:$0]  %s4145, 32, %s4147, [#allocation44]
        $region248: #{tpu_custom_call.1} parent=123 // pred_fallthru
          _
        // Predicated region
        $region249: #{tpu_custom_call.1} parent=123 // pred_check
          %p4150 = pneg %p829
        $region250: #{tpu_custom_call.1} parent=123 // pred_check_branch
          %4152 = sbr.rel (%p4150) target = $region252
        $region251: #{tpu_custom_call.1} parent=123 // pred_region
          %4154 = vsyncadd [#allocation47], 0
          %s4156 = sshll.u32 [#allocation46], 4
          %s4157 = int_to_ptr.vmem [resolvable:$true] %s4156
          %s4158 = sshll.u32 %s63, 4
          %s4159 = int_to_ptr.hbm [resolvable:$true] %s4158
          %4161 = dma.vmem_to_hbm [thread:$0]  %s4157, 32, %s4159, [#allocation47]
        $region252: #{tpu_custom_call.1} parent=123 // pred_fallthru
          _
        // Predicated region
        $region253: #{tpu_custom_call.1} parent=123 // pred_check
          %p4162 = pneg %p850
        $region254: #{tpu_custom_call.1} parent=123 // pred_check_branch
          %4164 = sbr.rel (%p4162) target = $region256
        $region255: #{tpu_custom_call.1} parent=123 // pred_region
          %4166 = vsyncadd [#allocation47], 0
          %s4168 = sshll.u32 [#allocation48], 4
          %s4169 = int_to_ptr.vmem [resolvable:$true] %s4168
          %s4170 = sshll.u32 %s65, 4
          %s4171 = int_to_ptr.hbm [resolvable:$true] %s4170
          %4173 = dma.vmem_to_hbm [thread:$0]  %s4169, 32, %s4171, [#allocation47]
        $region256: #{tpu_custom_call.1} parent=123 // pred_fallthru
          _
        // Predicated region
        $region257: #{tpu_custom_call.1} parent=123 // pred_check
          %p4174 = pneg %p724
        $region258: #{tpu_custom_call.1} parent=123 // pred_check_branch
          %4176 = sbr.rel (%p4174) target = $region260
        $region259: #{tpu_custom_call.1} parent=123 // pred_region
          %4178 = dma.done [#allocation5], 32
        $region260: #{tpu_custom_call.1} parent=123 // pred_fallthru
          _
        // Predicated region
        $region261: #{tpu_custom_call.1} parent=123 // pred_check
          %p4179 = pneg %p745
        $region262: #{tpu_custom_call.1} parent=123 // pred_check_branch
          %4181 = sbr.rel (%p4179) target = $region264
        $region263: #{tpu_custom_call.1} parent=123 // pred_region
          %4183 = dma.done [#allocation41], 32
        $region264: #{tpu_custom_call.1} parent=123 // pred_fallthru
          _
        // Predicated region
        $region265: #{tpu_custom_call.1} parent=123 // pred_check
          %p4184 = pneg %p766
        $region266: #{tpu_custom_call.1} parent=123 // pred_check_branch
          %4186 = sbr.rel (%p4184) target = $region268
        $region267: #{tpu_custom_call.1} parent=123 // pred_region
          %4188 = dma.done [#allocation41], 32
        $region268: #{tpu_custom_call.1} parent=123 // pred_fallthru
          _
        // Predicated region
        $region269: #{tpu_custom_call.1} parent=123 // pred_check
          %p4189 = pneg %p787
        $region270: #{tpu_custom_call.1} parent=123 // pred_check_branch
          %4191 = sbr.rel (%p4189) target = $region272
        $region271: #{tpu_custom_call.1} parent=123 // pred_region
          %4193 = dma.done [#allocation44], 32
        $region272: #{tpu_custom_call.1} parent=123 // pred_fallthru
          _
        // Predicated region
        $region273: #{tpu_custom_call.1} parent=123 // pred_check
          %p4194 = pneg %p808
        $region274: #{tpu_custom_call.1} parent=123 // pred_check_branch
          %4196 = sbr.rel (%p4194) target = $region276
        $region275: #{tpu_custom_call.1} parent=123 // pred_region
          %4198 = dma.done [#allocation44], 32
        $region276: #{tpu_custom_call.1} parent=123 // pred_fallthru
          _
        // Predicated region
        $region277: #{tpu_custom_call.1} parent=123 // pred_check
          %p4199 = pneg %p829
        $region278: #{tpu_custom_call.1} parent=123 // pred_check_branch
          %4201 = sbr.rel (%p4199) target = $region280
        $region279: #{tpu_custom_call.1} parent=123 // pred_region
          %4203 = dma.done [#allocation47], 32
        $region280: #{tpu_custom_call.1} parent=123 // pred_fallthru
          _
        // Predicated region
        $region281: #{tpu_custom_call.1} parent=123 // pred_check
          %p4204 = pneg %p850
        $region282: #{tpu_custom_call.1} parent=123 // pred_check_branch
          %4206 = sbr.rel (%p4204) target = $region284
        $region283: #{tpu_custom_call.1} parent=123 // pred_region
          %4208 = dma.done [#allocation47], 32
        $region284: #{tpu_custom_call.1} parent=123 // pred_fallthru
          _
      $region124: #{tpu_custom_call.1} parent=5 // pred_fallthru
        _
      %p4209 = scmp.le.s32.totalorder 2, %s100
      // Predicated region
      $region285: #{tpu_custom_call.1} parent=5 // pred_check
        %p4210 = pneg %p4209
      $region286: #{tpu_custom_call.1} parent=5 // pred_check_branch
        %4212 = sbr.rel (%p4210) target = $region288
      $region287: #{tpu_custom_call.1} parent=5 // pred_region
        %s4213 = ssub.s32 %s100, 2
      $region288: #{tpu_custom_call.1} parent=5 // pred_fallthru
        _
    $region6: #{tpu_custom_call.1} parent=1 // loop_footer
      %s104 = sadd.s32 1, %s100
    $region7: #{tpu_custom_call.1} parent=1 // loop_footer_branch
      %99 = sbr.rel target = $region3
    $region8: #{tpu_custom_call.1} parent=1 // loop_exit
      _
    %4214 = vsyncpa [#allocation4], 1
    %s4215 = scalar_lea.sflag [#allocation4], 1
    %4216 = vsyncpa %s4215, 1
    %4217 = vsyncpa [#allocation7], 1
    %4218 = vsyncpa [#allocation10], 1
    %4219 = vsyncpa [#allocation13], 1
    %4220 = vsyncpa [#allocation16], 1
    %s4221 = scalar_lea.sflag [#allocation16], 1
    %4222 = vsyncpa %s4221, 1
    %4223 = vsyncpa [#allocation19], 1
    %s4224 = scalar_lea.sflag [#allocation19], 1
    %4225 = vsyncpa %s4224, 1
    %4226 = vsyncpa [#allocation22], 1
    %s4227 = scalar_lea.sflag [#allocation22], 1
    %4228 = vsyncpa %s4227, 1
    %4229 = vsyncpa [#allocation25], 1
    %s4230 = scalar_lea.sflag [#allocation25], 1
    %4231 = vsyncpa %s4230, 1
    %4232 = vsyncpa [#allocation28], 1
    %s4233 = scalar_lea.sflag [#allocation28], 1
    %4234 = vsyncpa %s4233, 1
    %4235 = vsyncpa [#allocation31], 1
    %s4236 = scalar_lea.sflag [#allocation31], 1
    %4237 = vsyncpa %s4236, 1
    %4238 = vsyncpa [#allocation34], 1
    %4239 = vsyncpa [#allocation37], 1
    %4240 = vsyncpa [#allocation5], 1
    %s4241 = scalar_lea.sflag [#allocation5], 1
    %4242 = vsyncpa %s4241, 1
    %4243 = vsyncpa [#allocation41], 1
    %4244 = vsyncpa [#allocation44], 1
    %4245 = vsyncpa [#allocation47], 1

</llo_original>
